<compile_context>
chip_gen: v7x
topology: tpu7x:2x2x1
jax: 0.10.0
libtpu: 0.0.40
codegen_flags: <defaults>
</compile_context>

<pallas_src>
import functools

import jax
import jax.numpy as jnp
from jax.experimental import pallas as pl
from jax.experimental.pallas import tpu as pltpu

K = 4            # every ConvTranspose2d uses kernel_size=4
BN_EPS = 1e-5    # PyTorch BatchNorm2d default
LANE = 128
TILE_M_MAX = 512
VMEM_LIMIT = 32 * 1024 * 1024

GEN_STRIDES = (1, 2, 2, 2, 2)
GEN_PADS = (0, 1, 1, 1, 1)


def _round_up(x, m):
    return ((x + m - 1) // m) * m


def _pick_tile_m(m):
    return TILE_M_MAX if m >= TILE_M_MAX else _round_up(m, 16)


def _mosaic_params():
    return pltpu.CompilerParams(
        dimension_semantics=("parallel", "parallel"),
        vmem_limit_bytes=VMEM_LIMIT,
    )


# ---------------------------------------------------------------------------
# Pallas kernels
# ---------------------------------------------------------------------------
def _matmul_stats_kernel(p_ref, w_ref, y_ref, s_ref, q_ref):
    # p_ref: (TILE_M, R_pad) bf16   w_ref: (R_pad, C_pad) bf16
    # y_ref: (TILE_M, C_pad) f32    s_ref/q_ref: (1, C_pad) per-tile stats
    acc = jnp.dot(p_ref[...], w_ref[...], preferred_element_type=jnp.float32)
    y_ref[...] = acc
    s_ref[...] = jnp.sum(acc, axis=0, keepdims=True)
    q_ref[...] = jnp.sum(acc * acc, axis=0, keepdims=True)


def _scale_shift_act_kernel(y_ref, sc_ref, sh_ref, o_ref, *, act):
    # folded train-mode BatchNorm (scale/shift precomputed from batch stats)
    y = y_ref[...] * sc_ref[...] + sh_ref[...]
    if act == "relu":
        y = jnp.maximum(y, 0.0)
    elif act == "tanh":
        y = jnp.tanh(y)
    o_ref[...] = y.astype(o_ref.dtype)


def _matmul_act_kernel(p_ref, w_ref, o_ref, *, act):
    # last layer: fused matmul + activation, no BatchNorm
    acc = jnp.dot(p_ref[...], w_ref[...], preferred_element_type=jnp.float32)
    if act == "relu":
        acc = jnp.maximum(acc, 0.0)
    elif act == "tanh":
        acc = jnp.tanh(acc)
    o_ref[...] = acc.astype(o_ref.dtype)


# ---------------------------------------------------------------------------
# JAX glue: phase patches / phase weights / output interleave
# ---------------------------------------------------------------------------
def _patches_stride1(x, padding):
    # generic flipped-kernel im2col -> a single "phase".  x: (N,H,W,Cin)
    n, h, w, cin = x.shape
    pad = K - 1 - padding
    xp = jnp.pad(x, ((0, 0), (pad, pad), (pad, pad), (0, 0)))
    ho = h + 2 * pad - K + 1
    wo = w + 2 * pad - K + 1
    taps = [xp[:, ky:ky + ho, kx:kx + wo, :] for ky in range(K) for kx in range(K)]
    pat = jnp.stack(taps, axis=3).reshape(1, n * ho * wo, K * K * cin)
    return pat, ho, wo


def _phase_patches_stride2(x):
    # 4-phase decomposition of stride-2 / padding-1 / k=4 ConvTranspose2d.
    # out[n, 2y+py, 2x+px, :] = sum_{dy,dx} xp[n, y+py+dy, x+px+dx, :] @ W_phase
    n, h, w, cin = x.shape
    xp = jnp.pad(x, ((0, 0), (1, 1), (1, 1), (0, 0)))
    phases = []
    for py in range(2):
        for px in range(2):
            taps = []
            for dy in range(2):
                for dx in range(2):
                    taps.append(xp[:, py + dy:py + dy + h, px + dx:px + dx + w, :])
            phases.append(jnp.stack(taps, axis=3).reshape(n * h * w, 4 * cin))
    return jnp.stack(phases, axis=0)                   # (4, N*H*W, 4*Cin)


def _phase_weights_stride2(w_t):
    # w_t: (Cin, Cout, 4, 4) -- PyTorch ConvTranspose2d layout
    cin, cout = int(w_t.shape[0]), int(w_t.shape[1])
    phases = []
    for py in range(2):
        for px in range(2):
            taps = []
            for dy in range(2):
                for dx in range(2):
                    taps.append(w_t[:, :, 3 - py - 2 * dy, 3 - px - 2 * dx])
            phases.append(jnp.stack(taps, axis=0).reshape(4 * cin, cout))
    return jnp.stack(phases, axis=0)                   # (4, 4*Cin, Cout)


def _interleave_phases_stride2(y, n, h, w, cout):
    # y: (4, N*H*W, Cout) with phase order (py, px) -> (N, 2H, 2W, Cout)
    y = y.reshape(2, 2, n, h, w, cout)
    y = jnp.transpose(y, (2, 3, 0, 4, 1, 5))
    return y.reshape(n, 2 * h, 2 * w, cout)


# ---------------------------------------------------------------------------
# Parameter init + one-time preparation (hoisted weight transforms)
# ---------------------------------------------------------------------------
def init_generator_params(key, nz, ngf, nc):
    chans = [nz, ngf * 8, ngf * 4, ngf * 2, ngf, nc]
    params = []
    for i in range(5):
        key, sub = jax.random.split(key)
        w = 0.02 * jax.random.normal(sub, (chans[i], chans[i + 1], K, K), jnp.float32)
        gamma = jnp.ones((chans[i + 1],), jnp.float32)   # BatchNorm2d weight init
        beta = jnp.zeros((chans[i + 1],), jnp.float32)   # BatchNorm2d bias  init
        params.append((w, gamma, beta))
    return params


def prepare_generator_params(raw_params):
    """Flip / phase-split / pad-to-128 / bf16-cast the weights once, up front."""
    arrays, cfg = [], []
    for i, (w, gamma, beta) in enumerate(raw_params):
        stride, padding = GEN_STRIDES[i], GEN_PADS[i]
        cin, cout = int(w.shape[0]), int(w.shape[1])
        if stride == 1:
            wc = jnp.transpose(jnp.flip(w, axis=(2, 3)), (2, 3, 0, 1))
            wmat = wc.reshape(1, K * K * cin, cout)
        else:
            wmat = _phase_weights_stride2(w)
        nph, r = int(wmat.shape[0]), int(wmat.shape[1])
        r_pad = _round_up(r, LANE)
        c_pad = _round_up(cout, LANE)
        wmat = jnp.pad(wmat, ((0, 0), (0, r_pad - r), (0, c_pad - cout)))
        arrays.append({
            "w": wmat.astype(jnp.float32),       # only used by the f32 reference
            "w_lo": wmat.astype(jnp.bfloat16),   # fed to the MXU
            "gamma": jnp.pad(gamma.astype(jnp.float32), (0, c_pad - cout)),
            "beta": jnp.pad(beta.astype(jnp.float32), (0, c_pad - cout)),
        })
        cfg.append(dict(stride=stride, padding=padding, cin=cin, cout=cout,
                        r=r, r_pad=r_pad, c_pad=c_pad, phases=nph))
    return arrays, tuple(cfg)


# ---------------------------------------------------------------------------
# One ConvTranspose2d (+BN +act) layer
# ---------------------------------------------------------------------------
def conv_t_layer(x, arrs, c, *, act, use_bn, mode):
    n, h, w, _ = x.shape
    stride, padding = c["stride"], c["padding"]
    cout, r, r_pad, c_pad, nph = c["cout"], c["r"], c["r_pad"], c["c_pad"], c["phases"]

    if stride == 1:
        patches, ho, wo = _patches_stride1(x, padding)
    else:
        patches = _phase_patches_stride2(x)
        ho, wo = 2 * h, 2 * w

    m = patches.shape[1]
    tm = _pick_tile_m(m)
    m_pad = _round_up(m, tm)
    m_tiles = m_pad // tm
    grid = (nph, m_tiles)

    in_dtype = jnp.float32 if mode == "ref_f32" else jnp.bfloat16
    out_dtype = jnp.float32 if (act == "tanh" or mode == "ref_f32") else jnp.bfloat16
    o_item = jnp.dtype(out_dtype).itemsize
    wmat = arrs["w"] if mode == "ref_f32" else arrs["w_lo"]
    patches = jnp.pad(patches, ((0, 0), (0, m_pad - m), (0, r_pad - r))).astype(in_dtype)
    # Padded M rows / R cols are zero, so they contribute nothing to sum / sumsq;
    # BN stats are divided by the true element count N*Ho*Wo = nph * m.
    count = float(nph * m)

    if mode != "pallas":
        # pure-JAX reference mirroring the kernel math (used only for checks)
        acc = jnp.einsum("pmr,prc->pmc", patches, wmat,
                         preferred_element_type=jnp.float32)
        if use_bn:
            mean = jnp.sum(acc, axis=(0, 1)) / count
            var = jnp.sum(acc * acc, axis=(0, 1)) / count - mean * mean
            scale = arrs["gamma"] * jax.lax.rsqrt(var + BN_EPS)
            shift = arrs["beta"] - mean * scale
            acc = acc * scale + shift
        acc = jnp.maximum(acc, 0.0) if act == "relu" else jnp.tanh(acc)
        out = acc.astype(out_dtype)
    else:
        patch_spec = pl.BlockSpec((None, tm, r_pad), lambda ph, mi: (ph, mi, 0))
        weight_spec = pl.BlockSpec((None, r_pad, c_pad), lambda ph, mi: (ph, 0, 0))
        y_spec = pl.BlockSpec((None, tm, c_pad), lambda ph, mi: (ph, mi, 0))
        stat_spec = pl.BlockSpec((None, None, 1, c_pad), lambda ph, mi: (ph, mi, 0, 0))

        mm_flops = 2 * nph * m_pad * r_pad * c_pad
        mm_bytes = (patches.size * patches.dtype.itemsize
                    + wmat.size * wmat.dtype.itemsize)

        if use_bn:
            raw, s_part, q_part = pl.pallas_call(
                _matmul_stats_kernel,
                grid=grid,
                in_specs=[patch_spec, weight_spec],
                out_specs=[y_spec, stat_spec, stat_spec],
                out_shape=[
                    jax.ShapeDtypeStruct((nph, m_pad, c_pad), jnp.float32),
                    jax.ShapeDtypeStruct((nph, m_tiles, 1, c_pad), jnp.float32),
                    jax.ShapeDtypeStruct((nph, m_tiles, 1, c_pad), jnp.float32),
                ],
                compiler_params=_mosaic_params(),
                cost_estimate=pl.CostEstimate(
                    flops=mm_flops, transcendentals=0,
                    bytes_accessed=mm_bytes + nph * m_pad * c_pad * 4
                    + 2 * nph * m_tiles * c_pad * 4),
            )(patches, wmat)

            # finalize BatchNorm batch statistics (tiny arrays -> plain JAX)
            mean = jnp.sum(s_part, axis=(0, 1, 2)) / count
            var = jnp.sum(q_part, axis=(0, 1, 2)) / count - mean * mean   # biased
            scale = (arrs["gamma"] * jax.lax.rsqrt(var + BN_EPS)).reshape(1, c_pad)
            shift = (arrs["beta"] - mean * scale[0]).reshape(1, c_pad)

            out = pl.pallas_call(
                functools.partial(_scale_shift_act_kernel, act=act),
                grid=grid,
                in_specs=[y_spec,
                          pl.BlockSpec((1, c_pad), lambda ph, mi: (0, 0)),
                          pl.BlockSpec((1, c_pad), lambda ph, mi: (0, 0))],
                out_specs=y_spec,
                out_shape=jax.ShapeDtypeStruct((nph, m_pad, c_pad), out_dtype),
                compiler_params=_mosaic_params(),
                cost_estimate=pl.CostEstimate(
                    flops=2 * nph * m_pad * c_pad,
                    transcendentals=nph * m_pad * c_pad if act == "tanh" else 0,
                    bytes_accessed=nph * m_pad * c_pad * (4 + o_item)),
            )(raw, scale, shift)
        else:
            out = pl.pallas_call(
                functools.partial(_matmul_act_kernel, act=act),
                grid=grid,
                in_specs=[patch_spec, weight_spec],
                out_specs=y_spec,
                out_shape=jax.ShapeDtypeStruct((nph, m_pad, c_pad), out_dtype),
                compiler_params=_mosaic_params(),
                cost_estimate=pl.CostEstimate(
                    flops=mm_flops,
                    transcendentals=nph * m_pad * c_pad if act == "tanh" else 0,
                    bytes_accessed=mm_bytes + nph * m_pad * c_pad * o_item),
            )(patches, wmat)

    out = out[:, :m, :cout]
    if stride == 1:
        return out.reshape(n, ho, wo, cout)
    return _interleave_phases_stride2(out, n, h, w, cout)


# ---------------------------------------------------------------------------
# Generator forward (NCHW in / NCHW out, like the PyTorch module)
# ---------------------------------------------------------------------------
def generator_forward(params, x_nchw, cfg, *, mode="pallas"):
    x = jnp.transpose(x_nchw, (0, 2, 3, 1)).astype(jnp.float32)
    if mode != "ref_f32":
        x = x.astype(jnp.bfloat16)
    nl = len(cfg)
    for i, (arrs, c) in enumerate(zip(params, cfg)):
        last = i == nl - 1
        x = conv_t_layer(x, arrs, c,
                         act="tanh" if last else "relu",
                         use_bn=not last, mode=mode)
    return jnp.transpose(x.astype(jnp.float32), (0, 3, 1, 2))


def generator_forward_original(raw_params, x_nchw):
    """f32 zero-dilate + pad + flipped-kernel im2col reference (PyTorch semantics)."""
    x = jnp.transpose(x_nchw, (0, 2, 3, 1)).astype(jnp.float32)
    nl = len(raw_params)
    for i, (w_t, gamma, beta) in enumerate(raw_params):
        last = i == nl - 1
        stride, padding = GEN_STRIDES[i], GEN_PADS[i]
        n, h, wd, cin = x.shape
        cout = int(w_t.shape[1])
        hd = (h - 1) * stride + 1
        wdd = (wd - 1) * stride + 1
        xd = jnp.zeros((n, hd, wdd, cin), x.dtype).at[:, ::stride, ::stride, :].set(x)
        pad = K - 1 - padding
        xp = jnp.pad(xd, ((0, 0), (pad, pad), (pad, pad), (0, 0)))
        ho = hd + 2 * pad - K + 1
        wo = wdd + 2 * pad - K + 1
        taps = [xp[:, ky:ky + ho, kx:kx + wo, :] for ky in range(K) for kx in range(K)]
        patches = jnp.stack(taps, axis=3).reshape(n * ho * wo, K * K * cin)
        wmat = jnp.transpose(jnp.flip(w_t, (2, 3)), (2, 3, 0, 1)).reshape(K * K * cin, cout)
        acc = jnp.dot(patches, wmat, preferred_element_type=jnp.float32)
        if not last:
            mean = jnp.mean(acc, axis=0, keepdims=True)
            var = jnp.mean(jnp.square(acc - mean), axis=0, keepdims=True)
            acc = (acc - mean) * jax.lax.rsqrt(var + BN_EPS)
            acc = acc * gamma.reshape(1, -1) + beta.reshape(1, -1)
            acc = jnp.maximum(acc, 0.0)
        else:
            acc = jnp.tanh(acc)
        x = acc.reshape(n, ho, wo, cout)
    return jnp.transpose(x, (0, 3, 1, 2))


if __name__ == "__main__":
    nz, ngf, nc, batch = 16, 8, 3, 2
    key = jax.random.PRNGKey(0)
    kp, kx = jax.random.split(key)
    raw_params = init_generator_params(kp, nz, ngf, nc)
    params, cfg = prepare_generator_params(raw_params)
    x = jax.random.normal(kx, (batch, nz, 1, 1), jnp.float32)

    fwd = jax.jit(lambda p, z: generator_forward(p, z, cfg, mode="pallas"))
    out = jax.block_until_ready(fwd(params, x))

    assert out.shape == (batch, nc, 64, 64), out.shape
    assert bool(jnp.all(jnp.isfinite(out)))

    # (1) Pallas kernels vs. identical-math JAX reference (same bf16 casts).
    ref_lo = generator_forward(params, x, cfg, mode="ref_bf16")
    assert bool(jnp.allclose(out, ref_lo, atol=1e-2, rtol=1e-2))

    # (2) Phase decomposition in f32 vs. the straightforward zero-dilated
    #     ConvTranspose2d reference in f32: validates layer semantics.
    ref_hi = generator_forward(params, x, cfg, mode="ref_f32")
    ref_orig = generator_forward_original(raw_params, x)
    assert bool(jnp.allclose(ref_hi, ref_orig, atol=1e-3, rtol=1e-3))

    print("KERNEL_OK")
</pallas_src>

<mosaic_0001>
module attributes {stable_mosaic.version = 11 : i64} {
  func.func @_matmul_stats_kernel(%arg0: i32, %arg1: i32, %arg2: memref<1x32x256xbf16, #tpu.memory_space<vmem>>, %arg3: memref<1x256x128xbf16, #tpu.memory_space<vmem>>, %arg4: memref<1x32x128xf32, #tpu.memory_space<vmem>>, %arg5: memref<1x1x1x128xf32, #tpu.memory_space<vmem>>, %arg6: memref<1x1x1x128xf32, #tpu.memory_space<vmem>>) attributes {dimension_semantics = [#tpu.dimension_semantics<parallel>, #tpu.dimension_semantics<parallel>], iteration_bounds = array<i64: 1, 1>, scalar_prefetch = 0 : i64, scratch_operands = 0 : i64, tpu.core_type = #tpu.core_type<tc>, window_params = [{transform_indices = @transform_0, window_bounds = array<i64: 1, 32, 256>}, {transform_indices = @transform_1, window_bounds = array<i64: 1, 256, 128>}, {transform_indices = @transform_2, window_bounds = array<i64: 1, 32, 128>}, {transform_indices = @transform_3, window_bounds = array<i64: 1, 1, 1, 128>}, {transform_indices = @transform_4, window_bounds = array<i64: 1, 1, 1, 128>}]} {
    %c0 = arith.constant 0 : index
    %c0_0 = arith.constant 0 : index
    %c0_1 = arith.constant 0 : index
    %0 = vector.load %arg2[%c0, %c0_0, %c0_1] : memref<1x32x256xbf16, #tpu.memory_space<vmem>>, vector<1x32x256xbf16>
    %1 = vector.shape_cast %0 : vector<1x32x256xbf16> to vector<32x256xbf16>
    %c0_2 = arith.constant 0 : index
    %c0_3 = arith.constant 0 : index
    %c0_4 = arith.constant 0 : index
    %2 = vector.load %arg3[%c0_2, %c0_3, %c0_4] : memref<1x256x128xbf16, #tpu.memory_space<vmem>>, vector<1x256x128xbf16>
    %3 = vector.shape_cast %2 : vector<1x256x128xbf16> to vector<256x128xbf16>
    %cst = arith.constant dense<0.000000e+00> : vector<32x128xf32>
    %4 = tpu.matmul %1, %3, %cst {dimension_numbers = #tpu.dot_dimension_numbers<[1], [0], [0], [1], [0, 0, 1, 1], [], []>} : vector<32x256xbf16>, vector<256x128xbf16>, vector<32x128xf32> -> vector<32x128xf32>
    %c0_5 = arith.constant 0 : index
    %c0_6 = arith.constant 0 : index
    %c0_7 = arith.constant 0 : index
    %5 = vector.load %arg4[%c0_5, %c0_6, %c0_7] : memref<1x32x128xf32, #tpu.memory_space<vmem>>, vector<1x32x128xf32>
    %6 = vector.shape_cast %5 : vector<1x32x128xf32> to vector<32x128xf32>
    %7 = vector.shape_cast %4 : vector<32x128xf32> to vector<1x32x128xf32>
    tpu.vector_store %arg4[%c0_5, %c0_6, %c0_7], %7 {strides = array<i32>} : memref<1x32x128xf32, #tpu.memory_space<vmem>>, vector<1x32x128xf32>,
    %cst_8 = arith.constant dense<0.000000e+00> : vector<128xf32>
    %8 = vector.multi_reduction <add>, %4, %cst_8 [0] : vector<32x128xf32> to vector<128xf32>
    %9 = vector.shape_cast %8 : vector<128xf32> to vector<1x128xf32>
    %c0_9 = arith.constant 0 : index
    %c0_10 = arith.constant 0 : index
    %c0_11 = arith.constant 0 : index
    %c0_12 = arith.constant 0 : index
    %10 = vector.load %arg5[%c0_9, %c0_10, %c0_11, %c0_12] : memref<1x1x1x128xf32, #tpu.memory_space<vmem>>, vector<1x1x1x128xf32>
    %11 = vector.shape_cast %10 : vector<1x1x1x128xf32> to vector<1x128xf32>
    %12 = vector.shape_cast %9 : vector<1x128xf32> to vector<1x1x1x128xf32>
    tpu.vector_store %arg5[%c0_9, %c0_10, %c0_11, %c0_12], %12 {strides = array<i32>} : memref<1x1x1x128xf32, #tpu.memory_space<vmem>>, vector<1x1x1x128xf32>,
    %13 = arith.mulf %4, %4 : vector<32x128xf32>
    %cst_13 = arith.constant dense<0.000000e+00> : vector<128xf32>
    %14 = vector.multi_reduction <add>, %13, %cst_13 [0] : vector<32x128xf32> to vector<128xf32>
    %15 = vector.shape_cast %14 : vector<128xf32> to vector<1x128xf32>
    %c0_14 = arith.constant 0 : index
    %c0_15 = arith.constant 0 : index
    %c0_16 = arith.constant 0 : index
    %c0_17 = arith.constant 0 : index
    %16 = vector.load %arg6[%c0_14, %c0_15, %c0_16, %c0_17] : memref<1x1x1x128xf32, #tpu.memory_space<vmem>>, vector<1x1x1x128xf32>
    %17 = vector.shape_cast %16 : vector<1x1x1x128xf32> to vector<1x128xf32>
    %18 = vector.shape_cast %15 : vector<1x128xf32> to vector<1x1x1x128xf32>
    tpu.vector_store %arg6[%c0_14, %c0_15, %c0_16, %c0_17], %18 {strides = array<i32>} : memref<1x1x1x128xf32, #tpu.memory_space<vmem>>, vector<1x1x1x128xf32>,
    return
  }
  func.func @transform_0(%arg0: i32, %arg1: i32) -> (i32, i32, i32) {
    %c0_i32 = arith.constant 0 : i32
    %c0_i32_0 = arith.constant 0 : i32
    return %arg0, %arg1, %c0_i32 : i32, i32, i32
  }
  func.func @transform_1(%arg0: i32, %arg1: i32) -> (i32, i32, i32) {
    %c0_i32 = arith.constant 0 : i32
    %c0_i32_0 = arith.constant 0 : i32
    %c0_i32_1 = arith.constant 0 : i32
    return %arg0, %c0_i32, %c0_i32_0 : i32, i32, i32
  }
  func.func @transform_2(%arg0: i32, %arg1: i32) -> (i32, i32, i32) {
    %c0_i32 = arith.constant 0 : i32
    %c0_i32_0 = arith.constant 0 : i32
    return %arg0, %arg1, %c0_i32 : i32, i32, i32
  }
  func.func @transform_3(%arg0: i32, %arg1: i32) -> (i32, i32, i32, i32) {
    %c0_i32 = arith.constant 0 : i32
    %c0_i32_0 = arith.constant 0 : i32
    %c0_i32_1 = arith.constant 0 : i32
    return %arg0, %arg1, %c0_i32, %c0_i32_0 : i32, i32, i32, i32
  }
  func.func @transform_4(%arg0: i32, %arg1: i32) -> (i32, i32, i32, i32) {
    %c0_i32 = arith.constant 0 : i32
    %c0_i32_0 = arith.constant 0 : i32
    %c0_i32_1 = arith.constant 0 : i32
    return %arg0, %arg1, %c0_i32, %c0_i32_0 : i32, i32, i32, i32
  }
}

module attributes {stable_mosaic.version = 11 : i64} {
  func.func @_scale_shift_act_kernel(%arg0: i32, %arg1: i32, %arg2: memref<1x32x128xf32, #tpu.memory_space<vmem>>, %arg3: memref<1x128xf32, #tpu.memory_space<vmem>>, %arg4: memref<1x128xf32, #tpu.memory_space<vmem>>, %arg5: memref<1x32x128xbf16, #tpu.memory_space<vmem>>) attributes {dimension_semantics = [#tpu.dimension_semantics<parallel>, #tpu.dimension_semantics<parallel>], iteration_bounds = array<i64: 1, 1>, scalar_prefetch = 0 : i64, scratch_operands = 0 : i64, tpu.core_type = #tpu.core_type<tc>, window_params = [{transform_indices = @transform_0, window_bounds = array<i64: 1, 32, 128>}, {pipeline_mode = #tpu.pipeline_mode<synchronous>, transform_indices = @transform_1, window_bounds = array<i64: 1, 128>}, {pipeline_mode = #tpu.pipeline_mode<synchronous>, transform_indices = @transform_2, window_bounds = array<i64: 1, 128>}, {transform_indices = @transform_3, window_bounds = array<i64: 1, 32, 128>}]} {
    %c0 = arith.constant 0 : index
    %c0_0 = arith.constant 0 : index
    %c0_1 = arith.constant 0 : index
    %0 = vector.load %arg2[%c0, %c0_0, %c0_1] : memref<1x32x128xf32, #tpu.memory_space<vmem>>, vector<1x32x128xf32>
    %1 = vector.shape_cast %0 : vector<1x32x128xf32> to vector<32x128xf32>
    %c0_2 = arith.constant 0 : index
    %c0_3 = arith.constant 0 : index
    %2 = vector.load %arg3[%c0_2, %c0_3] : memref<1x128xf32, #tpu.memory_space<vmem>>, vector<1x128xf32>
    %3 = vector.broadcast %2 : vector<1x128xf32> to vector<32x128xf32>
    %4 = arith.mulf %1, %3 : vector<32x128xf32>
    %c0_4 = arith.constant 0 : index
    %c0_5 = arith.constant 0 : index
    %5 = vector.load %arg4[%c0_4, %c0_5] : memref<1x128xf32, #tpu.memory_space<vmem>>, vector<1x128xf32>
    %6 = vector.broadcast %5 : vector<1x128xf32> to vector<32x128xf32>
    %7 = arith.addf %4, %6 : vector<32x128xf32>
    %cst = arith.constant 0.000000e+00 : f32
    %8 = vector.broadcast %cst : f32 to vector<32x128xf32>
    %9 = arith.maximumf %7, %8 : vector<32x128xf32>
    %10 = arith.truncf %9 : vector<32x128xf32> to vector<32x128xbf16>
    %c0_6 = arith.constant 0 : index
    %c0_7 = arith.constant 0 : index
    %c0_8 = arith.constant 0 : index
    %11 = vector.load %arg5[%c0_6, %c0_7, %c0_8] : memref<1x32x128xbf16, #tpu.memory_space<vmem>>, vector<1x32x128xbf16>
    %12 = vector.shape_cast %11 : vector<1x32x128xbf16> to vector<32x128xbf16>
    %13 = vector.shape_cast %10 : vector<32x128xbf16> to vector<1x32x128xbf16>
    tpu.vector_store %arg5[%c0_6, %c0_7, %c0_8], %13 {strides = array<i32>} : memref<1x32x128xbf16, #tpu.memory_space<vmem>>, vector<1x32x128xbf16>,
    return
  }
  func.func @transform_0(%arg0: i32, %arg1: i32) -> (i32, i32, i32) {
    %c0_i32 = arith.constant 0 : i32
    %c0_i32_0 = arith.constant 0 : i32
    return %arg0, %arg1, %c0_i32 : i32, i32, i32
  }
  func.func @transform_1(%arg0: i32, %arg1: i32) -> (i32, i32) {
    %c0_i32 = arith.constant 0 : i32
    %c0_i32_0 = arith.constant 0 : i32
    %c0_i32_1 = arith.constant 0 : i32
    return %c0_i32, %c0_i32_0 : i32, i32
  }
  func.func @transform_2(%arg0: i32, %arg1: i32) -> (i32, i32) {
    %c0_i32 = arith.constant 0 : i32
    %c0_i32_0 = arith.constant 0 : i32
    %c0_i32_1 = arith.constant 0 : i32
    return %c0_i32, %c0_i32_0 : i32, i32
  }
  func.func @transform_3(%arg0: i32, %arg1: i32) -> (i32, i32, i32) {
    %c0_i32 = arith.constant 0 : i32
    %c0_i32_0 = arith.constant 0 : i32
    return %arg0, %arg1, %c0_i32 : i32, i32, i32
  }
}

module attributes {stable_mosaic.version = 11 : i64} {
  func.func @_matmul_stats_kernel(%arg0: i32, %arg1: i32, %arg2: memref<1x32x256xbf16, #tpu.memory_space<vmem>>, %arg3: memref<1x256x128xbf16, #tpu.memory_space<vmem>>, %arg4: memref<1x32x128xf32, #tpu.memory_space<vmem>>, %arg5: memref<1x1x1x128xf32, #tpu.memory_space<vmem>>, %arg6: memref<1x1x1x128xf32, #tpu.memory_space<vmem>>) attributes {dimension_semantics = [#tpu.dimension_semantics<parallel>, #tpu.dimension_semantics<parallel>], iteration_bounds = array<i64: 4, 1>, scalar_prefetch = 0 : i64, scratch_operands = 0 : i64, tpu.core_type = #tpu.core_type<tc>, window_params = [{transform_indices = @transform_0, window_bounds = array<i64: 1, 32, 256>}, {transform_indices = @transform_1, window_bounds = array<i64: 1, 256, 128>}, {transform_indices = @transform_2, window_bounds = array<i64: 1, 32, 128>}, {transform_indices = @transform_3, window_bounds = array<i64: 1, 1, 1, 128>}, {transform_indices = @transform_4, window_bounds = array<i64: 1, 1, 1, 128>}]} {
    %c0 = arith.constant 0 : index
    %c0_0 = arith.constant 0 : index
    %c0_1 = arith.constant 0 : index
    %0 = vector.load %arg2[%c0, %c0_0, %c0_1] : memref<1x32x256xbf16, #tpu.memory_space<vmem>>, vector<1x32x256xbf16>
    %1 = vector.shape_cast %0 : vector<1x32x256xbf16> to vector<32x256xbf16>
    %c0_2 = arith.constant 0 : index
    %c0_3 = arith.constant 0 : index
    %c0_4 = arith.constant 0 : index
    %2 = vector.load %arg3[%c0_2, %c0_3, %c0_4] : memref<1x256x128xbf16, #tpu.memory_space<vmem>>, vector<1x256x128xbf16>
    %3 = vector.shape_cast %2 : vector<1x256x128xbf16> to vector<256x128xbf16>
    %cst = arith.constant dense<0.000000e+00> : vector<32x128xf32>
    %4 = tpu.matmul %1, %3, %cst {dimension_numbers = #tpu.dot_dimension_numbers<[1], [0], [0], [1], [0, 0, 1, 1], [], []>} : vector<32x256xbf16>, vector<256x128xbf16>, vector<32x128xf32> -> vector<32x128xf32>
    %c0_5 = arith.constant 0 : index
    %c0_6 = arith.constant 0 : index
    %c0_7 = arith.constant 0 : index
    %5 = vector.load %arg4[%c0_5, %c0_6, %c0_7] : memref<1x32x128xf32, #tpu.memory_space<vmem>>, vector<1x32x128xf32>
    %6 = vector.shape_cast %5 : vector<1x32x128xf32> to vector<32x128xf32>
    %7 = vector.shape_cast %4 : vector<32x128xf32> to vector<1x32x128xf32>
    tpu.vector_store %arg4[%c0_5, %c0_6, %c0_7], %7 {strides = array<i32>} : memref<1x32x128xf32, #tpu.memory_space<vmem>>, vector<1x32x128xf32>,
    %cst_8 = arith.constant dense<0.000000e+00> : vector<128xf32>
    %8 = vector.multi_reduction <add>, %4, %cst_8 [0] : vector<32x128xf32> to vector<128xf32>
    %9 = vector.shape_cast %8 : vector<128xf32> to vector<1x128xf32>
    %c0_9 = arith.constant 0 : index
    %c0_10 = arith.constant 0 : index
    %c0_11 = arith.constant 0 : index
    %c0_12 = arith.constant 0 : index
    %10 = vector.load %arg5[%c0_9, %c0_10, %c0_11, %c0_12] : memref<1x1x1x128xf32, #tpu.memory_space<vmem>>, vector<1x1x1x128xf32>
    %11 = vector.shape_cast %10 : vector<1x1x1x128xf32> to vector<1x128xf32>
    %12 = vector.shape_cast %9 : vector<1x128xf32> to vector<1x1x1x128xf32>
    tpu.vector_store %arg5[%c0_9, %c0_10, %c0_11, %c0_12], %12 {strides = array<i32>} : memref<1x1x1x128xf32, #tpu.memory_space<vmem>>, vector<1x1x1x128xf32>,
    %13 = arith.mulf %4, %4 : vector<32x128xf32>
    %cst_13 = arith.constant dense<0.000000e+00> : vector<128xf32>
    %14 = vector.multi_reduction <add>, %13, %cst_13 [0] : vector<32x128xf32> to vector<128xf32>
    %15 = vector.shape_cast %14 : vector<128xf32> to vector<1x128xf32>
    %c0_14 = arith.constant 0 : index
    %c0_15 = arith.constant 0 : index
    %c0_16 = arith.constant 0 : index
    %c0_17 = arith.constant 0 : index
    %16 = vector.load %arg6[%c0_14, %c0_15, %c0_16, %c0_17] : memref<1x1x1x128xf32, #tpu.memory_space<vmem>>, vector<1x1x1x128xf32>
    %17 = vector.shape_cast %16 : vector<1x1x1x128xf32> to vector<1x128xf32>
    %18 = vector.shape_cast %15 : vector<1x128xf32> to vector<1x1x1x128xf32>
    tpu.vector_store %arg6[%c0_14, %c0_15, %c0_16, %c0_17], %18 {strides = array<i32>} : memref<1x1x1x128xf32, #tpu.memory_space<vmem>>, vector<1x1x1x128xf32>,
    return
  }
  func.func @transform_0(%arg0: i32, %arg1: i32) -> (i32, i32, i32) {
    %c0_i32 = arith.constant 0 : i32
    %c0_i32_0 = arith.constant 0 : i32
    return %arg0, %arg1, %c0_i32 : i32, i32, i32
  }
  func.func @transform_1(%arg0: i32, %arg1: i32) -> (i32, i32, i32) {
    %c0_i32 = arith.constant 0 : i32
    %c0_i32_0 = arith.constant 0 : i32
    %c0_i32_1 = arith.constant 0 : i32
    return %arg0, %c0_i32, %c0_i32_0 : i32, i32, i32
  }
  func.func @transform_2(%arg0: i32, %arg1: i32) -> (i32, i32, i32) {
    %c0_i32 = arith.constant 0 : i32
    %c0_i32_0 = arith.constant 0 : i32
    return %arg0, %arg1, %c0_i32 : i32, i32, i32
  }
  func.func @transform_3(%arg0: i32, %arg1: i32) -> (i32, i32, i32, i32) {
    %c0_i32 = arith.constant 0 : i32
    %c0_i32_0 = arith.constant 0 : i32
    %c0_i32_1 = arith.constant 0 : i32
    return %arg0, %arg1, %c0_i32, %c0_i32_0 : i32, i32, i32, i32
  }
  func.func @transform_4(%arg0: i32, %arg1: i32) -> (i32, i32, i32, i32) {
    %c0_i32 = arith.constant 0 : i32
    %c0_i32_0 = arith.constant 0 : i32
    %c0_i32_1 = arith.constant 0 : i32
    return %arg0, %arg1, %c0_i32, %c0_i32_0 : i32, i32, i32, i32
  }
}

module attributes {stable_mosaic.version = 11 : i64} {
  func.func @_scale_shift_act_kernel(%arg0: i32, %arg1: i32, %arg2: memref<1x32x128xf32, #tpu.memory_space<vmem>>, %arg3: memref<1x128xf32, #tpu.memory_space<vmem>>, %arg4: memref<1x128xf32, #tpu.memory_space<vmem>>, %arg5: memref<1x32x128xbf16, #tpu.memory_space<vmem>>) attributes {dimension_semantics = [#tpu.dimension_semantics<parallel>, #tpu.dimension_semantics<parallel>], iteration_bounds = array<i64: 4, 1>, scalar_prefetch = 0 : i64, scratch_operands = 0 : i64, tpu.core_type = #tpu.core_type<tc>, window_params = [{transform_indices = @transform_0, window_bounds = array<i64: 1, 32, 128>}, {pipeline_mode = #tpu.pipeline_mode<synchronous>, transform_indices = @transform_1, window_bounds = array<i64: 1, 128>}, {pipeline_mode = #tpu.pipeline_mode<synchronous>, transform_indices = @transform_2, window_bounds = array<i64: 1, 128>}, {transform_indices = @transform_3, window_bounds = array<i64: 1, 32, 128>}]} {
    %c0 = arith.constant 0 : index
    %c0_0 = arith.constant 0 : index
    %c0_1 = arith.constant 0 : index
    %0 = vector.load %arg2[%c0, %c0_0, %c0_1] : memref<1x32x128xf32, #tpu.memory_space<vmem>>, vector<1x32x128xf32>
    %1 = vector.shape_cast %0 : vector<1x32x128xf32> to vector<32x128xf32>
    %c0_2 = arith.constant 0 : index
    %c0_3 = arith.constant 0 : index
    %2 = vector.load %arg3[%c0_2, %c0_3] : memref<1x128xf32, #tpu.memory_space<vmem>>, vector<1x128xf32>
    %3 = vector.broadcast %2 : vector<1x128xf32> to vector<32x128xf32>
    %4 = arith.mulf %1, %3 : vector<32x128xf32>
    %c0_4 = arith.constant 0 : index
    %c0_5 = arith.constant 0 : index
    %5 = vector.load %arg4[%c0_4, %c0_5] : memref<1x128xf32, #tpu.memory_space<vmem>>, vector<1x128xf32>
    %6 = vector.broadcast %5 : vector<1x128xf32> to vector<32x128xf32>
    %7 = arith.addf %4, %6 : vector<32x128xf32>
    %cst = arith.constant 0.000000e+00 : f32
    %8 = vector.broadcast %cst : f32 to vector<32x128xf32>
    %9 = arith.maximumf %7, %8 : vector<32x128xf32>
    %10 = arith.truncf %9 : vector<32x128xf32> to vector<32x128xbf16>
    %c0_6 = arith.constant 0 : index
    %c0_7 = arith.constant 0 : index
    %c0_8 = arith.constant 0 : index
    %11 = vector.load %arg5[%c0_6, %c0_7, %c0_8] : memref<1x32x128xbf16, #tpu.memory_space<vmem>>, vector<1x32x128xbf16>
    %12 = vector.shape_cast %11 : vector<1x32x128xbf16> to vector<32x128xbf16>
    %13 = vector.shape_cast %10 : vector<32x128xbf16> to vector<1x32x128xbf16>
    tpu.vector_store %arg5[%c0_6, %c0_7, %c0_8], %13 {strides = array<i32>} : memref<1x32x128xbf16, #tpu.memory_space<vmem>>, vector<1x32x128xbf16>,
    return
  }
  func.func @transform_0(%arg0: i32, %arg1: i32) -> (i32, i32, i32) {
    %c0_i32 = arith.constant 0 : i32
    %c0_i32_0 = arith.constant 0 : i32
    return %arg0, %arg1, %c0_i32 : i32, i32, i32
  }
  func.func @transform_1(%arg0: i32, %arg1: i32) -> (i32, i32) {
    %c0_i32 = arith.constant 0 : i32
    %c0_i32_0 = arith.constant 0 : i32
    %c0_i32_1 = arith.constant 0 : i32
    return %c0_i32, %c0_i32_0 : i32, i32
  }
  func.func @transform_2(%arg0: i32, %arg1: i32) -> (i32, i32) {
    %c0_i32 = arith.constant 0 : i32
    %c0_i32_0 = arith.constant 0 : i32
    %c0_i32_1 = arith.constant 0 : i32
    return %c0_i32, %c0_i32_0 : i32, i32
  }
  func.func @transform_3(%arg0: i32, %arg1: i32) -> (i32, i32, i32) {
    %c0_i32 = arith.constant 0 : i32
    %c0_i32_0 = arith.constant 0 : i32
    return %arg0, %arg1, %c0_i32 : i32, i32, i32
  }
}

module attributes {stable_mosaic.version = 11 : i64} {
  func.func @_matmul_stats_kernel(%arg0: i32, %arg1: i32, %arg2: memref<1x128x128xbf16, #tpu.memory_space<vmem>>, %arg3: memref<1x128x128xbf16, #tpu.memory_space<vmem>>, %arg4: memref<1x128x128xf32, #tpu.memory_space<vmem>>, %arg5: memref<1x1x1x128xf32, #tpu.memory_space<vmem>>, %arg6: memref<1x1x1x128xf32, #tpu.memory_space<vmem>>) attributes {dimension_semantics = [#tpu.dimension_semantics<parallel>, #tpu.dimension_semantics<parallel>], iteration_bounds = array<i64: 4, 1>, scalar_prefetch = 0 : i64, scratch_operands = 0 : i64, tpu.core_type = #tpu.core_type<tc>, window_params = [{transform_indices = @transform_0, window_bounds = array<i64: 1, 128, 128>}, {transform_indices = @transform_1, window_bounds = array<i64: 1, 128, 128>}, {transform_indices = @transform_2, window_bounds = array<i64: 1, 128, 128>}, {transform_indices = @transform_3, window_bounds = array<i64: 1, 1, 1, 128>}, {transform_indices = @transform_4, window_bounds = array<i64: 1, 1, 1, 128>}]} {
    %c0 = arith.constant 0 : index
    %c0_0 = arith.constant 0 : index
    %c0_1 = arith.constant 0 : index
    %0 = vector.load %arg2[%c0, %c0_0, %c0_1] : memref<1x128x128xbf16, #tpu.memory_space<vmem>>, vector<1x128x128xbf16>
    %1 = vector.shape_cast %0 : vector<1x128x128xbf16> to vector<128x128xbf16>
    %c0_2 = arith.constant 0 : index
    %c0_3 = arith.constant 0 : index
    %c0_4 = arith.constant 0 : index
    %2 = vector.load %arg3[%c0_2, %c0_3, %c0_4] : memref<1x128x128xbf16, #tpu.memory_space<vmem>>, vector<1x128x128xbf16>
    %3 = vector.shape_cast %2 : vector<1x128x128xbf16> to vector<128x128xbf16>
    %cst = arith.constant dense<0.000000e+00> : vector<128x128xf32>
    %4 = tpu.matmul %1, %3, %cst {dimension_numbers = #tpu.dot_dimension_numbers<[1], [0], [0], [1], [0, 0, 1, 1], [], []>} : vector<128x128xbf16>, vector<128x128xbf16>, vector<128x128xf32> -> vector<128x128xf32>
    %c0_5 = arith.constant 0 : index
    %c0_6 = arith.constant 0 : index
    %c0_7 = arith.constant 0 : index
    %5 = vector.load %arg4[%c0_5, %c0_6, %c0_7] : memref<1x128x128xf32, #tpu.memory_space<vmem>>, vector<1x128x128xf32>
    %6 = vector.shape_cast %5 : vector<1x128x128xf32> to vector<128x128xf32>
    %7 = vector.shape_cast %4 : vector<128x128xf32> to vector<1x128x128xf32>
    tpu.vector_store %arg4[%c0_5, %c0_6, %c0_7], %7 {strides = array<i32>} : memref<1x128x128xf32, #tpu.memory_space<vmem>>, vector<1x128x128xf32>,
    %cst_8 = arith.constant dense<0.000000e+00> : vector<128xf32>
    %8 = vector.multi_reduction <add>, %4, %cst_8 [0] : vector<128x128xf32> to vector<128xf32>
    %9 = vector.shape_cast %8 : vector<128xf32> to vector<1x128xf32>
    %c0_9 = arith.constant 0 : index
    %c0_10 = arith.constant 0 : index
    %c0_11 = arith.constant 0 : index
    %c0_12 = arith.constant 0 : index
    %10 = vector.load %arg5[%c0_9, %c0_10, %c0_11, %c0_12] : memref<1x1x1x128xf32, #tpu.memory_space<vmem>>, vector<1x1x1x128xf32>
    %11 = vector.shape_cast %10 : vector<1x1x1x128xf32> to vector<1x128xf32>
    %12 = vector.shape_cast %9 : vector<1x128xf32> to vector<1x1x1x128xf32>
    tpu.vector_store %arg5[%c0_9, %c0_10, %c0_11, %c0_12], %12 {strides = array<i32>} : memref<1x1x1x128xf32, #tpu.memory_space<vmem>>, vector<1x1x1x128xf32>,
    %13 = arith.mulf %4, %4 : vector<128x128xf32>
    %cst_13 = arith.constant dense<0.000000e+00> : vector<128xf32>
    %14 = vector.multi_reduction <add>, %13, %cst_13 [0] : vector<128x128xf32> to vector<128xf32>
    %15 = vector.shape_cast %14 : vector<128xf32> to vector<1x128xf32>
    %c0_14 = arith.constant 0 : index
    %c0_15 = arith.constant 0 : index
    %c0_16 = arith.constant 0 : index
    %c0_17 = arith.constant 0 : index
    %16 = vector.load %arg6[%c0_14, %c0_15, %c0_16, %c0_17] : memref<1x1x1x128xf32, #tpu.memory_space<vmem>>, vector<1x1x1x128xf32>
    %17 = vector.shape_cast %16 : vector<1x1x1x128xf32> to vector<1x128xf32>
    %18 = vector.shape_cast %15 : vector<1x128xf32> to vector<1x1x1x128xf32>
    tpu.vector_store %arg6[%c0_14, %c0_15, %c0_16, %c0_17], %18 {strides = array<i32>} : memref<1x1x1x128xf32, #tpu.memory_space<vmem>>, vector<1x1x1x128xf32>,
    return
  }
  func.func @transform_0(%arg0: i32, %arg1: i32) -> (i32, i32, i32) {
    %c0_i32 = arith.constant 0 : i32
    %c0_i32_0 = arith.constant 0 : i32
    return %arg0, %arg1, %c0_i32 : i32, i32, i32
  }
  func.func @transform_1(%arg0: i32, %arg1: i32) -> (i32, i32, i32) {
    %c0_i32 = arith.constant 0 : i32
    %c0_i32_0 = arith.constant 0 : i32
    %c0_i32_1 = arith.constant 0 : i32
    return %arg0, %c0_i32, %c0_i32_0 : i32, i32, i32
  }
  func.func @transform_2(%arg0: i32, %arg1: i32) -> (i32, i32, i32) {
    %c0_i32 = arith.constant 0 : i32
    %c0_i32_0 = arith.constant 0 : i32
    return %arg0, %arg1, %c0_i32 : i32, i32, i32
  }
  func.func @transform_3(%arg0: i32, %arg1: i32) -> (i32, i32, i32, i32) {
    %c0_i32 = arith.constant 0 : i32
    %c0_i32_0 = arith.constant 0 : i32
    %c0_i32_1 = arith.constant 0 : i32
    return %arg0, %arg1, %c0_i32, %c0_i32_0 : i32, i32, i32, i32
  }
  func.func @transform_4(%arg0: i32, %arg1: i32) -> (i32, i32, i32, i32) {
    %c0_i32 = arith.constant 0 : i32
    %c0_i32_0 = arith.constant 0 : i32
    %c0_i32_1 = arith.constant 0 : i32
    return %arg0, %arg1, %c0_i32, %c0_i32_0 : i32, i32, i32, i32
  }
}

module attributes {stable_mosaic.version = 11 : i64} {
  func.func @_scale_shift_act_kernel(%arg0: i32, %arg1: i32, %arg2: memref<1x128x128xf32, #tpu.memory_space<vmem>>, %arg3: memref<1x128xf32, #tpu.memory_space<vmem>>, %arg4: memref<1x128xf32, #tpu.memory_space<vmem>>, %arg5: memref<1x128x128xbf16, #tpu.memory_space<vmem>>) attributes {dimension_semantics = [#tpu.dimension_semantics<parallel>, #tpu.dimension_semantics<parallel>], iteration_bounds = array<i64: 4, 1>, scalar_prefetch = 0 : i64, scratch_operands = 0 : i64, tpu.core_type = #tpu.core_type<tc>, window_params = [{transform_indices = @transform_0, window_bounds = array<i64: 1, 128, 128>}, {pipeline_mode = #tpu.pipeline_mode<synchronous>, transform_indices = @transform_1, window_bounds = array<i64: 1, 128>}, {pipeline_mode = #tpu.pipeline_mode<synchronous>, transform_indices = @transform_2, window_bounds = array<i64: 1, 128>}, {transform_indices = @transform_3, window_bounds = array<i64: 1, 128, 128>}]} {
    %c0 = arith.constant 0 : index
    %c0_0 = arith.constant 0 : index
    %c0_1 = arith.constant 0 : index
    %0 = vector.load %arg2[%c0, %c0_0, %c0_1] : memref<1x128x128xf32, #tpu.memory_space<vmem>>, vector<1x128x128xf32>
    %1 = vector.shape_cast %0 : vector<1x128x128xf32> to vector<128x128xf32>
    %c0_2 = arith.constant 0 : index
    %c0_3 = arith.constant 0 : index
    %2 = vector.load %arg3[%c0_2, %c0_3] : memref<1x128xf32, #tpu.memory_space<vmem>>, vector<1x128xf32>
    %3 = vector.broadcast %2 : vector<1x128xf32> to vector<128x128xf32>
    %4 = arith.mulf %1, %3 : vector<128x128xf32>
    %c0_4 = arith.constant 0 : index
    %c0_5 = arith.constant 0 : index
    %5 = vector.load %arg4[%c0_4, %c0_5] : memref<1x128xf32, #tpu.memory_space<vmem>>, vector<1x128xf32>
    %6 = vector.broadcast %5 : vector<1x128xf32> to vector<128x128xf32>
    %7 = arith.addf %4, %6 : vector<128x128xf32>
    %cst = arith.constant 0.000000e+00 : f32
    %8 = vector.broadcast %cst : f32 to vector<128x128xf32>
    %9 = arith.maximumf %7, %8 : vector<128x128xf32>
    %10 = arith.truncf %9 : vector<128x128xf32> to vector<128x128xbf16>
    %c0_6 = arith.constant 0 : index
    %c0_7 = arith.constant 0 : index
    %c0_8 = arith.constant 0 : index
    %11 = vector.load %arg5[%c0_6, %c0_7, %c0_8] : memref<1x128x128xbf16, #tpu.memory_space<vmem>>, vector<1x128x128xbf16>
    %12 = vector.shape_cast %11 : vector<1x128x128xbf16> to vector<128x128xbf16>
    %13 = vector.shape_cast %10 : vector<128x128xbf16> to vector<1x128x128xbf16>
    tpu.vector_store %arg5[%c0_6, %c0_7, %c0_8], %13 {strides = array<i32>} : memref<1x128x128xbf16, #tpu.memory_space<vmem>>, vector<1x128x128xbf16>,
    return
  }
  func.func @transform_0(%arg0: i32, %arg1: i32) -> (i32, i32, i32) {
    %c0_i32 = arith.constant 0 : i32
    %c0_i32_0 = arith.constant 0 : i32
    return %arg0, %arg1, %c0_i32 : i32, i32, i32
  }
  func.func @transform_1(%arg0: i32, %arg1: i32) -> (i32, i32) {
    %c0_i32 = arith.constant 0 : i32
    %c0_i32_0 = arith.constant 0 : i32
    %c0_i32_1 = arith.constant 0 : i32
    return %c0_i32, %c0_i32_0 : i32, i32
  }
  func.func @transform_2(%arg0: i32, %arg1: i32) -> (i32, i32) {
    %c0_i32 = arith.constant 0 : i32
    %c0_i32_0 = arith.constant 0 : i32
    %c0_i32_1 = arith.constant 0 : i32
    return %c0_i32, %c0_i32_0 : i32, i32
  }
  func.func @transform_3(%arg0: i32, %arg1: i32) -> (i32, i32, i32) {
    %c0_i32 = arith.constant 0 : i32
    %c0_i32_0 = arith.constant 0 : i32
    return %arg0, %arg1, %c0_i32 : i32, i32, i32
  }
}

module attributes {stable_mosaic.version = 11 : i64} {
  func.func @_matmul_stats_kernel(%arg0: i32, %arg1: i32, %arg2: memref<1x512x128xbf16, #tpu.memory_space<vmem>>, %arg3: memref<1x128x128xbf16, #tpu.memory_space<vmem>>, %arg4: memref<1x512x128xf32, #tpu.memory_space<vmem>>, %arg5: memref<1x1x1x128xf32, #tpu.memory_space<vmem>>, %arg6: memref<1x1x1x128xf32, #tpu.memory_space<vmem>>) attributes {dimension_semantics = [#tpu.dimension_semantics<parallel>, #tpu.dimension_semantics<parallel>], iteration_bounds = array<i64: 4, 1>, scalar_prefetch = 0 : i64, scratch_operands = 0 : i64, tpu.core_type = #tpu.core_type<tc>, window_params = [{transform_indices = @transform_0, window_bounds = array<i64: 1, 512, 128>}, {transform_indices = @transform_1, window_bounds = array<i64: 1, 128, 128>}, {transform_indices = @transform_2, window_bounds = array<i64: 1, 512, 128>}, {transform_indices = @transform_3, window_bounds = array<i64: 1, 1, 1, 128>}, {transform_indices = @transform_4, window_bounds = array<i64: 1, 1, 1, 128>}]} {
    %c0 = arith.constant 0 : index
    %c0_0 = arith.constant 0 : index
    %c0_1 = arith.constant 0 : index
    %0 = vector.load %arg2[%c0, %c0_0, %c0_1] : memref<1x512x128xbf16, #tpu.memory_space<vmem>>, vector<1x512x128xbf16>
    %1 = vector.shape_cast %0 : vector<1x512x128xbf16> to vector<512x128xbf16>
    %c0_2 = arith.constant 0 : index
    %c0_3 = arith.constant 0 : index
    %c0_4 = arith.constant 0 : index
    %2 = vector.load %arg3[%c0_2, %c0_3, %c0_4] : memref<1x128x128xbf16, #tpu.memory_space<vmem>>, vector<1x128x128xbf16>
    %3 = vector.shape_cast %2 : vector<1x128x128xbf16> to vector<128x128xbf16>
    %cst = arith.constant dense<0.000000e+00> : vector<512x128xf32>
    %4 = tpu.matmul %1, %3, %cst {dimension_numbers = #tpu.dot_dimension_numbers<[1], [0], [0], [1], [0, 0, 1, 1], [], []>} : vector<512x128xbf16>, vector<128x128xbf16>, vector<512x128xf32> -> vector<512x128xf32>
    %c0_5 = arith.constant 0 : index
    %c0_6 = arith.constant 0 : index
    %c0_7 = arith.constant 0 : index
    %5 = vector.load %arg4[%c0_5, %c0_6, %c0_7] : memref<1x512x128xf32, #tpu.memory_space<vmem>>, vector<1x512x128xf32>
    %6 = vector.shape_cast %5 : vector<1x512x128xf32> to vector<512x128xf32>
    %7 = vector.shape_cast %4 : vector<512x128xf32> to vector<1x512x128xf32>
    tpu.vector_store %arg4[%c0_5, %c0_6, %c0_7], %7 {strides = array<i32>} : memref<1x512x128xf32, #tpu.memory_space<vmem>>, vector<1x512x128xf32>,
    %cst_8 = arith.constant dense<0.000000e+00> : vector<128xf32>
    %8 = vector.multi_reduction <add>, %4, %cst_8 [0] : vector<512x128xf32> to vector<128xf32>
    %9 = vector.shape_cast %8 : vector<128xf32> to vector<1x128xf32>
    %c0_9 = arith.constant 0 : index
    %c0_10 = arith.constant 0 : index
    %c0_11 = arith.constant 0 : index
    %c0_12 = arith.constant 0 : index
    %10 = vector.load %arg5[%c0_9, %c0_10, %c0_11, %c0_12] : memref<1x1x1x128xf32, #tpu.memory_space<vmem>>, vector<1x1x1x128xf32>
    %11 = vector.shape_cast %10 : vector<1x1x1x128xf32> to vector<1x128xf32>
    %12 = vector.shape_cast %9 : vector<1x128xf32> to vector<1x1x1x128xf32>
    tpu.vector_store %arg5[%c0_9, %c0_10, %c0_11, %c0_12], %12 {strides = array<i32>} : memref<1x1x1x128xf32, #tpu.memory_space<vmem>>, vector<1x1x1x128xf32>,
    %13 = arith.mulf %4, %4 : vector<512x128xf32>
    %cst_13 = arith.constant dense<0.000000e+00> : vector<128xf32>
    %14 = vector.multi_reduction <add>, %13, %cst_13 [0] : vector<512x128xf32> to vector<128xf32>
    %15 = vector.shape_cast %14 : vector<128xf32> to vector<1x128xf32>
    %c0_14 = arith.constant 0 : index
    %c0_15 = arith.constant 0 : index
    %c0_16 = arith.constant 0 : index
    %c0_17 = arith.constant 0 : index
    %16 = vector.load %arg6[%c0_14, %c0_15, %c0_16, %c0_17] : memref<1x1x1x128xf32, #tpu.memory_space<vmem>>, vector<1x1x1x128xf32>
    %17 = vector.shape_cast %16 : vector<1x1x1x128xf32> to vector<1x128xf32>
    %18 = vector.shape_cast %15 : vector<1x128xf32> to vector<1x1x1x128xf32>
    tpu.vector_store %arg6[%c0_14, %c0_15, %c0_16, %c0_17], %18 {strides = array<i32>} : memref<1x1x1x128xf32, #tpu.memory_space<vmem>>, vector<1x1x1x128xf32>,
    return
  }
  func.func @transform_0(%arg0: i32, %arg1: i32) -> (i32, i32, i32) {
    %c0_i32 = arith.constant 0 : i32
    %c0_i32_0 = arith.constant 0 : i32
    return %arg0, %arg1, %c0_i32 : i32, i32, i32
  }
  func.func @transform_1(%arg0: i32, %arg1: i32) -> (i32, i32, i32) {
    %c0_i32 = arith.constant 0 : i32
    %c0_i32_0 = arith.constant 0 : i32
    %c0_i32_1 = arith.constant 0 : i32
    return %arg0, %c0_i32, %c0_i32_0 : i32, i32, i32
  }
  func.func @transform_2(%arg0: i32, %arg1: i32) -> (i32, i32, i32) {
    %c0_i32 = arith.constant 0 : i32
    %c0_i32_0 = arith.constant 0 : i32
    return %arg0, %arg1, %c0_i32 : i32, i32, i32
  }
  func.func @transform_3(%arg0: i32, %arg1: i32) -> (i32, i32, i32, i32) {
    %c0_i32 = arith.constant 0 : i32
    %c0_i32_0 = arith.constant 0 : i32
    %c0_i32_1 = arith.constant 0 : i32
    return %arg0, %arg1, %c0_i32, %c0_i32_0 : i32, i32, i32, i32
  }
  func.func @transform_4(%arg0: i32, %arg1: i32) -> (i32, i32, i32, i32) {
    %c0_i32 = arith.constant 0 : i32
    %c0_i32_0 = arith.constant 0 : i32
    %c0_i32_1 = arith.constant 0 : i32
    return %arg0, %arg1, %c0_i32, %c0_i32_0 : i32, i32, i32, i32
  }
}

module attributes {stable_mosaic.version = 11 : i64} {
  func.func @_scale_shift_act_kernel(%arg0: i32, %arg1: i32, %arg2: memref<1x512x128xf32, #tpu.memory_space<vmem>>, %arg3: memref<1x128xf32, #tpu.memory_space<vmem>>, %arg4: memref<1x128xf32, #tpu.memory_space<vmem>>, %arg5: memref<1x512x128xbf16, #tpu.memory_space<vmem>>) attributes {dimension_semantics = [#tpu.dimension_semantics<parallel>, #tpu.dimension_semantics<parallel>], iteration_bounds = array<i64: 4, 1>, scalar_prefetch = 0 : i64, scratch_operands = 0 : i64, tpu.core_type = #tpu.core_type<tc>, window_params = [{transform_indices = @transform_0, window_bounds = array<i64: 1, 512, 128>}, {pipeline_mode = #tpu.pipeline_mode<synchronous>, transform_indices = @transform_1, window_bounds = array<i64: 1, 128>}, {pipeline_mode = #tpu.pipeline_mode<synchronous>, transform_indices = @transform_2, window_bounds = array<i64: 1, 128>}, {transform_indices = @transform_3, window_bounds = array<i64: 1, 512, 128>}]} {
    %c0 = arith.constant 0 : index
    %c0_0 = arith.constant 0 : index
    %c0_1 = arith.constant 0 : index
    %0 = vector.load %arg2[%c0, %c0_0, %c0_1] : memref<1x512x128xf32, #tpu.memory_space<vmem>>, vector<1x512x128xf32>
    %1 = vector.shape_cast %0 : vector<1x512x128xf32> to vector<512x128xf32>
    %c0_2 = arith.constant 0 : index
    %c0_3 = arith.constant 0 : index
    %2 = vector.load %arg3[%c0_2, %c0_3] : memref<1x128xf32, #tpu.memory_space<vmem>>, vector<1x128xf32>
    %3 = vector.broadcast %2 : vector<1x128xf32> to vector<512x128xf32>
    %4 = arith.mulf %1, %3 : vector<512x128xf32>
    %c0_4 = arith.constant 0 : index
    %c0_5 = arith.constant 0 : index
    %5 = vector.load %arg4[%c0_4, %c0_5] : memref<1x128xf32, #tpu.memory_space<vmem>>, vector<1x128xf32>
    %6 = vector.broadcast %5 : vector<1x128xf32> to vector<512x128xf32>
    %7 = arith.addf %4, %6 : vector<512x128xf32>
    %cst = arith.constant 0.000000e+00 : f32
    %8 = vector.broadcast %cst : f32 to vector<512x128xf32>
    %9 = arith.maximumf %7, %8 : vector<512x128xf32>
    %10 = arith.truncf %9 : vector<512x128xf32> to vector<512x128xbf16>
    %c0_6 = arith.constant 0 : index
    %c0_7 = arith.constant 0 : index
    %c0_8 = arith.constant 0 : index
    %11 = vector.load %arg5[%c0_6, %c0_7, %c0_8] : memref<1x512x128xbf16, #tpu.memory_space<vmem>>, vector<1x512x128xbf16>
    %12 = vector.shape_cast %11 : vector<1x512x128xbf16> to vector<512x128xbf16>
    %13 = vector.shape_cast %10 : vector<512x128xbf16> to vector<1x512x128xbf16>
    tpu.vector_store %arg5[%c0_6, %c0_7, %c0_8], %13 {strides = array<i32>} : memref<1x512x128xbf16, #tpu.memory_space<vmem>>, vector<1x512x128xbf16>,
    return
  }
  func.func @transform_0(%arg0: i32, %arg1: i32) -> (i32, i32, i32) {
    %c0_i32 = arith.constant 0 : i32
    %c0_i32_0 = arith.constant 0 : i32
    return %arg0, %arg1, %c0_i32 : i32, i32, i32
  }
  func.func @transform_1(%arg0: i32, %arg1: i32) -> (i32, i32) {
    %c0_i32 = arith.constant 0 : i32
    %c0_i32_0 = arith.constant 0 : i32
    %c0_i32_1 = arith.constant 0 : i32
    return %c0_i32, %c0_i32_0 : i32, i32
  }
  func.func @transform_2(%arg0: i32, %arg1: i32) -> (i32, i32) {
    %c0_i32 = arith.constant 0 : i32
    %c0_i32_0 = arith.constant 0 : i32
    %c0_i32_1 = arith.constant 0 : i32
    return %c0_i32, %c0_i32_0 : i32, i32
  }
  func.func @transform_3(%arg0: i32, %arg1: i32) -> (i32, i32, i32) {
    %c0_i32 = arith.constant 0 : i32
    %c0_i32_0 = arith.constant 0 : i32
    return %arg0, %arg1, %c0_i32 : i32, i32, i32
  }
}

module attributes {stable_mosaic.version = 11 : i64} {
  func.func @_matmul_act_kernel(%arg0: i32, %arg1: i32, %arg2: memref<1x512x128xbf16, #tpu.memory_space<vmem>>, %arg3: memref<1x128x128xbf16, #tpu.memory_space<vmem>>, %arg4: memref<1x512x128xf32, #tpu.memory_space<vmem>>) attributes {dimension_semantics = [#tpu.dimension_semantics<parallel>, #tpu.dimension_semantics<parallel>], iteration_bounds = array<i64: 4, 4>, scalar_prefetch = 0 : i64, scratch_operands = 0 : i64, tpu.core_type = #tpu.core_type<tc>, window_params = [{transform_indices = @transform_0, window_bounds = array<i64: 1, 512, 128>}, {transform_indices = @transform_1, window_bounds = array<i64: 1, 128, 128>}, {transform_indices = @transform_2, window_bounds = array<i64: 1, 512, 128>}]} {
    %c0 = arith.constant 0 : index
    %c0_0 = arith.constant 0 : index
    %c0_1 = arith.constant 0 : index
    %0 = vector.load %arg2[%c0, %c0_0, %c0_1] : memref<1x512x128xbf16, #tpu.memory_space<vmem>>, vector<1x512x128xbf16>
    %1 = vector.shape_cast %0 : vector<1x512x128xbf16> to vector<512x128xbf16>
    %c0_2 = arith.constant 0 : index
    %c0_3 = arith.constant 0 : index
    %c0_4 = arith.constant 0 : index
    %2 = vector.load %arg3[%c0_2, %c0_3, %c0_4] : memref<1x128x128xbf16, #tpu.memory_space<vmem>>, vector<1x128x128xbf16>
    %3 = vector.shape_cast %2 : vector<1x128x128xbf16> to vector<128x128xbf16>
    %cst = arith.constant dense<0.000000e+00> : vector<512x128xf32>
    %4 = tpu.matmul %1, %3, %cst {dimension_numbers = #tpu.dot_dimension_numbers<[1], [0], [0], [1], [0, 0, 1, 1], [], []>} : vector<512x128xbf16>, vector<128x128xbf16>, vector<512x128xf32> -> vector<512x128xf32>
    %5 = math.tanh %4 : vector<512x128xf32>
    %c0_5 = arith.constant 0 : index
    %c0_6 = arith.constant 0 : index
    %c0_7 = arith.constant 0 : index
    %6 = vector.load %arg4[%c0_5, %c0_6, %c0_7] : memref<1x512x128xf32, #tpu.memory_space<vmem>>, vector<1x512x128xf32>
    %7 = vector.shape_cast %6 : vector<1x512x128xf32> to vector<512x128xf32>
    %8 = vector.shape_cast %5 : vector<512x128xf32> to vector<1x512x128xf32>
    tpu.vector_store %arg4[%c0_5, %c0_6, %c0_7], %8 {strides = array<i32>} : memref<1x512x128xf32, #tpu.memory_space<vmem>>, vector<1x512x128xf32>,
    return
  }
  func.func @transform_0(%arg0: i32, %arg1: i32) -> (i32, i32, i32) {
    %c0_i32 = arith.constant 0 : i32
    %c0_i32_0 = arith.constant 0 : i32
    return %arg0, %arg1, %c0_i32 : i32, i32, i32
  }
  func.func @transform_1(%arg0: i32, %arg1: i32) -> (i32, i32, i32) {
    %c0_i32 = arith.constant 0 : i32
    %c0_i32_0 = arith.constant 0 : i32
    %c0_i32_1 = arith.constant 0 : i32
    return %arg0, %c0_i32, %c0_i32_0 : i32, i32, i32
  }
  func.func @transform_2(%arg0: i32, %arg1: i32) -> (i32, i32, i32) {
    %c0_i32 = arith.constant 0 : i32
    %c0_i32_0 = arith.constant 0 : i32
    return %arg0, %arg1, %c0_i32 : i32, i32, i32
  }
}

</mosaic_0001>

<llo_original>
// kernel: _lambda_.10
$region0: #{_lambda_.10}
  #allocation0 [shape = 'u32[]', space=smem, size = 0x4, offset = 0x4, fixed_abs, tag = 'smem constant byte address 0x4 - core index']
  #allocation1 [shape = 'u32[144,128]{1,0:T(1,128)}', space=vmem, size = 0x12000, scoped, tag = 'internal scratch']
  %s0 = inlined_call_operand.vmem [shape: f32[1,32,128], index: 0, kind: input, shape index: {}]
  %s1 = inlined_call_operand.vmem [shape: f32[1,128], index: 1, kind: input, shape index: {}]
  %s2 = inlined_call_operand.vmem [shape: f32[1,128], index: 2, kind: input, shape index: {}]
  %s3 = inlined_call_operand.vmem [shape: bf16[1,32,128], index: 3, kind: output, shape index: {}]
  %s4 = sld [smem:[#allocation0]]
  $region22: #{_lambda_.10} parent=0
    _
  %s6 = ssub.s32 1, %s4
  %s7 = scalar_select 0, %s6, %s4
  // Predicated region
  $region2: #{_lambda_.10} parent=0 // pred_check
    _
  $region3: #{_lambda_.10} parent=0 // pred_check_branch
    %9 = sbr.rel (0) target = $region5
  $region4: #{_lambda_.10} parent=0 // pred_region
    _
  $region5: #{_lambda_.10} parent=0 // pred_fallthru
    _
  // Predicated region
  $region6: #{_lambda_.10} parent=0 // pred_check
    _
  $region7: #{_lambda_.10} parent=0 // pred_check_branch
    %11 = sbr.rel (0) target = $region9
  $region8: #{_lambda_.10} parent=0 // pred_region
    _
  $region9: #{_lambda_.10} parent=0 // pred_fallthru
    _
  // Predicated region
  $region10: #{_lambda_.10} parent=0 // pred_check
    _
  $region11: #{_lambda_.10} parent=0 // pred_check_branch
    %13 = sbr.rel (0) target = $region13
  $region12: #{_lambda_.10} parent=0 // pred_region
    _
  $region13: #{_lambda_.10} parent=0 // pred_fallthru
    _
  %v14 = vld [vmem:[%s0] sm:$0xff]
  %v15 = vld [vmem:[%s0 + $0x8] sm:$0xff]
  %v16 = vld [vmem:[%s0 + $0x10] sm:$0xff]
  %v17 = vld [vmem:[%s0 + $0x18] sm:$0xff]
  %v18 = vld [vmem:[%s1] sm:$0x1]
  %v20 = vlaneseq
  %v21 = vshrl.u32 %v20, 7
  %v22 = vsub.s32 0, %v21
  %v23 = vrot.slane %v18, %v22
  %v25 = vmul.f32 %v14, %v23
  %v26 = vmul.f32 %v15, %v23
  %v27 = vmul.f32 %v16, %v23
  %v28 = vmul.f32 %v17, %v23
  %v29 = vld [vmem:[%s2] sm:$0x1]
  %v31 = vlaneseq
  %v32 = vshrl.u32 %v31, 7
  %v33 = vsub.s32 0, %v32
  %v34 = vrot.slane %v29, %v33
  %v36 = vadd.f32 %v25, %v34
  %v37 = vadd.f32 %v26, %v34
  %v38 = vadd.f32 %v27, %v34
  %v39 = vadd.f32 %v28, %v34
  %v40 = vmax.f32 %v36, 0.0
  %v41 = vmax.f32 %v37, 0.0
  %v42 = vmax.f32 %v38, 0.0
  %v43 = vmax.f32 %v39, 0.0
  %v44 = vpack.c.bf16 %v41, %v40
  %v45 = vpack.c.bf16 %v43, %v42
  %v48 = vunpack.c.l.b16 %v44
  %v49 = vunpack.c.h.b16 %v44
  %v50 = vunpack.c.l.b16 %v45
  %v51 = vunpack.c.h.b16 %v45
  %v52 = vpack.c.b16 %v48, %v48
  %v53 = vpack.c.b16 %v49, %v49
  %v54 = vpack.c.b16 %v50, %v50
  %v55 = vpack.c.b16 %v51, %v51
  %60 = vst [vmem:[%s3] sm:$0xf] %v52
  %61 = vst [vmem:[%s3 + $0x4] sm:$0xf] %v53
  %62 = vst [vmem:[%s3 + $0x8] sm:$0xf] %v54
  %63 = vst [vmem:[%s3 + $0xc] sm:$0xf] %v55
  // Predicated region
  $region14: #{_lambda_.10} parent=0 // pred_check
    _
  $region15: #{_lambda_.10} parent=0 // pred_check_branch
    %65 = sbr.rel (0) target = $region17
  $region16: #{_lambda_.10} parent=0 // pred_region
    _
  $region17: #{_lambda_.10} parent=0 // pred_fallthru
    _
  // Predicated region
  $region18: #{_lambda_.10} parent=0 // pred_check
    _
  $region19: #{_lambda_.10} parent=0 // pred_check_branch
    %67 = sbr.rel (0) target = $region21
  $region20: #{_lambda_.10} parent=0 // pred_region
    _
  $region21: #{_lambda_.10} parent=0 // pred_fallthru
    _

// kernel: _lambda_.9
$region0: #{_lambda_.9}
  #allocation0 [shape = 'u32[]', space=smem, size = 0x4, offset = 0x4, fixed_abs, tag = 'smem constant byte address 0x4 - core index']
  #allocation1 [shape = 'u32[144,128]{1,0:T(1,128)}', space=vmem, size = 0x12000, scoped, tag = 'internal scratch']
  %s0 = inlined_call_operand.vmem [shape: bf16[1,32,256], index: 0, kind: input, shape index: {}]
  %s1 = inlined_call_operand.hbm [shape: bf16[1,256,128], index: 1, kind: input, shape index: {}]
  %s2 = inlined_call_operand.vmem [shape: f32[1,32,128], index: 2, kind: output, shape index: {0}]
  %s3 = inlined_call_operand.vmem [shape: f32[1,1,1,128], index: 3, kind: output, shape index: {1}]
  %s4 = inlined_call_operand.vmem [shape: f32[1,1,1,128], index: 4, kind: output, shape index: {2}]
  %5 = xla_tuple %s2, %s3, %s4
  %s6 = sld [smem:[#allocation0]]
  $region38: #{_lambda_.9} parent=0
    _
  %s8 = ssub.s32 1, %s6
  %s9 = scalar_select 0, %s8, %s6
  $region1: #{_lambda_.9} parent=0
    #allocation2 [shape = 'u8[65536]{0}', space=vmem, size = 0x10000, scoped, tag = 'input window, operand 1, single buffered']
    #allocation3 [shape = 's32[1]{0}', space=sflag, size = 0x4, scoped, tag = 'scoped memory for _lambda_.9']
    %10 = vsyncpa [#allocation3], 0
    // Predicated region
    $region2: #{_lambda_.9} parent=1 // pred_check
      _
    $region3: #{_lambda_.9} parent=1 // pred_check_branch
      %12 = sbr.rel (0) target = $region5
    $region4: #{_lambda_.9} parent=1 // pred_region
      _
    $region5: #{_lambda_.9} parent=1 // pred_fallthru
      _
    // Predicated region
    $region6: #{_lambda_.9} parent=1 // pred_check
      _
    $region7: #{_lambda_.9} parent=1 // pred_check_branch
      %14 = sbr.rel (0) target = $region9
    $region8: #{_lambda_.9} parent=1 // pred_region
      %s16 = ssub.s32 2048, 2048
      %17 = vsyncadd [#allocation3], %s16
      %s18 = sshll.u32 [#allocation2], 4
      %s19 = int_to_ptr.vmem [resolvable:$true] %s18
      %24 = dma.hbm_to_vmem [thread:$0]  %s1, 2048, %s19, [#allocation3], 64, 64, 4
    $region9: #{_lambda_.9} parent=1 // pred_fallthru
      _
    // Predicated region
    $region10: #{_lambda_.9} parent=1 // pred_check
      _
    $region11: #{_lambda_.9} parent=1 // pred_check_branch
      %26 = sbr.rel (0) target = $region13
    $region12: #{_lambda_.9} parent=1 // pred_region
      %27 = dma.done [#allocation3], 2048
    $region13: #{_lambda_.9} parent=1 // pred_fallthru
      _
    %v29 = vld [vmem:[%s0] sm:$0xff]
    %v30 = vld [vmem:[%s0 + $0x8] sm:$0xff]
    %v31 = vld [vmem:[%s0 + $0x10] sm:$0xff]
    %v32 = vld [vmem:[%s0 + $0x18] sm:$0xff]
    %v33 = vld [vmem:[#allocation2] sm:$0xf]
    %v34 = vld [vmem:[#allocation2 + $0x4] sm:$0xf]
    %v35 = vld [vmem:[#allocation2 + $0x8] sm:$0xf]
    %v36 = vld [vmem:[#allocation2 + $0xc] sm:$0xf]
    %v37 = vld [vmem:[#allocation2 + $0x10] sm:$0xf]
    %v38 = vld [vmem:[#allocation2 + $0x14] sm:$0xf]
    %v39 = vld [vmem:[#allocation2 + $0x18] sm:$0xf]
    %v40 = vld [vmem:[#allocation2 + $0x1c] sm:$0xf]
    %v41 = vld [vmem:[#allocation2 + $0x20] sm:$0xf]
    %v42 = vld [vmem:[#allocation2 + $0x24] sm:$0xf]
    %v43 = vld [vmem:[#allocation2 + $0x28] sm:$0xf]
    %v44 = vld [vmem:[#allocation2 + $0x2c] sm:$0xf]
    %v45 = vld [vmem:[#allocation2 + $0x30] sm:$0xf]
    %v46 = vld [vmem:[#allocation2 + $0x34] sm:$0xf]
    %v47 = vld [vmem:[#allocation2 + $0x38] sm:$0xf]
    %v48 = vld [vmem:[#allocation2 + $0x3c] sm:$0xf]
    %v49 = vld [vmem:[#allocation2 + $0x40] sm:$0xf]
    %v50 = vld [vmem:[#allocation2 + $0x44] sm:$0xf]
    %v51 = vld [vmem:[#allocation2 + $0x48] sm:$0xf]
    %v52 = vld [vmem:[#allocation2 + $0x4c] sm:$0xf]
    %v53 = vld [vmem:[#allocation2 + $0x50] sm:$0xf]
    %v54 = vld [vmem:[#allocation2 + $0x54] sm:$0xf]
    %v55 = vld [vmem:[#allocation2 + $0x58] sm:$0xf]
    %v56 = vld [vmem:[#allocation2 + $0x5c] sm:$0xf]
    %v57 = vld [vmem:[#allocation2 + $0x60] sm:$0xf]
    %v58 = vld [vmem:[#allocation2 + $0x64] sm:$0xf]
    %v59 = vld [vmem:[#allocation2 + $0x68] sm:$0xf]
    %v60 = vld [vmem:[#allocation2 + $0x6c] sm:$0xf]
    %v61 = vld [vmem:[#allocation2 + $0x70] sm:$0xf]
    %v62 = vld [vmem:[#allocation2 + $0x74] sm:$0xf]
    %v63 = vld [vmem:[#allocation2 + $0x78] sm:$0xf]
    %v64 = vld [vmem:[#allocation2 + $0x7c] sm:$0xf]
    %v69 = vunpack.c.l.b16 %v29
    %v70 = vunpack.c.h.b16 %v29
    %v71 = vunpack.c.l.b16 %v30
    %v72 = vunpack.c.h.b16 %v30
    %v73 = vunpack.c.l.b16 %v31
    %v74 = vunpack.c.h.b16 %v31
    %v75 = vunpack.c.l.b16 %v32
    %v76 = vunpack.c.h.b16 %v32
    %v77 = vpack.c.b16 %v71, %v69
    %v78 = vpack.c.b16 %v72, %v70
    %v79 = vpack.c.b16 %v75, %v73
    %v80 = vpack.c.b16 %v76, %v74
    %v117 = vunpack.c.l.b16 %v33
    %v118 = vunpack.c.l.b16 %v34
    %v119 = vunpack.c.l.b16 %v35
    %v120 = vunpack.c.l.b16 %v36
    %v121 = vunpack.c.l.b16 %v37
    %v122 = vunpack.c.l.b16 %v38
    %v123 = vunpack.c.l.b16 %v39
    %v124 = vunpack.c.l.b16 %v40
    %v125 = vunpack.c.l.b16 %v41
    %v126 = vunpack.c.l.b16 %v42
    %v127 = vunpack.c.l.b16 %v43
    %v128 = vunpack.c.l.b16 %v44
    %v129 = vunpack.c.l.b16 %v45
    %v130 = vunpack.c.l.b16 %v46
    %v131 = vunpack.c.l.b16 %v47
    %v132 = vunpack.c.l.b16 %v48
    %v133 = vunpack.c.l.b16 %v49
    %v134 = vunpack.c.l.b16 %v50
    %v135 = vunpack.c.l.b16 %v51
    %v136 = vunpack.c.l.b16 %v52
    %v137 = vunpack.c.l.b16 %v53
    %v138 = vunpack.c.l.b16 %v54
    %v139 = vunpack.c.l.b16 %v55
    %v140 = vunpack.c.l.b16 %v56
    %v141 = vunpack.c.l.b16 %v57
    %v142 = vunpack.c.l.b16 %v58
    %v143 = vunpack.c.l.b16 %v59
    %v144 = vunpack.c.l.b16 %v60
    %v145 = vunpack.c.l.b16 %v61
    %v146 = vunpack.c.l.b16 %v62
    %v147 = vunpack.c.l.b16 %v63
    %v148 = vunpack.c.l.b16 %v64
    %v149 = vpack.c.b16 %v118, %v117
    %v150 = vpack.c.b16 %v120, %v119
    %v151 = vpack.c.b16 %v122, %v121
    %v152 = vpack.c.b16 %v124, %v123
    %v153 = vpack.c.b16 %v126, %v125
    %v154 = vpack.c.b16 %v128, %v127
    %v155 = vpack.c.b16 %v130, %v129
    %v156 = vpack.c.b16 %v132, %v131
    %v157 = vpack.c.b16 %v134, %v133
    %v158 = vpack.c.b16 %v136, %v135
    %v159 = vpack.c.b16 %v138, %v137
    %v160 = vpack.c.b16 %v140, %v139
    %v161 = vpack.c.b16 %v142, %v141
    %v162 = vpack.c.b16 %v144, %v143
    %v163 = vpack.c.b16 %v146, %v145
    %v164 = vpack.c.b16 %v148, %v147
    %181 = vmatprep.subr.bf16.mxu0 0
    %182 = vmatpush1.bf16.msra.mxu0 %v149
    %183 = vmatprep.subr.bf16.mxu0 0
    %184 = vmatpush1.bf16.msra.mxu0 %v150
    %185 = vmatprep.subr.bf16.mxu0 0
    %186 = vmatpush1.bf16.msra.mxu0 %v151
    %187 = vmatprep.subr.bf16.mxu0 0
    %188 = vmatpush1.bf16.msra.mxu0 %v152
    %189 = vmatprep.subr.bf16.mxu0 0
    %190 = vmatpush1.bf16.msra.mxu0 %v153
    %191 = vmatprep.subr.bf16.mxu0 0
    %192 = vmatpush1.bf16.msra.mxu0 %v154
    %193 = vmatprep.subr.bf16.mxu0 0
    %194 = vmatpush1.bf16.msra.mxu0 %v155
    %195 = vmatprep.subr.bf16.mxu0 0
    %196 = vmatpush1.bf16.msra.mxu0 %v156
    %197 = vmatprep.subr.bf16.mxu0 0
    %198 = vmatpush1.bf16.msra.mxu0 %v157
    %199 = vmatprep.subr.bf16.mxu0 0
    %200 = vmatpush1.bf16.msra.mxu0 %v158
    %201 = vmatprep.subr.bf16.mxu0 0
    %202 = vmatpush1.bf16.msra.mxu0 %v159
    %203 = vmatprep.subr.bf16.mxu0 0
    %204 = vmatpush1.bf16.msra.mxu0 %v160
    %205 = vmatprep.subr.bf16.mxu0 0
    %206 = vmatpush1.bf16.msra.mxu0 %v161
    %207 = vmatprep.subr.bf16.mxu0 0
    %208 = vmatpush1.bf16.msra.mxu0 %v162
    %209 = vmatprep.subr.bf16.mxu0 0
    %210 = vmatpush1.bf16.msra.mxu0 %v163
    %211 = vmatprep.subr.bf16.mxu0 0
    %212 = vmatpush1.bf16.msra.mxu0 %v164
    %213 = vmatprep.mubr.bf16.mxu0 %v78
    %214 = vmatmul.mubr.bf16.gmra.mrb[0].mxu0 %v77
    %v215 = vpop.f32.mrb[0].mxu0
    %v216 = vadd.f32 0.0, %v215
    %v217 = vpop.f32.mrb[0].mxu0
    %v218 = vpop.f32.mrb[0].mxu0
    %v219 = vadd.f32 0.0, %v218
    %v220 = vpop.f32.mrb[0].mxu0
    %221 = vmatprep.mubr.bf16.mxu0 %v80
    %222 = vmatmul.mubr.bf16.gmra.mrb[0].mxu0 %v79
    %v223 = vpop.f32.mrb[0].mxu0
    %v224 = vadd.f32 0.0, %v223
    %v225 = vpop.f32.mrb[0].mxu0
    %v226 = vpop.f32.mrb[0].mxu0
    %v227 = vadd.f32 0.0, %v226
    %v228 = vpop.f32.mrb[0].mxu0
    %229 = vdwg.mxu0
    %230 = vst [vmem:[%s2] sm:$0xff] %v216
    %231 = vst [vmem:[%s2 + $0x8] sm:$0xff] %v219
    %232 = vst [vmem:[%s2 + $0x10] sm:$0xff] %v224
    %233 = vst [vmem:[%s2 + $0x18] sm:$0xff] %v227
    %v234 = vadd.f32 %v216, %v219
    %v235 = vadd.f32 %v234, %v224
    %v236 = vadd.f32 %v235, %v227
    %v237 = vrot.slane %v236, 4
    %v238 = vadd.f32 %v236, %v237
    %v239 = vrot.slane %v238, 2
    %v240 = vadd.f32 %v238, %v239
    %v241 = vrot.slane %v240, 1
    %v242 = vadd.f32 %v240, %v241
    %243 = vst [vmem:[%s3] sm:$0x1] %v242
    %v244 = vmul.f32 %v216, %v216
    %v245 = vmul.f32 %v219, %v219
    %v246 = vmul.f32 %v224, %v224
    %v247 = vmul.f32 %v227, %v227
    %v248 = vadd.f32 %v244, %v245
    %v249 = vadd.f32 %v248, %v246
    %v250 = vadd.f32 %v249, %v247
    %v251 = vrot.slane %v250, 4
    %v252 = vadd.f32 %v250, %v251
    %v253 = vrot.slane %v252, 2
    %v254 = vadd.f32 %v252, %v253
    %v255 = vrot.slane %v254, 1
    %v256 = vadd.f32 %v254, %v255
    %257 = vst [vmem:[%s4] sm:$0x1] %v256
    // Predicated region
    $region14: #{_lambda_.9} parent=1 // pred_check
      _
    $region15: #{_lambda_.9} parent=1 // pred_check_branch
      %259 = sbr.rel (0) target = $region17
    $region16: #{_lambda_.9} parent=1 // pred_region
      _
    $region17: #{_lambda_.9} parent=1 // pred_fallthru
      _
    // Predicated region
    $region18: #{_lambda_.9} parent=1 // pred_check
      _
    $region19: #{_lambda_.9} parent=1 // pred_check_branch
      %261 = sbr.rel (0) target = $region21
    $region20: #{_lambda_.9} parent=1 // pred_region
      _
    $region21: #{_lambda_.9} parent=1 // pred_fallthru
      _
    // Predicated region
    $region22: #{_lambda_.9} parent=1 // pred_check
      _
    $region23: #{_lambda_.9} parent=1 // pred_check_branch
      %263 = sbr.rel (0) target = $region25
    $region24: #{_lambda_.9} parent=1 // pred_region
      _
    $region25: #{_lambda_.9} parent=1 // pred_fallthru
      _
    // Predicated region
    $region26: #{_lambda_.9} parent=1 // pred_check
      _
    $region27: #{_lambda_.9} parent=1 // pred_check_branch
      %265 = sbr.rel (0) target = $region29
    $region28: #{_lambda_.9} parent=1 // pred_region
      _
    $region29: #{_lambda_.9} parent=1 // pred_fallthru
      _
    // Predicated region
    $region30: #{_lambda_.9} parent=1 // pred_check
      _
    $region31: #{_lambda_.9} parent=1 // pred_check_branch
      %267 = sbr.rel (0) target = $region33
    $region32: #{_lambda_.9} parent=1 // pred_region
      _
    $region33: #{_lambda_.9} parent=1 // pred_fallthru
      _
    // Predicated region
    $region34: #{_lambda_.9} parent=1 // pred_check
      _
    $region35: #{_lambda_.9} parent=1 // pred_check_branch
      %269 = sbr.rel (0) target = $region37
    $region36: #{_lambda_.9} parent=1 // pred_region
      _
    $region37: #{_lambda_.9} parent=1 // pred_fallthru
      _
    %270 = vsyncpa [#allocation3], 1

// kernel: _lambda_.11
$region0: #{_lambda_.11}
  #allocation0 [shape = 'u32[]', space=smem, size = 0x4, offset = 0x4, fixed_abs, tag = 'smem constant byte address 0x4 - core index']
  #allocation1 [shape = 'u32[144,128]{1,0:T(1,128)}', space=vmem, size = 0x12000, scoped, tag = 'internal scratch']
  %s0 = inlined_call_operand.vmem [shape: bf16[4,32,256], index: 0, kind: input, shape index: {}]
  %s1 = inlined_call_operand.hbm [shape: bf16[4,256,128], index: 1, kind: input, shape index: {}]
  %s2 = inlined_call_operand.vmem [shape: f32[4,32,128], index: 2, kind: output, shape index: {0}]
  %s3 = inlined_call_operand.vmem [shape: f32[4,1,1,128], index: 3, kind: output, shape index: {1}]
  %s4 = inlined_call_operand.vmem [shape: f32[4,1,1,128], index: 4, kind: output, shape index: {2}]
  %5 = xla_tuple %s2, %s3, %s4
  %s6 = sld [smem:[#allocation0]]
  $region61: #{_lambda_.11} parent=0
    _
  %s8 = ssub.s32 1, %s6
  %s9 = scalar_select 0, %s8, %s6
  $region1: #{_lambda_.11} parent=0
    #allocation2 [shape = 'u8[131072]{0}', space=vmem, size = 0x20000, scoped, tag = 'input window, operand 1']
    #allocation3 [shape = 's32[2]{0}', space=sflag, size = 0x8, scoped, tag = 'scoped memory for _lambda_.11']
    %10 = vsyncpa [#allocation3], 0
    %s11 = scalar_lea.sflag [#allocation3], 1
    %12 = vsyncpa %s11, 0
    loop: start=0, step=1, limit=6
    $region2: #{_lambda_.11} parent=1 // loop_pre_header
      _
    $region3: #{_lambda_.11} parent=1 // loop_header
      %s14 = sphi 0, %s18
      %p15 = scmp.ge.s32.totalorder %s14, 6
      %s21 = sphi 0, %s33
      %s22 = sphi 0, %s29
      %s23 = sphi 0, %s21
      %s24 = sphi 0, %s22
      %s25 = sphi 0, %s23
      %s26 = sphi 0, %s24
      %s38 = sphi 0, %s40
      %s41 = sphi 0, %s38
      %s42 = sphi 0, %s41
      %s58 = sphi 0, %s42
      %s64 = sphi 0, %s66
      %s67 = sphi 0, %s64
      %s68 = sphi 0, %s67
      %s84 = sphi 0, %s68
      %s92 = sphi 0, %s94
      %s95 = sphi 0, %s92
      %s96 = sphi 0, %s95
      %s112 = sphi 0, %s96
      %s120 = sphi 0, %s122
      %s123 = sphi 0, %s120
      %s124 = sphi 0, %s123
      %s140 = sphi 0, %s124
      %s148 = sphi 0, %s150
      %s151 = sphi 0, %s148
      %s152 = sphi 0, %s151
      %s168 = sphi 0, %s152
    $region4: #{_lambda_.11} parent=1 // loop_header_branch
      %17 = sbr.rel (%p15) target = $region8
    $region5: #{_lambda_.11} parent=1 // loop_body
      %s19 = ssub.s32 %s14, 1
      %s20 = ssub.s32 %s14, 2
      %s27 = sadd.s32 1, %s22
      %p28 = scmp.ge.s32.totalorder %s27, 1
      %s29 = scalar_select %p28, 0, %s27
      %s30 = sadd.s32 1, %s21
      %s31 = scalar_select %p28, %s30, %s21
      %p32 = scmp.ge.s32.totalorder %s31, 4
      %s33 = scalar_select %p32, 0, %s31
      %s34 = ssub.s32 %s21, %s33
      %s35 = ssub.s32 %s22, %s29
      %s36 = sor.u32 %s34, %s35
      %p37 = scmp.eq.s32.totalorder %s36, 0
      %s39 = sadd.s32 %s38, 1
      %s40 = scalar_select %p37, %s38, %s39
      %p43 = pneg %p37
      %p44 = scmp.eq.s32.totalorder %s14, 3
      %p45 = por %p43, %p44
      %p46 = scmp.ne.s32.totalorder %s38, %s41
      %p47 = scmp.eq.s32.totalorder %s14, 0
      %p48 = por %p46, %p47
      %p49 = scmp.ne.s32.totalorder %s38, %s41
      %p50 = scmp.eq.s32.totalorder %s19, 3
      %p51 = por %p49, %p50
      %p52 = scmp.ne.s32.totalorder %s41, %s42
      %p53 = scmp.eq.s32.totalorder %s19, 0
      %p54 = por %p52, %p53
      %p55 = scmp.ne.s32.totalorder %s41, %s42
      %p56 = scmp.eq.s32.totalorder %s20, 3
      %p57 = por %p55, %p56
      %p59 = scmp.ne.s32.totalorder %s42, %s58
      %p60 = scmp.eq.s32.totalorder %s20, 0
      %p61 = por %p59, %p60
      %s62 = ssub.s32 %s21, %s33
      %p63 = scmp.eq.s32.totalorder %s62, 0
      %s65 = sadd.s32 %s64, 1
      %s66 = scalar_select %p63, %s64, %s65
      %p69 = pneg %p63
      %p70 = scmp.eq.s32.totalorder %s14, 3
      %p71 = por %p69, %p70
      %p72 = scmp.ne.s32.totalorder %s64, %s67
      %p73 = scmp.eq.s32.totalorder %s14, 0
      %p74 = por %p72, %p73
      %p75 = scmp.ne.s32.totalorder %s64, %s67
      %p76 = scmp.eq.s32.totalorder %s19, 3
      %p77 = por %p75, %p76
      %p78 = scmp.ne.s32.totalorder %s67, %s68
      %p79 = scmp.eq.s32.totalorder %s19, 0
      %p80 = por %p78, %p79
      %p81 = scmp.ne.s32.totalorder %s67, %s68
      %p82 = scmp.eq.s32.totalorder %s20, 3
      %p83 = por %p81, %p82
      %p85 = scmp.ne.s32.totalorder %s68, %s84
      %p86 = scmp.eq.s32.totalorder %s20, 0
      %p87 = por %p85, %p86
      %s88 = ssub.s32 %s21, %s33
      %s89 = ssub.s32 %s22, %s29
      %s90 = sor.u32 %s88, %s89
      %p91 = scmp.eq.s32.totalorder %s90, 0
      %s93 = sadd.s32 %s92, 1
      %s94 = scalar_select %p91, %s92, %s93
      %p97 = pneg %p91
      %p98 = scmp.eq.s32.totalorder %s14, 3
      %p99 = por %p97, %p98
      %p100 = scmp.ne.s32.totalorder %s92, %s95
      %p101 = scmp.eq.s32.totalorder %s14, 0
      %p102 = por %p100, %p101
      %p103 = scmp.ne.s32.totalorder %s92, %s95
      %p104 = scmp.eq.s32.totalorder %s19, 3
      %p105 = por %p103, %p104
      %p106 = scmp.ne.s32.totalorder %s95, %s96
      %p107 = scmp.eq.s32.totalorder %s19, 0
      %p108 = por %p106, %p107
      %p109 = scmp.ne.s32.totalorder %s95, %s96
      %p110 = scmp.eq.s32.totalorder %s20, 3
      %p111 = por %p109, %p110
      %p113 = scmp.ne.s32.totalorder %s96, %s112
      %p114 = scmp.eq.s32.totalorder %s20, 0
      %p115 = por %p113, %p114
      %s116 = ssub.s32 %s21, %s33
      %s117 = ssub.s32 %s22, %s29
      %s118 = sor.u32 %s116, %s117
      %p119 = scmp.eq.s32.totalorder %s118, 0
      %s121 = sadd.s32 %s120, 1
      %s122 = scalar_select %p119, %s120, %s121
      %p125 = pneg %p119
      %p126 = scmp.eq.s32.totalorder %s14, 3
      %p127 = por %p125, %p126
      %p128 = scmp.ne.s32.totalorder %s120, %s123
      %p129 = scmp.eq.s32.totalorder %s14, 0
      %p130 = por %p128, %p129
      %p131 = scmp.ne.s32.totalorder %s120, %s123
      %p132 = scmp.eq.s32.totalorder %s19, 3
      %p133 = por %p131, %p132
      %p134 = scmp.ne.s32.totalorder %s123, %s124
      %p135 = scmp.eq.s32.totalorder %s19, 0
      %p136 = por %p134, %p135
      %p137 = scmp.ne.s32.totalorder %s123, %s124
      %p138 = scmp.eq.s32.totalorder %s20, 3
      %p139 = por %p137, %p138
      %p141 = scmp.ne.s32.totalorder %s124, %s140
      %p142 = scmp.eq.s32.totalorder %s20, 0
      %p143 = por %p141, %p142
      %s144 = ssub.s32 %s21, %s33
      %s145 = ssub.s32 %s22, %s29
      %s146 = sor.u32 %s144, %s145
      %p147 = scmp.eq.s32.totalorder %s146, 0
      %s149 = sadd.s32 %s148, 1
      %s150 = scalar_select %p147, %s148, %s149
      %p153 = pneg %p147
      %p154 = scmp.eq.s32.totalorder %s14, 3
      %p155 = por %p153, %p154
      %p156 = scmp.ne.s32.totalorder %s148, %s151
      %p157 = scmp.eq.s32.totalorder %s14, 0
      %p158 = por %p156, %p157
      %p159 = scmp.ne.s32.totalorder %s148, %s151
      %p160 = scmp.eq.s32.totalorder %s19, 3
      %p161 = por %p159, %p160
      %p162 = scmp.ne.s32.totalorder %s151, %s152
      %p163 = scmp.eq.s32.totalorder %s19, 0
      %p164 = por %p162, %p163
      %p165 = scmp.ne.s32.totalorder %s151, %s152
      %p166 = scmp.eq.s32.totalorder %s20, 3
      %p167 = por %p165, %p166
      %p169 = scmp.ne.s32.totalorder %s152, %s168
      %p170 = scmp.eq.s32.totalorder %s20, 0
      %p171 = por %p169, %p170
      %p172 = scmp.le.s32.totalorder 1, %s14
      %p173 = scmp.lt.s32.totalorder %s14, 5
      %p174 = pnand %p172, %p173
      %p175 = pneg %p174
      // Predicated region
      $region9: #{_lambda_.11} parent=5 // pred_check
        _
      $region10: #{_lambda_.11} parent=5 // pred_check_branch
        %177 = sbr.rel (%p174) target = $region12
      $region11: #{_lambda_.11} parent=5 // pred_region
        %s178 = ssub.s32 %s14, 1
      $region12: #{_lambda_.11} parent=5 // pred_fallthru
        _
      %p179 = scmp.lt.s32.totalorder %s14, 4
      // Predicated region
      $region13: #{_lambda_.11} parent=5 // pred_check
        %p180 = pneg %p179
      $region14: #{_lambda_.11} parent=5 // pred_check_branch
        %182 = sbr.rel (%p180) target = $region16
      $region15: #{_lambda_.11} parent=5 // pred_region
        // Predicated region
        $region17: #{_lambda_.11} parent=15 // pred_check
          %p183 = pneg %p48
        $region18: #{_lambda_.11} parent=15 // pred_check_branch
          %185 = sbr.rel (%p183) target = $region20
        $region19: #{_lambda_.11} parent=15 // pred_region
          %s186 = smul.u32 4, %s22
          %p187 = scmp.lt.s32.totalorder %s21, 3
          %s188 = scalar_select %p187, %s21, 3
          %p189 = scmp.lt.s32.totalorder %s186, 3
          %s190 = scalar_select %p189, %s186, 3
          %s191 = smul.addr %s190, 2
          %s192 = smul.addr %s188, 8
          %s193 = sadd.s32 %s191, %s192
          %s194 = smul.addr %s193, 4
          %s195 = scalar_lea.vmem %s0, %s194
          %s196 = smul.u32 4, %s22
        $region20: #{_lambda_.11} parent=15 // pred_fallthru
          _
        // Predicated region
        $region21: #{_lambda_.11} parent=15 // pred_check
          %p197 = pneg %p74
        $region22: #{_lambda_.11} parent=15 // pred_check_branch
          %199 = sbr.rel (%p197) target = $region24
        $region23: #{_lambda_.11} parent=15 // pred_region
          %s200 = sand.u32 %s64, 1
          %s201 = scalar_lea.sflag [#allocation3], %s200
          %s202 = sand.u32 %s64, 1
          %s203 = smul.addr %s202, 128
          %s204 = scalar_lea.vmem [#allocation2], %s203
          %s206 = ssub.s32 2048, 2048
          %207 = vsyncadd %s201, %s206
          %s208 = smul.addr %s21, 32
          %s209 = smul.addr %s208, 64
          %s210 = scalar_lea.hbm %s1, %s209
          %s211 = sshll.u32 %s204, 4
          %s212 = int_to_ptr.vmem [resolvable:$true] %s211
          %217 = dma.hbm_to_vmem [thread:$0]  %s210, 2048, %s212, %s201, 64, 64, 4
        $region24: #{_lambda_.11} parent=15 // pred_fallthru
          _
      $region16: #{_lambda_.11} parent=5 // pred_fallthru
        _
      %p218 = scmp.le.s32.totalorder 1, %s14
      %p219 = scmp.lt.s32.totalorder %s14, 5
      %p220 = pnand %p218, %p219
      %p221 = pneg %p220
      // Predicated region
      $region25: #{_lambda_.11} parent=5 // pred_check
        _
      $region26: #{_lambda_.11} parent=5 // pred_check_branch
        %223 = sbr.rel (%p220) target = $region28
      $region27: #{_lambda_.11} parent=5 // pred_region
        %s224 = ssub.s32 %s14, 1
        %s225 = sand.u32 %s67, 1
        %s226 = scalar_lea.sflag [#allocation3], %s225
        %s227 = sand.u32 %s67, 1
        %s228 = smul.addr %s227, 128
        %s229 = scalar_lea.vmem [#allocation2], %s228
        // Predicated region
        $region29: #{_lambda_.11} parent=27 // pred_check
          %p230 = pneg %p80
        $region30: #{_lambda_.11} parent=27 // pred_check_branch
          %232 = sbr.rel (%p230) target = $region32
        $region31: #{_lambda_.11} parent=27 // pred_region
          %233 = dma.done %s226, 2048
        $region32: #{_lambda_.11} parent=27 // pred_fallthru
          _
        %s234 = smul.u32 4, %s24
        %p235 = scmp.lt.s32.totalorder %s23, 3
        %s236 = scalar_select %p235, %s23, 3
        %p237 = scmp.lt.s32.totalorder %s234, 3
        %s238 = scalar_select %p237, %s234, 3
        %s239 = smul.addr %s238, 2
        %s240 = smul.addr %s236, 8
        %s241 = sadd.s32 %s239, %s240
        %s242 = smul.addr %s241, 4
        %s243 = scalar_lea.vmem %s0, %s242
        %p244 = pneg %p54
        %p245 = pneg %p51
        %s246 = sand.u32 %s67, 1
        %s247 = scalar_lea.sflag [#allocation3], %s246
        %s248 = sand.u32 %s67, 1
        %s249 = smul.addr %s248, 128
        %s250 = scalar_lea.vmem [#allocation2], %s249
        %p251 = pneg %p80
        %p252 = pneg %p77
        %p253 = pneg %p108
        %p254 = pneg %p105
        %s255 = smul.u32 4, %s24
        %p256 = scmp.lt.s32.totalorder %s23, 3
        %s257 = scalar_select %p256, %s23, 3
        %p258 = scmp.lt.s32.totalorder %s255, 3
        %s259 = scalar_select %p258, %s255, 3
        %s260 = smul.addr %s257, 4
        %s261 = sadd.s32 %s259, %s260
        %s262 = smul.addr %s261, 8
        %s263 = scalar_lea.vmem %s2, %s262
        %p264 = pneg %p136
        %p265 = pneg %p133
        %p266 = scmp.lt.s32.totalorder %s23, 3
        %s267 = scalar_select %p266, %s23, 3
        %p268 = scmp.lt.s32.totalorder %s24, 0
        %s269 = scalar_select %p268, %s24, 0
        %s270 = sadd.s32 %s269, %s267
        %s271 = scalar_lea.vmem %s3, %s270
        %p272 = pneg %p164
        %p273 = pneg %p161
        %p274 = scmp.lt.s32.totalorder %s23, 3
        %s275 = scalar_select %p274, %s23, 3
        %p276 = scmp.lt.s32.totalorder %s24, 0
        %s277 = scalar_select %p276, %s24, 0
        %s278 = sadd.s32 %s277, %s275
        %s279 = scalar_lea.vmem %s4, %s278
        %s280 = smul.u32 4, %s24
        %p281 = scmp.lt.s32.totalorder %s23, 3
        %s282 = scalar_select %p281, %s23, 3
        %p283 = scmp.lt.s32.totalorder %s280, 3
        %s284 = scalar_select %p283, %s280, 3
        %s285 = smul.addr %s284, 2
        %s286 = smul.addr %s282, 8
        %s287 = sadd.s32 %s285, %s286
        %s288 = smul.addr %s287, 4
        %s289 = scalar_lea.vmem %s0, %s288
        %s290 = smul.u32 4, %s24
        %s291 = smul.u32 4, %s24
        %p292 = scmp.lt.s32.totalorder %s23, 3
        %s293 = scalar_select %p292, %s23, 3
        %p294 = scmp.lt.s32.totalorder %s291, 3
        %s295 = scalar_select %p294, %s291, 3
        %s296 = smul.addr %s293, 4
        %s297 = sadd.s32 %s295, %s296
        %s298 = smul.addr %s297, 8
        %s299 = scalar_lea.vmem %s2, %s298
        %s300 = smul.u32 4, %s24
        %p301 = scmp.lt.s32.totalorder %s23, 3
        %s302 = scalar_select %p301, %s23, 3
        %p303 = scmp.lt.s32.totalorder %s24, 0
        %s304 = scalar_select %p303, %s24, 0
        %s305 = sadd.s32 %s304, %s302
        %s306 = scalar_lea.vmem %s3, %s305
        %p307 = scmp.lt.s32.totalorder %s23, 3
        %s308 = scalar_select %p307, %s23, 3
        %p309 = scmp.lt.s32.totalorder %s24, 0
        %s310 = scalar_select %p309, %s24, 0
        %s311 = sadd.s32 %s310, %s308
        %s312 = scalar_lea.vmem %s4, %s311
        %v314 = vld [vmem:[%s289] sm:$0xff]
        %v315 = vld [vmem:[%s289 + $0x8] sm:$0xff]
        %v316 = vld [vmem:[%s289 + $0x10] sm:$0xff]
        %v317 = vld [vmem:[%s289 + $0x18] sm:$0xff]
        %v318 = vld [vmem:[%s229] sm:$0xf]
        %v319 = vld [vmem:[%s229 + $0x4] sm:$0xf]
        %v320 = vld [vmem:[%s229 + $0x8] sm:$0xf]
        %v321 = vld [vmem:[%s229 + $0xc] sm:$0xf]
        %v322 = vld [vmem:[%s229 + $0x10] sm:$0xf]
        %v323 = vld [vmem:[%s229 + $0x14] sm:$0xf]
        %v324 = vld [vmem:[%s229 + $0x18] sm:$0xf]
        %v325 = vld [vmem:[%s229 + $0x1c] sm:$0xf]
        %v326 = vld [vmem:[%s229 + $0x20] sm:$0xf]
        %v327 = vld [vmem:[%s229 + $0x24] sm:$0xf]
        %v328 = vld [vmem:[%s229 + $0x28] sm:$0xf]
        %v329 = vld [vmem:[%s229 + $0x2c] sm:$0xf]
        %v330 = vld [vmem:[%s229 + $0x30] sm:$0xf]
        %v331 = vld [vmem:[%s229 + $0x34] sm:$0xf]
        %v332 = vld [vmem:[%s229 + $0x38] sm:$0xf]
        %v333 = vld [vmem:[%s229 + $0x3c] sm:$0xf]
        %v334 = vld [vmem:[%s229 + $0x40] sm:$0xf]
        %v335 = vld [vmem:[%s229 + $0x44] sm:$0xf]
        %v336 = vld [vmem:[%s229 + $0x48] sm:$0xf]
        %v337 = vld [vmem:[%s229 + $0x4c] sm:$0xf]
        %v338 = vld [vmem:[%s229 + $0x50] sm:$0xf]
        %v339 = vld [vmem:[%s229 + $0x54] sm:$0xf]
        %v340 = vld [vmem:[%s229 + $0x58] sm:$0xf]
        %v341 = vld [vmem:[%s229 + $0x5c] sm:$0xf]
        %v342 = vld [vmem:[%s229 + $0x60] sm:$0xf]
        %v343 = vld [vmem:[%s229 + $0x64] sm:$0xf]
        %v344 = vld [vmem:[%s229 + $0x68] sm:$0xf]
        %v345 = vld [vmem:[%s229 + $0x6c] sm:$0xf]
        %v346 = vld [vmem:[%s229 + $0x70] sm:$0xf]
        %v347 = vld [vmem:[%s229 + $0x74] sm:$0xf]
        %v348 = vld [vmem:[%s229 + $0x78] sm:$0xf]
        %v349 = vld [vmem:[%s229 + $0x7c] sm:$0xf]
        %v354 = vunpack.c.l.b16 %v314
        %v355 = vunpack.c.h.b16 %v314
        %v356 = vunpack.c.l.b16 %v315
        %v357 = vunpack.c.h.b16 %v315
        %v358 = vunpack.c.l.b16 %v316
        %v359 = vunpack.c.h.b16 %v316
        %v360 = vunpack.c.l.b16 %v317
        %v361 = vunpack.c.h.b16 %v317
        %v362 = vpack.c.b16 %v356, %v354
        %v363 = vpack.c.b16 %v357, %v355
        %v364 = vpack.c.b16 %v360, %v358
        %v365 = vpack.c.b16 %v361, %v359
        %v402 = vunpack.c.l.b16 %v318
        %v403 = vunpack.c.l.b16 %v319
        %v404 = vunpack.c.l.b16 %v320
        %v405 = vunpack.c.l.b16 %v321
        %v406 = vunpack.c.l.b16 %v322
        %v407 = vunpack.c.l.b16 %v323
        %v408 = vunpack.c.l.b16 %v324
        %v409 = vunpack.c.l.b16 %v325
        %v410 = vunpack.c.l.b16 %v326
        %v411 = vunpack.c.l.b16 %v327
        %v412 = vunpack.c.l.b16 %v328
        %v413 = vunpack.c.l.b16 %v329
        %v414 = vunpack.c.l.b16 %v330
        %v415 = vunpack.c.l.b16 %v331
        %v416 = vunpack.c.l.b16 %v332
        %v417 = vunpack.c.l.b16 %v333
        %v418 = vunpack.c.l.b16 %v334
        %v419 = vunpack.c.l.b16 %v335
        %v420 = vunpack.c.l.b16 %v336
        %v421 = vunpack.c.l.b16 %v337
        %v422 = vunpack.c.l.b16 %v338
        %v423 = vunpack.c.l.b16 %v339
        %v424 = vunpack.c.l.b16 %v340
        %v425 = vunpack.c.l.b16 %v341
        %v426 = vunpack.c.l.b16 %v342
        %v427 = vunpack.c.l.b16 %v343
        %v428 = vunpack.c.l.b16 %v344
        %v429 = vunpack.c.l.b16 %v345
        %v430 = vunpack.c.l.b16 %v346
        %v431 = vunpack.c.l.b16 %v347
        %v432 = vunpack.c.l.b16 %v348
        %v433 = vunpack.c.l.b16 %v349
        %v434 = vpack.c.b16 %v403, %v402
        %v435 = vpack.c.b16 %v405, %v404
        %v436 = vpack.c.b16 %v407, %v406
        %v437 = vpack.c.b16 %v409, %v408
        %v438 = vpack.c.b16 %v411, %v410
        %v439 = vpack.c.b16 %v413, %v412
        %v440 = vpack.c.b16 %v415, %v414
        %v441 = vpack.c.b16 %v417, %v416
        %v442 = vpack.c.b16 %v419, %v418
        %v443 = vpack.c.b16 %v421, %v420
        %v444 = vpack.c.b16 %v423, %v422
        %v445 = vpack.c.b16 %v425, %v424
        %v446 = vpack.c.b16 %v427, %v426
        %v447 = vpack.c.b16 %v429, %v428
        %v448 = vpack.c.b16 %v431, %v430
        %v449 = vpack.c.b16 %v433, %v432
        %466 = vmatprep.subr.bf16.mxu0 0
        %467 = vmatpush1.bf16.msra.mxu0 %v434
        %468 = vmatprep.subr.bf16.mxu0 0
        %469 = vmatpush1.bf16.msra.mxu0 %v435
        %470 = vmatprep.subr.bf16.mxu0 0
        %471 = vmatpush1.bf16.msra.mxu0 %v436
        %472 = vmatprep.subr.bf16.mxu0 0
        %473 = vmatpush1.bf16.msra.mxu0 %v437
        %474 = vmatprep.subr.bf16.mxu0 0
        %475 = vmatpush1.bf16.msra.mxu0 %v438
        %476 = vmatprep.subr.bf16.mxu0 0
        %477 = vmatpush1.bf16.msra.mxu0 %v439
        %478 = vmatprep.subr.bf16.mxu0 0
        %479 = vmatpush1.bf16.msra.mxu0 %v440
        %480 = vmatprep.subr.bf16.mxu0 0
        %481 = vmatpush1.bf16.msra.mxu0 %v441
        %482 = vmatprep.subr.bf16.mxu0 0
        %483 = vmatpush1.bf16.msra.mxu0 %v442
        %484 = vmatprep.subr.bf16.mxu0 0
        %485 = vmatpush1.bf16.msra.mxu0 %v443
        %486 = vmatprep.subr.bf16.mxu0 0
        %487 = vmatpush1.bf16.msra.mxu0 %v444
        %488 = vmatprep.subr.bf16.mxu0 0
        %489 = vmatpush1.bf16.msra.mxu0 %v445
        %490 = vmatprep.subr.bf16.mxu0 0
        %491 = vmatpush1.bf16.msra.mxu0 %v446
        %492 = vmatprep.subr.bf16.mxu0 0
        %493 = vmatpush1.bf16.msra.mxu0 %v447
        %494 = vmatprep.subr.bf16.mxu0 0
        %495 = vmatpush1.bf16.msra.mxu0 %v448
        %496 = vmatprep.subr.bf16.mxu0 0
        %497 = vmatpush1.bf16.msra.mxu0 %v449
        %498 = vmatprep.mubr.bf16.mxu0 %v363
        %499 = vmatmul.mubr.bf16.gmra.mrb[0].mxu0 %v362
        %v500 = vpop.f32.mrb[0].mxu0
        %v501 = vadd.f32 0.0, %v500
        %v502 = vpop.f32.mrb[0].mxu0
        %v503 = vpop.f32.mrb[0].mxu0
        %v504 = vadd.f32 0.0, %v503
        %v505 = vpop.f32.mrb[0].mxu0
        %506 = vmatprep.mubr.bf16.mxu0 %v365
        %507 = vmatmul.mubr.bf16.gmra.mrb[0].mxu0 %v364
        %v508 = vpop.f32.mrb[0].mxu0
        %v509 = vadd.f32 0.0, %v508
        %v510 = vpop.f32.mrb[0].mxu0
        %v511 = vpop.f32.mrb[0].mxu0
        %v512 = vadd.f32 0.0, %v511
        %v513 = vpop.f32.mrb[0].mxu0
        %514 = vdwg.mxu0
        %515 = vst [vmem:[%s299] sm:$0xff] %v501
        %516 = vst [vmem:[%s299 + $0x8] sm:$0xff] %v504
        %517 = vst [vmem:[%s299 + $0x10] sm:$0xff] %v509
        %518 = vst [vmem:[%s299 + $0x18] sm:$0xff] %v512
        %v519 = vadd.f32 %v501, %v504
        %v520 = vadd.f32 %v519, %v509
        %v521 = vadd.f32 %v520, %v512
        %v522 = vrot.slane %v521, 4
        %v523 = vadd.f32 %v521, %v522
        %v524 = vrot.slane %v523, 2
        %v525 = vadd.f32 %v523, %v524
        %v526 = vrot.slane %v525, 1
        %v527 = vadd.f32 %v525, %v526
        %528 = vst [vmem:[%s306] sm:$0x1] %v527
        %v529 = vmul.f32 %v501, %v501
        %v530 = vmul.f32 %v504, %v504
        %v531 = vmul.f32 %v509, %v509
        %v532 = vmul.f32 %v512, %v512
        %v533 = vadd.f32 %v529, %v530
        %v534 = vadd.f32 %v533, %v531
        %v535 = vadd.f32 %v534, %v532
        %v536 = vrot.slane %v535, 4
        %v537 = vadd.f32 %v535, %v536
        %v538 = vrot.slane %v537, 2
        %v539 = vadd.f32 %v537, %v538
        %v540 = vrot.slane %v539, 1
        %v541 = vadd.f32 %v539, %v540
        %542 = vst [vmem:[%s312] sm:$0x1] %v541
        %s543 = smul.u32 4, %s24
        %p544 = scmp.lt.s32.totalorder %s23, 3
        %s545 = scalar_select %p544, %s23, 3
        %p546 = scmp.lt.s32.totalorder %s543, 3
        %s547 = scalar_select %p546, %s543, 3
        %s548 = smul.addr %s545, 4
        %s549 = sadd.s32 %s547, %s548
        %s550 = smul.addr %s549, 8
        %s551 = scalar_lea.vmem %s2, %s550
        %p552 = scmp.lt.s32.totalorder %s23, 3
        %s553 = scalar_select %p552, %s23, 3
        %p554 = scmp.lt.s32.totalorder %s24, 0
        %s555 = scalar_select %p554, %s24, 0
        %s556 = sadd.s32 %s555, %s553
        %s557 = scalar_lea.vmem %s3, %s556
        %p558 = scmp.lt.s32.totalorder %s23, 3
        %s559 = scalar_select %p558, %s23, 3
        %p560 = scmp.lt.s32.totalorder %s24, 0
        %s561 = scalar_select %p560, %s24, 0
        %s562 = sadd.s32 %s561, %s559
        %s563 = scalar_lea.vmem %s4, %s562
        // Predicated region
        $region33: #{_lambda_.11} parent=27 // pred_check
          %p564 = pneg %p105
        $region34: #{_lambda_.11} parent=27 // pred_check_branch
          %566 = sbr.rel (%p564) target = $region36
        $region35: #{_lambda_.11} parent=27 // pred_region
          %s567 = smul.u32 4, %s24
        $region36: #{_lambda_.11} parent=27 // pred_fallthru
          _
        // Predicated region
        $region37: #{_lambda_.11} parent=27 // pred_check
          %p568 = pneg %p133
        $region38: #{_lambda_.11} parent=27 // pred_check_branch
          %570 = sbr.rel (%p568) target = $region40
        $region39: #{_lambda_.11} parent=27 // pred_region
          _
        $region40: #{_lambda_.11} parent=27 // pred_fallthru
          _
        // Predicated region
        $region41: #{_lambda_.11} parent=27 // pred_check
          %p571 = pneg %p161
        $region42: #{_lambda_.11} parent=27 // pred_check_branch
          %573 = sbr.rel (%p571) target = $region44
        $region43: #{_lambda_.11} parent=27 // pred_region
          _
        $region44: #{_lambda_.11} parent=27 // pred_fallthru
          _
      $region28: #{_lambda_.11} parent=5 // pred_fallthru
        _
      %p574 = scmp.le.s32.totalorder 2, %s14
      // Predicated region
      $region45: #{_lambda_.11} parent=5 // pred_check
        %p575 = pneg %p574
      $region46: #{_lambda_.11} parent=5 // pred_check_branch
        %577 = sbr.rel (%p575) target = $region48
      $region47: #{_lambda_.11} parent=5 // pred_region
        %s578 = ssub.s32 %s14, 2
        // Predicated region
        $region49: #{_lambda_.11} parent=47 // pred_check
          %p579 = pneg %p111
        $region50: #{_lambda_.11} parent=47 // pred_check_branch
          %581 = sbr.rel (%p579) target = $region52
        $region51: #{_lambda_.11} parent=47 // pred_region
          %s582 = smul.u32 4, %s26
          %p583 = scmp.lt.s32.totalorder %s25, 3
          %s584 = scalar_select %p583, %s25, 3
          %p585 = scmp.lt.s32.totalorder %s582, 3
          %s586 = scalar_select %p585, %s582, 3
          %s587 = smul.addr %s584, 4
          %s588 = sadd.s32 %s586, %s587
          %s589 = smul.addr %s588, 8
          %s590 = scalar_lea.vmem %s2, %s589
        $region52: #{_lambda_.11} parent=47 // pred_fallthru
          _
        // Predicated region
        $region53: #{_lambda_.11} parent=47 // pred_check
          %p591 = pneg %p139
        $region54: #{_lambda_.11} parent=47 // pred_check_branch
          %593 = sbr.rel (%p591) target = $region56
        $region55: #{_lambda_.11} parent=47 // pred_region
          %p594 = scmp.lt.s32.totalorder %s25, 3
          %s595 = scalar_select %p594, %s25, 3
          %p596 = scmp.lt.s32.totalorder %s26, 0
          %s597 = scalar_select %p596, %s26, 0
          %s598 = sadd.s32 %s597, %s595
          %s599 = scalar_lea.vmem %s3, %s598
        $region56: #{_lambda_.11} parent=47 // pred_fallthru
          _
        // Predicated region
        $region57: #{_lambda_.11} parent=47 // pred_check
          %p600 = pneg %p167
        $region58: #{_lambda_.11} parent=47 // pred_check_branch
          %602 = sbr.rel (%p600) target = $region60
        $region59: #{_lambda_.11} parent=47 // pred_region
          %p603 = scmp.lt.s32.totalorder %s25, 3
          %s604 = scalar_select %p603, %s25, 3
          %p605 = scmp.lt.s32.totalorder %s26, 0
          %s606 = scalar_select %p605, %s26, 0
          %s607 = sadd.s32 %s606, %s604
          %s608 = scalar_lea.vmem %s4, %s607
        $region60: #{_lambda_.11} parent=47 // pred_fallthru
          _
      $region48: #{_lambda_.11} parent=5 // pred_fallthru
        _
    $region6: #{_lambda_.11} parent=1 // loop_footer
      %s18 = sadd.s32 1, %s14
    $region7: #{_lambda_.11} parent=1 // loop_footer_branch
      %13 = sbr.rel target = $region3
    $region8: #{_lambda_.11} parent=1 // loop_exit
      _
    %609 = vsyncpa [#allocation3], 1
    %s610 = scalar_lea.sflag [#allocation3], 1
    %611 = vsyncpa %s610, 1

// kernel: _lambda_.12
$region0: #{_lambda_.12}
  #allocation0 [shape = 'u32[]', space=smem, size = 0x4, offset = 0x4, fixed_abs, tag = 'smem constant byte address 0x4 - core index']
  #allocation1 [shape = 'u32[144,128]{1,0:T(1,128)}', space=vmem, size = 0x12000, scoped, tag = 'internal scratch']
  %s0 = inlined_call_operand.vmem [shape: f32[4,32,128], index: 0, kind: input, shape index: {}]
  %s1 = inlined_call_operand.vmem [shape: f32[1,128], index: 1, kind: input, shape index: {}]
  %s2 = inlined_call_operand.vmem [shape: f32[1,128], index: 2, kind: input, shape index: {}]
  %s3 = inlined_call_operand.vmem [shape: bf16[4,32,128], index: 3, kind: output, shape index: {}]
  %s4 = sld [smem:[#allocation0]]
  $region45: #{_lambda_.12} parent=0
    _
  %s6 = ssub.s32 1, %s4
  %s7 = scalar_select 0, %s6, %s4
  loop: start=0, step=1, limit=6
  $region2: #{_lambda_.12} parent=0 // loop_pre_header
    _
  $region3: #{_lambda_.12} parent=0 // loop_header
    %s9 = sphi 0, %s13
    %p10 = scmp.ge.s32.totalorder %s9, 6
    %s16 = sphi 0, %s28
    %s17 = sphi 0, %s24
    %s18 = sphi 0, %s16
    %s19 = sphi 0, %s17
    %s20 = sphi 0, %s18
    %s21 = sphi 0, %s19
    %s33 = sphi 0, %s35
    %s36 = sphi 0, %s33
    %s37 = sphi 0, %s36
    %s53 = sphi 0, %s37
    %s57 = sphi 0, %s57
    %s59 = sphi 0, %s57
    %s60 = sphi 0, %s59
    %s74 = sphi 0, %s60
    %s78 = sphi 0, %s78
    %s80 = sphi 0, %s78
    %s81 = sphi 0, %s80
    %s95 = sphi 0, %s81
    %s103 = sphi 0, %s105
    %s106 = sphi 0, %s103
    %s107 = sphi 0, %s106
    %s123 = sphi 0, %s107
  $region4: #{_lambda_.12} parent=0 // loop_header_branch
    %12 = sbr.rel (%p10) target = $region8
  $region5: #{_lambda_.12} parent=0 // loop_body
    %s14 = ssub.s32 %s9, 1
    %s15 = ssub.s32 %s9, 2
    %s22 = sadd.s32 1, %s17
    %p23 = scmp.ge.s32.totalorder %s22, 1
    %s24 = scalar_select %p23, 0, %s22
    %s25 = sadd.s32 1, %s16
    %s26 = scalar_select %p23, %s25, %s16
    %p27 = scmp.ge.s32.totalorder %s26, 4
    %s28 = scalar_select %p27, 0, %s26
    %s29 = ssub.s32 %s16, %s28
    %s30 = ssub.s32 %s17, %s24
    %s31 = sor.u32 %s29, %s30
    %p32 = scmp.eq.s32.totalorder %s31, 0
    %s34 = sadd.s32 %s33, 1
    %s35 = scalar_select %p32, %s33, %s34
    %p38 = pneg %p32
    %p39 = scmp.eq.s32.totalorder %s9, 3
    %p40 = por %p38, %p39
    %p41 = scmp.ne.s32.totalorder %s33, %s36
    %p42 = scmp.eq.s32.totalorder %s9, 0
    %p43 = por %p41, %p42
    %p44 = scmp.ne.s32.totalorder %s33, %s36
    %p45 = scmp.eq.s32.totalorder %s14, 3
    %p46 = por %p44, %p45
    %p47 = scmp.ne.s32.totalorder %s36, %s37
    %p48 = scmp.eq.s32.totalorder %s14, 0
    %p49 = por %p47, %p48
    %p50 = scmp.ne.s32.totalorder %s36, %s37
    %p51 = scmp.eq.s32.totalorder %s15, 3
    %p52 = por %p50, %p51
    %p54 = scmp.ne.s32.totalorder %s37, %s53
    %p55 = scmp.eq.s32.totalorder %s15, 0
    %p56 = por %p54, %p55
    %s58 = sadd.s32 %s57, 1
    %p61 = scmp.eq.s32.totalorder %s9, 3
    %p62 = scmp.ne.s32.totalorder %s57, %s59
    %p63 = scmp.eq.s32.totalorder %s9, 0
    %p64 = por %p62, %p63
    %p65 = scmp.ne.s32.totalorder %s57, %s59
    %p66 = scmp.eq.s32.totalorder %s14, 3
    %p67 = por %p65, %p66
    %p68 = scmp.ne.s32.totalorder %s59, %s60
    %p69 = scmp.eq.s32.totalorder %s14, 0
    %p70 = por %p68, %p69
    %p71 = scmp.ne.s32.totalorder %s59, %s60
    %p72 = scmp.eq.s32.totalorder %s15, 3
    %p73 = por %p71, %p72
    %p75 = scmp.ne.s32.totalorder %s60, %s74
    %p76 = scmp.eq.s32.totalorder %s15, 0
    %p77 = por %p75, %p76
    %s79 = sadd.s32 %s78, 1
    %p82 = scmp.eq.s32.totalorder %s9, 3
    %p83 = scmp.ne.s32.totalorder %s78, %s80
    %p84 = scmp.eq.s32.totalorder %s9, 0
    %p85 = por %p83, %p84
    %p86 = scmp.ne.s32.totalorder %s78, %s80
    %p87 = scmp.eq.s32.totalorder %s14, 3
    %p88 = por %p86, %p87
    %p89 = scmp.ne.s32.totalorder %s80, %s81
    %p90 = scmp.eq.s32.totalorder %s14, 0
    %p91 = por %p89, %p90
    %p92 = scmp.ne.s32.totalorder %s80, %s81
    %p93 = scmp.eq.s32.totalorder %s15, 3
    %p94 = por %p92, %p93
    %p96 = scmp.ne.s32.totalorder %s81, %s95
    %p97 = scmp.eq.s32.totalorder %s15, 0
    %p98 = por %p96, %p97
    %s99 = ssub.s32 %s16, %s28
    %s100 = ssub.s32 %s17, %s24
    %s101 = sor.u32 %s99, %s100
    %p102 = scmp.eq.s32.totalorder %s101, 0
    %s104 = sadd.s32 %s103, 1
    %s105 = scalar_select %p102, %s103, %s104
    %p108 = pneg %p102
    %p109 = scmp.eq.s32.totalorder %s9, 3
    %p110 = por %p108, %p109
    %p111 = scmp.ne.s32.totalorder %s103, %s106
    %p112 = scmp.eq.s32.totalorder %s9, 0
    %p113 = por %p111, %p112
    %p114 = scmp.ne.s32.totalorder %s103, %s106
    %p115 = scmp.eq.s32.totalorder %s14, 3
    %p116 = por %p114, %p115
    %p117 = scmp.ne.s32.totalorder %s106, %s107
    %p118 = scmp.eq.s32.totalorder %s14, 0
    %p119 = por %p117, %p118
    %p120 = scmp.ne.s32.totalorder %s106, %s107
    %p121 = scmp.eq.s32.totalorder %s15, 3
    %p122 = por %p120, %p121
    %p124 = scmp.ne.s32.totalorder %s107, %s123
    %p125 = scmp.eq.s32.totalorder %s15, 0
    %p126 = por %p124, %p125
    %p127 = scmp.le.s32.totalorder 1, %s9
    %p128 = scmp.lt.s32.totalorder %s9, 5
    %p129 = pnand %p127, %p128
    %p130 = pneg %p129
    // Predicated region
    $region9: #{_lambda_.12} parent=5 // pred_check
      _
    $region10: #{_lambda_.12} parent=5 // pred_check_branch
      %132 = sbr.rel (%p129) target = $region12
    $region11: #{_lambda_.12} parent=5 // pred_region
      %s133 = ssub.s32 %s9, 1
      // Predicated region
      $region13: #{_lambda_.12} parent=11 // pred_check
        %p134 = pneg %p70
      $region14: #{_lambda_.12} parent=11 // pred_check_branch
        %136 = sbr.rel (%p134) target = $region16
      $region15: #{_lambda_.12} parent=11 // pred_region
        _
      $region16: #{_lambda_.12} parent=11 // pred_fallthru
        _
      // Predicated region
      $region17: #{_lambda_.12} parent=11 // pred_check
        %p137 = pneg %p91
      $region18: #{_lambda_.12} parent=11 // pred_check_branch
        %139 = sbr.rel (%p137) target = $region20
      $region19: #{_lambda_.12} parent=11 // pred_region
        _
      $region20: #{_lambda_.12} parent=11 // pred_fallthru
        _
    $region12: #{_lambda_.12} parent=5 // pred_fallthru
      _
    %p140 = scmp.lt.s32.totalorder %s9, 4
    // Predicated region
    $region21: #{_lambda_.12} parent=5 // pred_check
      %p141 = pneg %p140
    $region22: #{_lambda_.12} parent=5 // pred_check_branch
      %143 = sbr.rel (%p141) target = $region24
    $region23: #{_lambda_.12} parent=5 // pred_region
      // Predicated region
      $region25: #{_lambda_.12} parent=23 // pred_check
        %p144 = pneg %p43
      $region26: #{_lambda_.12} parent=23 // pred_check_branch
        %146 = sbr.rel (%p144) target = $region28
      $region27: #{_lambda_.12} parent=23 // pred_region
        %s147 = smul.u32 4, %s17
        %p148 = scmp.lt.s32.totalorder %s16, 3
        %s149 = scalar_select %p148, %s16, 3
        %p150 = scmp.lt.s32.totalorder %s147, 3
        %s151 = scalar_select %p150, %s147, 3
        %s152 = smul.addr %s149, 4
        %s153 = sadd.s32 %s151, %s152
        %s154 = smul.addr %s153, 8
        %s155 = scalar_lea.vmem %s0, %s154
        %s156 = smul.u32 4, %s17
      $region28: #{_lambda_.12} parent=23 // pred_fallthru
        _
    $region24: #{_lambda_.12} parent=5 // pred_fallthru
      _
    %p157 = scmp.le.s32.totalorder 1, %s9
    %p158 = scmp.lt.s32.totalorder %s9, 5
    %p159 = pnand %p157, %p158
    %p160 = pneg %p159
    // Predicated region
    $region29: #{_lambda_.12} parent=5 // pred_check
      _
    $region30: #{_lambda_.12} parent=5 // pred_check_branch
      %162 = sbr.rel (%p159) target = $region32
    $region31: #{_lambda_.12} parent=5 // pred_region
      %s163 = ssub.s32 %s9, 1
      %s164 = smul.u32 4, %s19
      %p165 = scmp.lt.s32.totalorder %s18, 3
      %s166 = scalar_select %p165, %s18, 3
      %p167 = scmp.lt.s32.totalorder %s164, 3
      %s168 = scalar_select %p167, %s164, 3
      %s169 = smul.addr %s166, 4
      %s170 = sadd.s32 %s168, %s169
      %s171 = smul.addr %s170, 8
      %s172 = scalar_lea.vmem %s0, %s171
      %p173 = pneg %p49
      %p174 = pneg %p46
      %p175 = pneg %p70
      %p176 = pneg %p67
      %p177 = pneg %p91
      %p178 = pneg %p88
      %p179 = pneg %p119
      %p180 = pneg %p116
      %s181 = smul.u32 4, %s19
      %p182 = scmp.lt.s32.totalorder %s18, 3
      %s183 = scalar_select %p182, %s18, 3
      %p184 = scmp.lt.s32.totalorder %s181, 3
      %s185 = scalar_select %p184, %s181, 3
      %s186 = smul.addr %s183, 4
      %s187 = sadd.s32 %s185, %s186
      %s188 = smul.addr %s187, 4
      %s189 = scalar_lea.vmem %s3, %s188
      %s190 = smul.u32 4, %s19
      %p191 = scmp.lt.s32.totalorder %s18, 3
      %s192 = scalar_select %p191, %s18, 3
      %p193 = scmp.lt.s32.totalorder %s190, 3
      %s194 = scalar_select %p193, %s190, 3
      %s195 = smul.addr %s192, 4
      %s196 = sadd.s32 %s194, %s195
      %s197 = smul.addr %s196, 8
      %s198 = scalar_lea.vmem %s0, %s197
      %s199 = smul.u32 4, %s19
      %s200 = smul.u32 4, %s19
      %p201 = scmp.lt.s32.totalorder %s18, 3
      %s202 = scalar_select %p201, %s18, 3
      %p203 = scmp.lt.s32.totalorder %s200, 3
      %s204 = scalar_select %p203, %s200, 3
      %s205 = smul.addr %s202, 4
      %s206 = sadd.s32 %s204, %s205
      %s207 = smul.addr %s206, 4
      %s208 = scalar_lea.vmem %s3, %s207
      %s209 = smul.u32 4, %s19
      %v210 = vld [vmem:[%s198] sm:$0xff]
      %v211 = vld [vmem:[%s198 + $0x8] sm:$0xff]
      %v212 = vld [vmem:[%s198 + $0x10] sm:$0xff]
      %v213 = vld [vmem:[%s198 + $0x18] sm:$0xff]
      %v214 = vld [vmem:[%s1] sm:$0x1]
      %v216 = vlaneseq
      %v217 = vshrl.u32 %v216, 7
      %v218 = vsub.s32 0, %v217
      %v219 = vrot.slane %v214, %v218
      %v221 = vmul.f32 %v210, %v219
      %v222 = vmul.f32 %v211, %v219
      %v223 = vmul.f32 %v212, %v219
      %v224 = vmul.f32 %v213, %v219
      %v225 = vld [vmem:[%s2] sm:$0x1]
      %v227 = vlaneseq
      %v228 = vshrl.u32 %v227, 7
      %v229 = vsub.s32 0, %v228
      %v230 = vrot.slane %v225, %v229
      %v232 = vadd.f32 %v221, %v230
      %v233 = vadd.f32 %v222, %v230
      %v234 = vadd.f32 %v223, %v230
      %v235 = vadd.f32 %v224, %v230
      %v236 = vmax.f32 %v232, 0.0
      %v237 = vmax.f32 %v233, 0.0
      %v238 = vmax.f32 %v234, 0.0
      %v239 = vmax.f32 %v235, 0.0
      %v240 = vpack.c.bf16 %v237, %v236
      %v241 = vpack.c.bf16 %v239, %v238
      %v244 = vunpack.c.l.b16 %v240
      %v245 = vunpack.c.h.b16 %v240
      %v246 = vunpack.c.l.b16 %v241
      %v247 = vunpack.c.h.b16 %v241
      %v248 = vpack.c.b16 %v244, %v244
      %v249 = vpack.c.b16 %v245, %v245
      %v250 = vpack.c.b16 %v246, %v246
      %v251 = vpack.c.b16 %v247, %v247
      %256 = vst [vmem:[%s208] sm:$0xf] %v248
      %257 = vst [vmem:[%s208 + $0x4] sm:$0xf] %v249
      %258 = vst [vmem:[%s208 + $0x8] sm:$0xf] %v250
      %259 = vst [vmem:[%s208 + $0xc] sm:$0xf] %v251
      %s260 = smul.u32 4, %s19
      %p261 = scmp.lt.s32.totalorder %s18, 3
      %s262 = scalar_select %p261, %s18, 3
      %p263 = scmp.lt.s32.totalorder %s260, 3
      %s264 = scalar_select %p263, %s260, 3
      %s265 = smul.addr %s262, 4
      %s266 = sadd.s32 %s264, %s265
      %s267 = smul.addr %s266, 4
      %s268 = scalar_lea.vmem %s3, %s267
      // Predicated region
      $region33: #{_lambda_.12} parent=31 // pred_check
        %p269 = pneg %p116
      $region34: #{_lambda_.12} parent=31 // pred_check_branch
        %271 = sbr.rel (%p269) target = $region36
      $region35: #{_lambda_.12} parent=31 // pred_region
        %s272 = smul.u32 4, %s19
      $region36: #{_lambda_.12} parent=31 // pred_fallthru
        _
    $region32: #{_lambda_.12} parent=5 // pred_fallthru
      _
    %p273 = scmp.le.s32.totalorder 2, %s9
    // Predicated region
    $region37: #{_lambda_.12} parent=5 // pred_check
      %p274 = pneg %p273
    $region38: #{_lambda_.12} parent=5 // pred_check_branch
      %276 = sbr.rel (%p274) target = $region40
    $region39: #{_lambda_.12} parent=5 // pred_region
      %s277 = ssub.s32 %s9, 2
      // Predicated region
      $region41: #{_lambda_.12} parent=39 // pred_check
        %p278 = pneg %p122
      $region42: #{_lambda_.12} parent=39 // pred_check_branch
        %280 = sbr.rel (%p278) target = $region44
      $region43: #{_lambda_.12} parent=39 // pred_region
        %s281 = smul.u32 4, %s21
        %p282 = scmp.lt.s32.totalorder %s20, 3
        %s283 = scalar_select %p282, %s20, 3
        %p284 = scmp.lt.s32.totalorder %s281, 3
        %s285 = scalar_select %p284, %s281, 3
        %s286 = smul.addr %s283, 4
        %s287 = sadd.s32 %s285, %s286
        %s288 = smul.addr %s287, 4
        %s289 = scalar_lea.vmem %s3, %s288
      $region44: #{_lambda_.12} parent=39 // pred_fallthru
        _
    $region40: #{_lambda_.12} parent=5 // pred_fallthru
      _
  $region6: #{_lambda_.12} parent=0 // loop_footer
    %s13 = sadd.s32 1, %s9
  $region7: #{_lambda_.12} parent=0 // loop_footer_branch
    %8 = sbr.rel target = $region3
  $region8: #{_lambda_.12} parent=0 // loop_exit
    _

// kernel: _lambda_.13
$region0: #{_lambda_.13}
  #allocation0 [shape = 'u32[]', space=smem, size = 0x4, offset = 0x4, fixed_abs, tag = 'smem constant byte address 0x4 - core index']
  #allocation1 [shape = 'u32[144,128]{1,0:T(1,128)}', space=vmem, size = 0x12000, scoped, tag = 'internal scratch']
  %s0 = inlined_call_operand.vmem [shape: bf16[4,128,128], index: 0, kind: input, shape index: {}]
  %s1 = inlined_call_operand.vmem [shape: bf16[4,128,128], index: 1, kind: input, shape index: {}]
  %s2 = inlined_call_operand.vmem [shape: f32[4,128,128], index: 2, kind: output, shape index: {0}]
  %s3 = inlined_call_operand.vmem [shape: f32[4,1,1,128], index: 3, kind: output, shape index: {1}]
  %s4 = inlined_call_operand.vmem [shape: f32[4,1,1,128], index: 4, kind: output, shape index: {2}]
  %5 = xla_tuple %s2, %s3, %s4
  %s6 = sld [smem:[#allocation0]]
  $region57: #{_lambda_.13} parent=0
    _
  %s8 = ssub.s32 1, %s6
  %s9 = scalar_select 0, %s8, %s6
  loop: start=0, step=1, limit=6
  $region2: #{_lambda_.13} parent=0 // loop_pre_header
    _
  $region3: #{_lambda_.13} parent=0 // loop_header
    %s11 = sphi 0, %s15
    %p12 = scmp.ge.s32.totalorder %s11, 6
    %s18 = sphi 0, %s30
    %s19 = sphi 0, %s26
    %s20 = sphi 0, %s18
    %s21 = sphi 0, %s19
    %s22 = sphi 0, %s20
    %s23 = sphi 0, %s21
    %s35 = sphi 0, %s37
    %s38 = sphi 0, %s35
    %s39 = sphi 0, %s38
    %s55 = sphi 0, %s39
    %s61 = sphi 0, %s63
    %s64 = sphi 0, %s61
    %s65 = sphi 0, %s64
    %s81 = sphi 0, %s65
    %s89 = sphi 0, %s91
    %s92 = sphi 0, %s89
    %s93 = sphi 0, %s92
    %s109 = sphi 0, %s93
    %s117 = sphi 0, %s119
    %s120 = sphi 0, %s117
    %s121 = sphi 0, %s120
    %s137 = sphi 0, %s121
    %s145 = sphi 0, %s147
    %s148 = sphi 0, %s145
    %s149 = sphi 0, %s148
    %s165 = sphi 0, %s149
  $region4: #{_lambda_.13} parent=0 // loop_header_branch
    %14 = sbr.rel (%p12) target = $region8
  $region5: #{_lambda_.13} parent=0 // loop_body
    %s16 = ssub.s32 %s11, 1
    %s17 = ssub.s32 %s11, 2
    %s24 = sadd.s32 1, %s19
    %p25 = scmp.ge.s32.totalorder %s24, 1
    %s26 = scalar_select %p25, 0, %s24
    %s27 = sadd.s32 1, %s18
    %s28 = scalar_select %p25, %s27, %s18
    %p29 = scmp.ge.s32.totalorder %s28, 4
    %s30 = scalar_select %p29, 0, %s28
    %s31 = ssub.s32 %s18, %s30
    %s32 = ssub.s32 %s19, %s26
    %s33 = sor.u32 %s31, %s32
    %p34 = scmp.eq.s32.totalorder %s33, 0
    %s36 = sadd.s32 %s35, 1
    %s37 = scalar_select %p34, %s35, %s36
    %p40 = pneg %p34
    %p41 = scmp.eq.s32.totalorder %s11, 3
    %p42 = por %p40, %p41
    %p43 = scmp.ne.s32.totalorder %s35, %s38
    %p44 = scmp.eq.s32.totalorder %s11, 0
    %p45 = por %p43, %p44
    %p46 = scmp.ne.s32.totalorder %s35, %s38
    %p47 = scmp.eq.s32.totalorder %s16, 3
    %p48 = por %p46, %p47
    %p49 = scmp.ne.s32.totalorder %s38, %s39
    %p50 = scmp.eq.s32.totalorder %s16, 0
    %p51 = por %p49, %p50
    %p52 = scmp.ne.s32.totalorder %s38, %s39
    %p53 = scmp.eq.s32.totalorder %s17, 3
    %p54 = por %p52, %p53
    %p56 = scmp.ne.s32.totalorder %s39, %s55
    %p57 = scmp.eq.s32.totalorder %s17, 0
    %p58 = por %p56, %p57
    %s59 = ssub.s32 %s18, %s30
    %p60 = scmp.eq.s32.totalorder %s59, 0
    %s62 = sadd.s32 %s61, 1
    %s63 = scalar_select %p60, %s61, %s62
    %p66 = pneg %p60
    %p67 = scmp.eq.s32.totalorder %s11, 3
    %p68 = por %p66, %p67
    %p69 = scmp.ne.s32.totalorder %s61, %s64
    %p70 = scmp.eq.s32.totalorder %s11, 0
    %p71 = por %p69, %p70
    %p72 = scmp.ne.s32.totalorder %s61, %s64
    %p73 = scmp.eq.s32.totalorder %s16, 3
    %p74 = por %p72, %p73
    %p75 = scmp.ne.s32.totalorder %s64, %s65
    %p76 = scmp.eq.s32.totalorder %s16, 0
    %p77 = por %p75, %p76
    %p78 = scmp.ne.s32.totalorder %s64, %s65
    %p79 = scmp.eq.s32.totalorder %s17, 3
    %p80 = por %p78, %p79
    %p82 = scmp.ne.s32.totalorder %s65, %s81
    %p83 = scmp.eq.s32.totalorder %s17, 0
    %p84 = por %p82, %p83
    %s85 = ssub.s32 %s18, %s30
    %s86 = ssub.s32 %s19, %s26
    %s87 = sor.u32 %s85, %s86
    %p88 = scmp.eq.s32.totalorder %s87, 0
    %s90 = sadd.s32 %s89, 1
    %s91 = scalar_select %p88, %s89, %s90
    %p94 = pneg %p88
    %p95 = scmp.eq.s32.totalorder %s11, 3
    %p96 = por %p94, %p95
    %p97 = scmp.ne.s32.totalorder %s89, %s92
    %p98 = scmp.eq.s32.totalorder %s11, 0
    %p99 = por %p97, %p98
    %p100 = scmp.ne.s32.totalorder %s89, %s92
    %p101 = scmp.eq.s32.totalorder %s16, 3
    %p102 = por %p100, %p101
    %p103 = scmp.ne.s32.totalorder %s92, %s93
    %p104 = scmp.eq.s32.totalorder %s16, 0
    %p105 = por %p103, %p104
    %p106 = scmp.ne.s32.totalorder %s92, %s93
    %p107 = scmp.eq.s32.totalorder %s17, 3
    %p108 = por %p106, %p107
    %p110 = scmp.ne.s32.totalorder %s93, %s109
    %p111 = scmp.eq.s32.totalorder %s17, 0
    %p112 = por %p110, %p111
    %s113 = ssub.s32 %s18, %s30
    %s114 = ssub.s32 %s19, %s26
    %s115 = sor.u32 %s113, %s114
    %p116 = scmp.eq.s32.totalorder %s115, 0
    %s118 = sadd.s32 %s117, 1
    %s119 = scalar_select %p116, %s117, %s118
    %p122 = pneg %p116
    %p123 = scmp.eq.s32.totalorder %s11, 3
    %p124 = por %p122, %p123
    %p125 = scmp.ne.s32.totalorder %s117, %s120
    %p126 = scmp.eq.s32.totalorder %s11, 0
    %p127 = por %p125, %p126
    %p128 = scmp.ne.s32.totalorder %s117, %s120
    %p129 = scmp.eq.s32.totalorder %s16, 3
    %p130 = por %p128, %p129
    %p131 = scmp.ne.s32.totalorder %s120, %s121
    %p132 = scmp.eq.s32.totalorder %s16, 0
    %p133 = por %p131, %p132
    %p134 = scmp.ne.s32.totalorder %s120, %s121
    %p135 = scmp.eq.s32.totalorder %s17, 3
    %p136 = por %p134, %p135
    %p138 = scmp.ne.s32.totalorder %s121, %s137
    %p139 = scmp.eq.s32.totalorder %s17, 0
    %p140 = por %p138, %p139
    %s141 = ssub.s32 %s18, %s30
    %s142 = ssub.s32 %s19, %s26
    %s143 = sor.u32 %s141, %s142
    %p144 = scmp.eq.s32.totalorder %s143, 0
    %s146 = sadd.s32 %s145, 1
    %s147 = scalar_select %p144, %s145, %s146
    %p150 = pneg %p144
    %p151 = scmp.eq.s32.totalorder %s11, 3
    %p152 = por %p150, %p151
    %p153 = scmp.ne.s32.totalorder %s145, %s148
    %p154 = scmp.eq.s32.totalorder %s11, 0
    %p155 = por %p153, %p154
    %p156 = scmp.ne.s32.totalorder %s145, %s148
    %p157 = scmp.eq.s32.totalorder %s16, 3
    %p158 = por %p156, %p157
    %p159 = scmp.ne.s32.totalorder %s148, %s149
    %p160 = scmp.eq.s32.totalorder %s16, 0
    %p161 = por %p159, %p160
    %p162 = scmp.ne.s32.totalorder %s148, %s149
    %p163 = scmp.eq.s32.totalorder %s17, 3
    %p164 = por %p162, %p163
    %p166 = scmp.ne.s32.totalorder %s149, %s165
    %p167 = scmp.eq.s32.totalorder %s17, 0
    %p168 = por %p166, %p167
    %p169 = scmp.le.s32.totalorder 1, %s11
    %p170 = scmp.lt.s32.totalorder %s11, 5
    %p171 = pnand %p169, %p170
    %p172 = pneg %p171
    // Predicated region
    $region9: #{_lambda_.13} parent=5 // pred_check
      _
    $region10: #{_lambda_.13} parent=5 // pred_check_branch
      %174 = sbr.rel (%p171) target = $region12
    $region11: #{_lambda_.13} parent=5 // pred_region
      %s175 = ssub.s32 %s11, 1
    $region12: #{_lambda_.13} parent=5 // pred_fallthru
      _
    %p176 = scmp.lt.s32.totalorder %s11, 4
    // Predicated region
    $region13: #{_lambda_.13} parent=5 // pred_check
      %p177 = pneg %p176
    $region14: #{_lambda_.13} parent=5 // pred_check_branch
      %179 = sbr.rel (%p177) target = $region16
    $region15: #{_lambda_.13} parent=5 // pred_region
      // Predicated region
      $region17: #{_lambda_.13} parent=15 // pred_check
        %p180 = pneg %p45
      $region18: #{_lambda_.13} parent=15 // pred_check_branch
        %182 = sbr.rel (%p180) target = $region20
      $region19: #{_lambda_.13} parent=15 // pred_region
        %s183 = smul.u32 16, %s19
        %p184 = scmp.lt.s32.totalorder %s18, 3
        %s185 = scalar_select %p184, %s18, 3
        %p186 = scmp.lt.s32.totalorder %s183, 15
        %s187 = scalar_select %p186, %s183, 15
        %s188 = smul.addr %s185, 16
        %s189 = sadd.s32 %s187, %s188
        %s190 = smul.addr %s189, 4
        %s191 = scalar_lea.vmem %s0, %s190
        %s192 = smul.u32 16, %s19
      $region20: #{_lambda_.13} parent=15 // pred_fallthru
        _
      // Predicated region
      $region21: #{_lambda_.13} parent=15 // pred_check
        %p193 = pneg %p71
      $region22: #{_lambda_.13} parent=15 // pred_check_branch
        %195 = sbr.rel (%p193) target = $region24
      $region23: #{_lambda_.13} parent=15 // pred_region
        %p196 = scmp.lt.s32.totalorder %s18, 3
        %s197 = scalar_select %p196, %s18, 3
        %s198 = smul.addr %s197, 16
        %s199 = smul.addr %s198, 4
        %s200 = scalar_lea.vmem %s1, %s199
      $region24: #{_lambda_.13} parent=15 // pred_fallthru
        _
    $region16: #{_lambda_.13} parent=5 // pred_fallthru
      _
    %p201 = scmp.le.s32.totalorder 1, %s11
    %p202 = scmp.lt.s32.totalorder %s11, 5
    %p203 = pnand %p201, %p202
    %p204 = pneg %p203
    // Predicated region
    $region25: #{_lambda_.13} parent=5 // pred_check
      _
    $region26: #{_lambda_.13} parent=5 // pred_check_branch
      %206 = sbr.rel (%p203) target = $region28
    $region27: #{_lambda_.13} parent=5 // pred_region
      %s207 = ssub.s32 %s11, 1
      %s208 = smul.u32 16, %s21
      %p209 = scmp.lt.s32.totalorder %s20, 3
      %s210 = scalar_select %p209, %s20, 3
      %p211 = scmp.lt.s32.totalorder %s208, 15
      %s212 = scalar_select %p211, %s208, 15
      %s213 = smul.addr %s210, 16
      %s214 = sadd.s32 %s212, %s213
      %s215 = smul.addr %s214, 4
      %s216 = scalar_lea.vmem %s0, %s215
      %p217 = pneg %p51
      %p218 = pneg %p48
      %p219 = scmp.lt.s32.totalorder %s20, 3
      %s220 = scalar_select %p219, %s20, 3
      %s221 = smul.addr %s220, 16
      %s222 = smul.addr %s221, 4
      %s223 = scalar_lea.vmem %s1, %s222
      %p224 = pneg %p77
      %p225 = pneg %p74
      %p226 = pneg %p105
      %p227 = pneg %p102
      %s228 = smul.u32 16, %s21
      %p229 = scmp.lt.s32.totalorder %s20, 3
      %s230 = scalar_select %p229, %s20, 3
      %p231 = scmp.lt.s32.totalorder %s228, 15
      %s232 = scalar_select %p231, %s228, 15
      %s233 = smul.addr %s230, 16
      %s234 = sadd.s32 %s232, %s233
      %s235 = smul.addr %s234, 8
      %s236 = scalar_lea.vmem %s2, %s235
      %p237 = pneg %p133
      %p238 = pneg %p130
      %p239 = scmp.lt.s32.totalorder %s20, 3
      %s240 = scalar_select %p239, %s20, 3
      %p241 = scmp.lt.s32.totalorder %s21, 0
      %s242 = scalar_select %p241, %s21, 0
      %s243 = sadd.s32 %s242, %s240
      %s244 = scalar_lea.vmem %s3, %s243
      %p245 = pneg %p161
      %p246 = pneg %p158
      %p247 = scmp.lt.s32.totalorder %s20, 3
      %s248 = scalar_select %p247, %s20, 3
      %p249 = scmp.lt.s32.totalorder %s21, 0
      %s250 = scalar_select %p249, %s21, 0
      %s251 = sadd.s32 %s250, %s248
      %s252 = scalar_lea.vmem %s4, %s251
      %s253 = smul.u32 16, %s21
      %p254 = scmp.lt.s32.totalorder %s20, 3
      %s255 = scalar_select %p254, %s20, 3
      %p256 = scmp.lt.s32.totalorder %s253, 15
      %s257 = scalar_select %p256, %s253, 15
      %s258 = smul.addr %s255, 16
      %s259 = sadd.s32 %s257, %s258
      %s260 = smul.addr %s259, 4
      %s261 = scalar_lea.vmem %s0, %s260
      %s262 = smul.u32 16, %s21
      %p263 = scmp.lt.s32.totalorder %s20, 3
      %s264 = scalar_select %p263, %s20, 3
      %s265 = smul.addr %s264, 16
      %s266 = smul.addr %s265, 4
      %s267 = scalar_lea.vmem %s1, %s266
      %s268 = smul.u32 16, %s21
      %p269 = scmp.lt.s32.totalorder %s20, 3
      %s270 = scalar_select %p269, %s20, 3
      %p271 = scmp.lt.s32.totalorder %s268, 15
      %s272 = scalar_select %p271, %s268, 15
      %s273 = smul.addr %s270, 16
      %s274 = sadd.s32 %s272, %s273
      %s275 = smul.addr %s274, 8
      %s276 = scalar_lea.vmem %s2, %s275
      %s277 = smul.u32 16, %s21
      %p278 = scmp.lt.s32.totalorder %s20, 3
      %s279 = scalar_select %p278, %s20, 3
      %p280 = scmp.lt.s32.totalorder %s21, 0
      %s281 = scalar_select %p280, %s21, 0
      %s282 = sadd.s32 %s281, %s279
      %s283 = scalar_lea.vmem %s3, %s282
      %p284 = scmp.lt.s32.totalorder %s20, 3
      %s285 = scalar_select %p284, %s20, 3
      %p286 = scmp.lt.s32.totalorder %s21, 0
      %s287 = scalar_select %p286, %s21, 0
      %s288 = sadd.s32 %s287, %s285
      %s289 = scalar_lea.vmem %s4, %s288
      %v291 = vld [vmem:[%s261] sm:$0xf]
      %v292 = vld [vmem:[%s261 + $0x4] sm:$0xf]
      %v293 = vld [vmem:[%s261 + $0x8] sm:$0xf]
      %v294 = vld [vmem:[%s261 + $0xc] sm:$0xf]
      %v295 = vld [vmem:[%s261 + $0x10] sm:$0xf]
      %v296 = vld [vmem:[%s261 + $0x14] sm:$0xf]
      %v297 = vld [vmem:[%s261 + $0x18] sm:$0xf]
      %v298 = vld [vmem:[%s261 + $0x1c] sm:$0xf]
      %v299 = vld [vmem:[%s261 + $0x20] sm:$0xf]
      %v300 = vld [vmem:[%s261 + $0x24] sm:$0xf]
      %v301 = vld [vmem:[%s261 + $0x28] sm:$0xf]
      %v302 = vld [vmem:[%s261 + $0x2c] sm:$0xf]
      %v303 = vld [vmem:[%s261 + $0x30] sm:$0xf]
      %v304 = vld [vmem:[%s261 + $0x34] sm:$0xf]
      %v305 = vld [vmem:[%s261 + $0x38] sm:$0xf]
      %v306 = vld [vmem:[%s261 + $0x3c] sm:$0xf]
      %v307 = vld [vmem:[%s267] sm:$0xf]
      %v308 = vld [vmem:[%s267 + $0x4] sm:$0xf]
      %v309 = vld [vmem:[%s267 + $0x8] sm:$0xf]
      %v310 = vld [vmem:[%s267 + $0xc] sm:$0xf]
      %v311 = vld [vmem:[%s267 + $0x10] sm:$0xf]
      %v312 = vld [vmem:[%s267 + $0x14] sm:$0xf]
      %v313 = vld [vmem:[%s267 + $0x18] sm:$0xf]
      %v314 = vld [vmem:[%s267 + $0x1c] sm:$0xf]
      %v315 = vld [vmem:[%s267 + $0x20] sm:$0xf]
      %v316 = vld [vmem:[%s267 + $0x24] sm:$0xf]
      %v317 = vld [vmem:[%s267 + $0x28] sm:$0xf]
      %v318 = vld [vmem:[%s267 + $0x2c] sm:$0xf]
      %v319 = vld [vmem:[%s267 + $0x30] sm:$0xf]
      %v320 = vld [vmem:[%s267 + $0x34] sm:$0xf]
      %v321 = vld [vmem:[%s267 + $0x38] sm:$0xf]
      %v322 = vld [vmem:[%s267 + $0x3c] sm:$0xf]
      %v339 = vunpack.c.l.b16 %v291
      %v340 = vunpack.c.l.b16 %v292
      %v341 = vunpack.c.l.b16 %v293
      %v342 = vunpack.c.l.b16 %v294
      %v343 = vunpack.c.l.b16 %v295
      %v344 = vunpack.c.l.b16 %v296
      %v345 = vunpack.c.l.b16 %v297
      %v346 = vunpack.c.l.b16 %v298
      %v347 = vunpack.c.l.b16 %v299
      %v348 = vunpack.c.l.b16 %v300
      %v349 = vunpack.c.l.b16 %v301
      %v350 = vunpack.c.l.b16 %v302
      %v351 = vunpack.c.l.b16 %v303
      %v352 = vunpack.c.l.b16 %v304
      %v353 = vunpack.c.l.b16 %v305
      %v354 = vunpack.c.l.b16 %v306
      %v355 = vpack.c.b16 %v340, %v339
      %v356 = vpack.c.b16 %v342, %v341
      %v357 = vpack.c.b16 %v344, %v343
      %v358 = vpack.c.b16 %v346, %v345
      %v359 = vpack.c.b16 %v348, %v347
      %v360 = vpack.c.b16 %v350, %v349
      %v361 = vpack.c.b16 %v352, %v351
      %v362 = vpack.c.b16 %v354, %v353
      %v387 = vunpack.c.l.b16 %v307
      %v388 = vunpack.c.l.b16 %v308
      %v389 = vunpack.c.l.b16 %v309
      %v390 = vunpack.c.l.b16 %v310
      %v391 = vunpack.c.l.b16 %v311
      %v392 = vunpack.c.l.b16 %v312
      %v393 = vunpack.c.l.b16 %v313
      %v394 = vunpack.c.l.b16 %v314
      %v395 = vunpack.c.l.b16 %v315
      %v396 = vunpack.c.l.b16 %v316
      %v397 = vunpack.c.l.b16 %v317
      %v398 = vunpack.c.l.b16 %v318
      %v399 = vunpack.c.l.b16 %v319
      %v400 = vunpack.c.l.b16 %v320
      %v401 = vunpack.c.l.b16 %v321
      %v402 = vunpack.c.l.b16 %v322
      %v403 = vpack.c.b16 %v388, %v387
      %v404 = vpack.c.b16 %v390, %v389
      %v405 = vpack.c.b16 %v392, %v391
      %v406 = vpack.c.b16 %v394, %v393
      %v407 = vpack.c.b16 %v396, %v395
      %v408 = vpack.c.b16 %v398, %v397
      %v409 = vpack.c.b16 %v400, %v399
      %v410 = vpack.c.b16 %v402, %v401
      %419 = vmatprep.subr.bf16.mxu0 0
      %420 = vmatpush1.bf16.msra.mxu0 %v403
      %421 = vmatprep.subr.bf16.mxu0 0
      %422 = vmatpush1.bf16.msra.mxu0 %v404
      %423 = vmatprep.subr.bf16.mxu0 0
      %424 = vmatpush1.bf16.msra.mxu0 %v405
      %425 = vmatprep.subr.bf16.mxu0 0
      %426 = vmatpush1.bf16.msra.mxu0 %v406
      %427 = vmatprep.subr.bf16.mxu0 0
      %428 = vmatpush1.bf16.msra.mxu0 %v407
      %429 = vmatprep.subr.bf16.mxu0 0
      %430 = vmatpush1.bf16.msra.mxu0 %v408
      %431 = vmatprep.subr.bf16.mxu0 0
      %432 = vmatpush1.bf16.msra.mxu0 %v409
      %433 = vmatprep.subr.bf16.mxu0 0
      %434 = vmatpush1.bf16.msra.mxu0 %v410
      %435 = vmatprep.subr.bf16.mxu0 0
      %436 = vmatpush1.bf16.msra.mxu0 0
      %437 = vmatprep.subr.bf16.mxu0 0
      %438 = vmatpush1.bf16.msra.mxu0 0
      %439 = vmatprep.subr.bf16.mxu0 0
      %440 = vmatpush1.bf16.msra.mxu0 0
      %441 = vmatprep.subr.bf16.mxu0 0
      %442 = vmatpush1.bf16.msra.mxu0 0
      %443 = vmatprep.subr.bf16.mxu0 0
      %444 = vmatpush1.bf16.msra.mxu0 0
      %445 = vmatprep.subr.bf16.mxu0 0
      %446 = vmatpush1.bf16.msra.mxu0 0
      %447 = vmatprep.subr.bf16.mxu0 0
      %448 = vmatpush1.bf16.msra.mxu0 0
      %449 = vmatprep.subr.bf16.mxu0 0
      %450 = vmatpush1.bf16.msra.mxu0 0
      %451 = vmatprep.mubr.bf16.mxu0 0
      %452 = vmatmul.mubr.bf16.gmra.mrb[0].mxu0 %v355
      %v453 = vpop.f32.mrb[0].mxu0
      %v454 = vadd.f32 0.0, %v453
      %v455 = vpop.f32.mrb[0].mxu0
      %v456 = vpop.f32.mrb[0].mxu0
      %v457 = vadd.f32 0.0, %v456
      %v458 = vpop.f32.mrb[0].mxu0
      %459 = vmatprep.mubr.bf16.mxu0 0
      %460 = vmatmul.mubr.bf16.gmra.mrb[0].mxu0 %v356
      %v461 = vpop.f32.mrb[0].mxu0
      %v462 = vadd.f32 0.0, %v461
      %v463 = vpop.f32.mrb[0].mxu0
      %v464 = vpop.f32.mrb[0].mxu0
      %v465 = vadd.f32 0.0, %v464
      %v466 = vpop.f32.mrb[0].mxu0
      %467 = vmatprep.mubr.bf16.mxu0 0
      %468 = vmatmul.mubr.bf16.gmra.mrb[0].mxu0 %v357
      %v469 = vpop.f32.mrb[0].mxu0
      %v470 = vadd.f32 0.0, %v469
      %v471 = vpop.f32.mrb[0].mxu0
      %v472 = vpop.f32.mrb[0].mxu0
      %v473 = vadd.f32 0.0, %v472
      %v474 = vpop.f32.mrb[0].mxu0
      %475 = vmatprep.mubr.bf16.mxu0 0
      %476 = vmatmul.mubr.bf16.gmra.mrb[0].mxu0 %v358
      %v477 = vpop.f32.mrb[0].mxu0
      %v478 = vadd.f32 0.0, %v477
      %v479 = vpop.f32.mrb[0].mxu0
      %v480 = vpop.f32.mrb[0].mxu0
      %v481 = vadd.f32 0.0, %v480
      %v482 = vpop.f32.mrb[0].mxu0
      %483 = vmatprep.mubr.bf16.mxu0 0
      %484 = vmatmul.mubr.bf16.gmra.mrb[0].mxu0 %v359
      %v485 = vpop.f32.mrb[0].mxu0
      %v486 = vadd.f32 0.0, %v485
      %v487 = vpop.f32.mrb[0].mxu0
      %v488 = vpop.f32.mrb[0].mxu0
      %v489 = vadd.f32 0.0, %v488
      %v490 = vpop.f32.mrb[0].mxu0
      %491 = vmatprep.mubr.bf16.mxu0 0
      %492 = vmatmul.mubr.bf16.gmra.mrb[0].mxu0 %v360
      %v493 = vpop.f32.mrb[0].mxu0
      %v494 = vadd.f32 0.0, %v493
      %v495 = vpop.f32.mrb[0].mxu0
      %v496 = vpop.f32.mrb[0].mxu0
      %v497 = vadd.f32 0.0, %v496
      %v498 = vpop.f32.mrb[0].mxu0
      %499 = vmatprep.mubr.bf16.mxu0 0
      %500 = vmatmul.mubr.bf16.gmra.mrb[0].mxu0 %v361
      %v501 = vpop.f32.mrb[0].mxu0
      %v502 = vadd.f32 0.0, %v501
      %v503 = vpop.f32.mrb[0].mxu0
      %v504 = vpop.f32.mrb[0].mxu0
      %v505 = vadd.f32 0.0, %v504
      %v506 = vpop.f32.mrb[0].mxu0
      %507 = vmatprep.mubr.bf16.mxu0 0
      %508 = vmatmul.mubr.bf16.gmra.mrb[0].mxu0 %v362
      %v509 = vpop.f32.mrb[0].mxu0
      %v510 = vadd.f32 0.0, %v509
      %v511 = vpop.f32.mrb[0].mxu0
      %v512 = vpop.f32.mrb[0].mxu0
      %v513 = vadd.f32 0.0, %v512
      %v514 = vpop.f32.mrb[0].mxu0
      %515 = vdwg.mxu0
      %516 = vst [vmem:[%s276] sm:$0xff] %v454
      %517 = vst [vmem:[%s276 + $0x8] sm:$0xff] %v457
      %518 = vst [vmem:[%s276 + $0x10] sm:$0xff] %v462
      %519 = vst [vmem:[%s276 + $0x18] sm:$0xff] %v465
      %520 = vst [vmem:[%s276 + $0x20] sm:$0xff] %v470
      %521 = vst [vmem:[%s276 + $0x28] sm:$0xff] %v473
      %522 = vst [vmem:[%s276 + $0x30] sm:$0xff] %v478
      %523 = vst [vmem:[%s276 + $0x38] sm:$0xff] %v481
      %524 = vst [vmem:[%s276 + $0x40] sm:$0xff] %v486
      %525 = vst [vmem:[%s276 + $0x48] sm:$0xff] %v489
      %526 = vst [vmem:[%s276 + $0x50] sm:$0xff] %v494
      %527 = vst [vmem:[%s276 + $0x58] sm:$0xff] %v497
      %528 = vst [vmem:[%s276 + $0x60] sm:$0xff] %v502
      %529 = vst [vmem:[%s276 + $0x68] sm:$0xff] %v505
      %530 = vst [vmem:[%s276 + $0x70] sm:$0xff] %v510
      %531 = vst [vmem:[%s276 + $0x78] sm:$0xff] %v513
      %v532 = vadd.f32 %v454, %v457
      %v533 = vadd.f32 %v532, %v462
      %v534 = vadd.f32 %v533, %v465
      %v535 = vadd.f32 %v534, %v470
      %v536 = vadd.f32 %v535, %v473
      %v537 = vadd.f32 %v536, %v478
      %v538 = vadd.f32 %v537, %v481
      %v539 = vadd.f32 %v538, %v486
      %v540 = vadd.f32 %v539, %v489
      %v541 = vadd.f32 %v540, %v494
      %v542 = vadd.f32 %v541, %v497
      %v543 = vadd.f32 %v542, %v502
      %v544 = vadd.f32 %v543, %v505
      %v545 = vadd.f32 %v544, %v510
      %v546 = vadd.f32 %v545, %v513
      %v547 = vrot.slane %v546, 4
      %v548 = vadd.f32 %v546, %v547
      %v549 = vrot.slane %v548, 2
      %v550 = vadd.f32 %v548, %v549
      %v551 = vrot.slane %v550, 1
      %v552 = vadd.f32 %v550, %v551
      %553 = vst [vmem:[%s283] sm:$0x1] %v552
      %v554 = vmul.f32 %v454, %v454
      %v555 = vmul.f32 %v457, %v457
      %v556 = vmul.f32 %v462, %v462
      %v557 = vmul.f32 %v465, %v465
      %v558 = vmul.f32 %v470, %v470
      %v559 = vmul.f32 %v473, %v473
      %v560 = vmul.f32 %v478, %v478
      %v561 = vmul.f32 %v481, %v481
      %v562 = vmul.f32 %v486, %v486
      %v563 = vmul.f32 %v489, %v489
      %v564 = vmul.f32 %v494, %v494
      %v565 = vmul.f32 %v497, %v497
      %v566 = vmul.f32 %v502, %v502
      %v567 = vmul.f32 %v505, %v505
      %v568 = vmul.f32 %v510, %v510
      %v569 = vmul.f32 %v513, %v513
      %v570 = vadd.f32 %v554, %v555
      %v571 = vadd.f32 %v570, %v556
      %v572 = vadd.f32 %v571, %v557
      %v573 = vadd.f32 %v572, %v558
      %v574 = vadd.f32 %v573, %v559
      %v575 = vadd.f32 %v574, %v560
      %v576 = vadd.f32 %v575, %v561
      %v577 = vadd.f32 %v576, %v562
      %v578 = vadd.f32 %v577, %v563
      %v579 = vadd.f32 %v578, %v564
      %v580 = vadd.f32 %v579, %v565
      %v581 = vadd.f32 %v580, %v566
      %v582 = vadd.f32 %v581, %v567
      %v583 = vadd.f32 %v582, %v568
      %v584 = vadd.f32 %v583, %v569
      %v585 = vrot.slane %v584, 4
      %v586 = vadd.f32 %v584, %v585
      %v587 = vrot.slane %v586, 2
      %v588 = vadd.f32 %v586, %v587
      %v589 = vrot.slane %v588, 1
      %v590 = vadd.f32 %v588, %v589
      %591 = vst [vmem:[%s289] sm:$0x1] %v590
      %s592 = smul.u32 16, %s21
      %p593 = scmp.lt.s32.totalorder %s20, 3
      %s594 = scalar_select %p593, %s20, 3
      %p595 = scmp.lt.s32.totalorder %s592, 15
      %s596 = scalar_select %p595, %s592, 15
      %s597 = smul.addr %s594, 16
      %s598 = sadd.s32 %s596, %s597
      %s599 = smul.addr %s598, 8
      %s600 = scalar_lea.vmem %s2, %s599
      %p601 = scmp.lt.s32.totalorder %s20, 3
      %s602 = scalar_select %p601, %s20, 3
      %p603 = scmp.lt.s32.totalorder %s21, 0
      %s604 = scalar_select %p603, %s21, 0
      %s605 = sadd.s32 %s604, %s602
      %s606 = scalar_lea.vmem %s3, %s605
      %p607 = scmp.lt.s32.totalorder %s20, 3
      %s608 = scalar_select %p607, %s20, 3
      %p609 = scmp.lt.s32.totalorder %s21, 0
      %s610 = scalar_select %p609, %s21, 0
      %s611 = sadd.s32 %s610, %s608
      %s612 = scalar_lea.vmem %s4, %s611
      // Predicated region
      $region29: #{_lambda_.13} parent=27 // pred_check
        %p613 = pneg %p102
      $region30: #{_lambda_.13} parent=27 // pred_check_branch
        %615 = sbr.rel (%p613) target = $region32
      $region31: #{_lambda_.13} parent=27 // pred_region
        %s616 = smul.u32 16, %s21
      $region32: #{_lambda_.13} parent=27 // pred_fallthru
        _
      // Predicated region
      $region33: #{_lambda_.13} parent=27 // pred_check
        %p617 = pneg %p130
      $region34: #{_lambda_.13} parent=27 // pred_check_branch
        %619 = sbr.rel (%p617) target = $region36
      $region35: #{_lambda_.13} parent=27 // pred_region
        _
      $region36: #{_lambda_.13} parent=27 // pred_fallthru
        _
      // Predicated region
      $region37: #{_lambda_.13} parent=27 // pred_check
        %p620 = pneg %p158
      $region38: #{_lambda_.13} parent=27 // pred_check_branch
        %622 = sbr.rel (%p620) target = $region40
      $region39: #{_lambda_.13} parent=27 // pred_region
        _
      $region40: #{_lambda_.13} parent=27 // pred_fallthru
        _
    $region28: #{_lambda_.13} parent=5 // pred_fallthru
      _
    %p623 = scmp.le.s32.totalorder 2, %s11
    // Predicated region
    $region41: #{_lambda_.13} parent=5 // pred_check
      %p624 = pneg %p623
    $region42: #{_lambda_.13} parent=5 // pred_check_branch
      %626 = sbr.rel (%p624) target = $region44
    $region43: #{_lambda_.13} parent=5 // pred_region
      %s627 = ssub.s32 %s11, 2
      // Predicated region
      $region45: #{_lambda_.13} parent=43 // pred_check
        %p628 = pneg %p108
      $region46: #{_lambda_.13} parent=43 // pred_check_branch
        %630 = sbr.rel (%p628) target = $region48
      $region47: #{_lambda_.13} parent=43 // pred_region
        %s631 = smul.u32 16, %s23
        %p632 = scmp.lt.s32.totalorder %s22, 3
        %s633 = scalar_select %p632, %s22, 3
        %p634 = scmp.lt.s32.totalorder %s631, 15
        %s635 = scalar_select %p634, %s631, 15
        %s636 = smul.addr %s633, 16
        %s637 = sadd.s32 %s635, %s636
        %s638 = smul.addr %s637, 8
        %s639 = scalar_lea.vmem %s2, %s638
      $region48: #{_lambda_.13} parent=43 // pred_fallthru
        _
      // Predicated region
      $region49: #{_lambda_.13} parent=43 // pred_check
        %p640 = pneg %p136
      $region50: #{_lambda_.13} parent=43 // pred_check_branch
        %642 = sbr.rel (%p640) target = $region52
      $region51: #{_lambda_.13} parent=43 // pred_region
        %p643 = scmp.lt.s32.totalorder %s22, 3
        %s644 = scalar_select %p643, %s22, 3
        %p645 = scmp.lt.s32.totalorder %s23, 0
        %s646 = scalar_select %p645, %s23, 0
        %s647 = sadd.s32 %s646, %s644
        %s648 = scalar_lea.vmem %s3, %s647
      $region52: #{_lambda_.13} parent=43 // pred_fallthru
        _
      // Predicated region
      $region53: #{_lambda_.13} parent=43 // pred_check
        %p649 = pneg %p164
      $region54: #{_lambda_.13} parent=43 // pred_check_branch
        %651 = sbr.rel (%p649) target = $region56
      $region55: #{_lambda_.13} parent=43 // pred_region
        %p652 = scmp.lt.s32.totalorder %s22, 3
        %s653 = scalar_select %p652, %s22, 3
        %p654 = scmp.lt.s32.totalorder %s23, 0
        %s655 = scalar_select %p654, %s23, 0
        %s656 = sadd.s32 %s655, %s653
        %s657 = scalar_lea.vmem %s4, %s656
      $region56: #{_lambda_.13} parent=43 // pred_fallthru
        _
    $region44: #{_lambda_.13} parent=5 // pred_fallthru
      _
  $region6: #{_lambda_.13} parent=0 // loop_footer
    %s15 = sadd.s32 1, %s11
  $region7: #{_lambda_.13} parent=0 // loop_footer_branch
    %10 = sbr.rel target = $region3
  $region8: #{_lambda_.13} parent=0 // loop_exit
    _

// kernel: _lambda_.14
$region0: #{_lambda_.14}
  #allocation0 [shape = 'u32[]', space=smem, size = 0x4, offset = 0x4, fixed_abs, tag = 'smem constant byte address 0x4 - core index']
  #allocation1 [shape = 'u32[144,128]{1,0:T(1,128)}', space=vmem, size = 0x12000, scoped, tag = 'internal scratch']
  %s0 = inlined_call_operand.vmem [shape: f32[4,128,128], index: 0, kind: input, shape index: {}]
  %s1 = inlined_call_operand.vmem [shape: f32[1,128], index: 1, kind: input, shape index: {}]
  %s2 = inlined_call_operand.vmem [shape: f32[1,128], index: 2, kind: input, shape index: {}]
  %s3 = inlined_call_operand.vmem [shape: bf16[4,128,128], index: 3, kind: output, shape index: {}]
  %s4 = sld [smem:[#allocation0]]
  $region45: #{_lambda_.14} parent=0
    _
  %s6 = ssub.s32 1, %s4
  %s7 = scalar_select 0, %s6, %s4
  loop: start=0, step=1, limit=6
  $region2: #{_lambda_.14} parent=0 // loop_pre_header
    _
  $region3: #{_lambda_.14} parent=0 // loop_header
    %s9 = sphi 0, %s13
    %p10 = scmp.ge.s32.totalorder %s9, 6
    %s16 = sphi 0, %s28
    %s17 = sphi 0, %s24
    %s18 = sphi 0, %s16
    %s19 = sphi 0, %s17
    %s20 = sphi 0, %s18
    %s21 = sphi 0, %s19
    %s33 = sphi 0, %s35
    %s36 = sphi 0, %s33
    %s37 = sphi 0, %s36
    %s53 = sphi 0, %s37
    %s57 = sphi 0, %s57
    %s59 = sphi 0, %s57
    %s60 = sphi 0, %s59
    %s74 = sphi 0, %s60
    %s78 = sphi 0, %s78
    %s80 = sphi 0, %s78
    %s81 = sphi 0, %s80
    %s95 = sphi 0, %s81
    %s103 = sphi 0, %s105
    %s106 = sphi 0, %s103
    %s107 = sphi 0, %s106
    %s123 = sphi 0, %s107
  $region4: #{_lambda_.14} parent=0 // loop_header_branch
    %12 = sbr.rel (%p10) target = $region8
  $region5: #{_lambda_.14} parent=0 // loop_body
    %s14 = ssub.s32 %s9, 1
    %s15 = ssub.s32 %s9, 2
    %s22 = sadd.s32 1, %s17
    %p23 = scmp.ge.s32.totalorder %s22, 1
    %s24 = scalar_select %p23, 0, %s22
    %s25 = sadd.s32 1, %s16
    %s26 = scalar_select %p23, %s25, %s16
    %p27 = scmp.ge.s32.totalorder %s26, 4
    %s28 = scalar_select %p27, 0, %s26
    %s29 = ssub.s32 %s16, %s28
    %s30 = ssub.s32 %s17, %s24
    %s31 = sor.u32 %s29, %s30
    %p32 = scmp.eq.s32.totalorder %s31, 0
    %s34 = sadd.s32 %s33, 1
    %s35 = scalar_select %p32, %s33, %s34
    %p38 = pneg %p32
    %p39 = scmp.eq.s32.totalorder %s9, 3
    %p40 = por %p38, %p39
    %p41 = scmp.ne.s32.totalorder %s33, %s36
    %p42 = scmp.eq.s32.totalorder %s9, 0
    %p43 = por %p41, %p42
    %p44 = scmp.ne.s32.totalorder %s33, %s36
    %p45 = scmp.eq.s32.totalorder %s14, 3
    %p46 = por %p44, %p45
    %p47 = scmp.ne.s32.totalorder %s36, %s37
    %p48 = scmp.eq.s32.totalorder %s14, 0
    %p49 = por %p47, %p48
    %p50 = scmp.ne.s32.totalorder %s36, %s37
    %p51 = scmp.eq.s32.totalorder %s15, 3
    %p52 = por %p50, %p51
    %p54 = scmp.ne.s32.totalorder %s37, %s53
    %p55 = scmp.eq.s32.totalorder %s15, 0
    %p56 = por %p54, %p55
    %s58 = sadd.s32 %s57, 1
    %p61 = scmp.eq.s32.totalorder %s9, 3
    %p62 = scmp.ne.s32.totalorder %s57, %s59
    %p63 = scmp.eq.s32.totalorder %s9, 0
    %p64 = por %p62, %p63
    %p65 = scmp.ne.s32.totalorder %s57, %s59
    %p66 = scmp.eq.s32.totalorder %s14, 3
    %p67 = por %p65, %p66
    %p68 = scmp.ne.s32.totalorder %s59, %s60
    %p69 = scmp.eq.s32.totalorder %s14, 0
    %p70 = por %p68, %p69
    %p71 = scmp.ne.s32.totalorder %s59, %s60
    %p72 = scmp.eq.s32.totalorder %s15, 3
    %p73 = por %p71, %p72
    %p75 = scmp.ne.s32.totalorder %s60, %s74
    %p76 = scmp.eq.s32.totalorder %s15, 0
    %p77 = por %p75, %p76
    %s79 = sadd.s32 %s78, 1
    %p82 = scmp.eq.s32.totalorder %s9, 3
    %p83 = scmp.ne.s32.totalorder %s78, %s80
    %p84 = scmp.eq.s32.totalorder %s9, 0
    %p85 = por %p83, %p84
    %p86 = scmp.ne.s32.totalorder %s78, %s80
    %p87 = scmp.eq.s32.totalorder %s14, 3
    %p88 = por %p86, %p87
    %p89 = scmp.ne.s32.totalorder %s80, %s81
    %p90 = scmp.eq.s32.totalorder %s14, 0
    %p91 = por %p89, %p90
    %p92 = scmp.ne.s32.totalorder %s80, %s81
    %p93 = scmp.eq.s32.totalorder %s15, 3
    %p94 = por %p92, %p93
    %p96 = scmp.ne.s32.totalorder %s81, %s95
    %p97 = scmp.eq.s32.totalorder %s15, 0
    %p98 = por %p96, %p97
    %s99 = ssub.s32 %s16, %s28
    %s100 = ssub.s32 %s17, %s24
    %s101 = sor.u32 %s99, %s100
    %p102 = scmp.eq.s32.totalorder %s101, 0
    %s104 = sadd.s32 %s103, 1
    %s105 = scalar_select %p102, %s103, %s104
    %p108 = pneg %p102
    %p109 = scmp.eq.s32.totalorder %s9, 3
    %p110 = por %p108, %p109
    %p111 = scmp.ne.s32.totalorder %s103, %s106
    %p112 = scmp.eq.s32.totalorder %s9, 0
    %p113 = por %p111, %p112
    %p114 = scmp.ne.s32.totalorder %s103, %s106
    %p115 = scmp.eq.s32.totalorder %s14, 3
    %p116 = por %p114, %p115
    %p117 = scmp.ne.s32.totalorder %s106, %s107
    %p118 = scmp.eq.s32.totalorder %s14, 0
    %p119 = por %p117, %p118
    %p120 = scmp.ne.s32.totalorder %s106, %s107
    %p121 = scmp.eq.s32.totalorder %s15, 3
    %p122 = por %p120, %p121
    %p124 = scmp.ne.s32.totalorder %s107, %s123
    %p125 = scmp.eq.s32.totalorder %s15, 0
    %p126 = por %p124, %p125
    %p127 = scmp.le.s32.totalorder 1, %s9
    %p128 = scmp.lt.s32.totalorder %s9, 5
    %p129 = pnand %p127, %p128
    %p130 = pneg %p129
    // Predicated region
    $region9: #{_lambda_.14} parent=5 // pred_check
      _
    $region10: #{_lambda_.14} parent=5 // pred_check_branch
      %132 = sbr.rel (%p129) target = $region12
    $region11: #{_lambda_.14} parent=5 // pred_region
      %s133 = ssub.s32 %s9, 1
      // Predicated region
      $region13: #{_lambda_.14} parent=11 // pred_check
        %p134 = pneg %p70
      $region14: #{_lambda_.14} parent=11 // pred_check_branch
        %136 = sbr.rel (%p134) target = $region16
      $region15: #{_lambda_.14} parent=11 // pred_region
        _
      $region16: #{_lambda_.14} parent=11 // pred_fallthru
        _
      // Predicated region
      $region17: #{_lambda_.14} parent=11 // pred_check
        %p137 = pneg %p91
      $region18: #{_lambda_.14} parent=11 // pred_check_branch
        %139 = sbr.rel (%p137) target = $region20
      $region19: #{_lambda_.14} parent=11 // pred_region
        _
      $region20: #{_lambda_.14} parent=11 // pred_fallthru
        _
    $region12: #{_lambda_.14} parent=5 // pred_fallthru
      _
    %p140 = scmp.lt.s32.totalorder %s9, 4
    // Predicated region
    $region21: #{_lambda_.14} parent=5 // pred_check
      %p141 = pneg %p140
    $region22: #{_lambda_.14} parent=5 // pred_check_branch
      %143 = sbr.rel (%p141) target = $region24
    $region23: #{_lambda_.14} parent=5 // pred_region
      // Predicated region
      $region25: #{_lambda_.14} parent=23 // pred_check
        %p144 = pneg %p43
      $region26: #{_lambda_.14} parent=23 // pred_check_branch
        %146 = sbr.rel (%p144) target = $region28
      $region27: #{_lambda_.14} parent=23 // pred_region
        %s147 = smul.u32 16, %s17
        %p148 = scmp.lt.s32.totalorder %s16, 3
        %s149 = scalar_select %p148, %s16, 3
        %p150 = scmp.lt.s32.totalorder %s147, 15
        %s151 = scalar_select %p150, %s147, 15
        %s152 = smul.addr %s149, 16
        %s153 = sadd.s32 %s151, %s152
        %s154 = smul.addr %s153, 8
        %s155 = scalar_lea.vmem %s0, %s154
        %s156 = smul.u32 16, %s17
      $region28: #{_lambda_.14} parent=23 // pred_fallthru
        _
    $region24: #{_lambda_.14} parent=5 // pred_fallthru
      _
    %p157 = scmp.le.s32.totalorder 1, %s9
    %p158 = scmp.lt.s32.totalorder %s9, 5
    %p159 = pnand %p157, %p158
    %p160 = pneg %p159
    // Predicated region
    $region29: #{_lambda_.14} parent=5 // pred_check
      _
    $region30: #{_lambda_.14} parent=5 // pred_check_branch
      %162 = sbr.rel (%p159) target = $region32
    $region31: #{_lambda_.14} parent=5 // pred_region
      %s163 = ssub.s32 %s9, 1
      %s164 = smul.u32 16, %s19
      %p165 = scmp.lt.s32.totalorder %s18, 3
      %s166 = scalar_select %p165, %s18, 3
      %p167 = scmp.lt.s32.totalorder %s164, 15
      %s168 = scalar_select %p167, %s164, 15
      %s169 = smul.addr %s166, 16
      %s170 = sadd.s32 %s168, %s169
      %s171 = smul.addr %s170, 8
      %s172 = scalar_lea.vmem %s0, %s171
      %p173 = pneg %p49
      %p174 = pneg %p46
      %p175 = pneg %p70
      %p176 = pneg %p67
      %p177 = pneg %p91
      %p178 = pneg %p88
      %p179 = pneg %p119
      %p180 = pneg %p116
      %s181 = smul.u32 16, %s19
      %p182 = scmp.lt.s32.totalorder %s18, 3
      %s183 = scalar_select %p182, %s18, 3
      %p184 = scmp.lt.s32.totalorder %s181, 15
      %s185 = scalar_select %p184, %s181, 15
      %s186 = smul.addr %s183, 16
      %s187 = sadd.s32 %s185, %s186
      %s188 = smul.addr %s187, 4
      %s189 = scalar_lea.vmem %s3, %s188
      %s190 = smul.u32 16, %s19
      %p191 = scmp.lt.s32.totalorder %s18, 3
      %s192 = scalar_select %p191, %s18, 3
      %p193 = scmp.lt.s32.totalorder %s190, 15
      %s194 = scalar_select %p193, %s190, 15
      %s195 = smul.addr %s192, 16
      %s196 = sadd.s32 %s194, %s195
      %s197 = smul.addr %s196, 8
      %s198 = scalar_lea.vmem %s0, %s197
      %s199 = smul.u32 16, %s19
      %s200 = smul.u32 16, %s19
      %p201 = scmp.lt.s32.totalorder %s18, 3
      %s202 = scalar_select %p201, %s18, 3
      %p203 = scmp.lt.s32.totalorder %s200, 15
      %s204 = scalar_select %p203, %s200, 15
      %s205 = smul.addr %s202, 16
      %s206 = sadd.s32 %s204, %s205
      %s207 = smul.addr %s206, 4
      %s208 = scalar_lea.vmem %s3, %s207
      %s209 = smul.u32 16, %s19
      %v210 = vld [vmem:[%s198] sm:$0xff]
      %v211 = vld [vmem:[%s198 + $0x8] sm:$0xff]
      %v212 = vld [vmem:[%s198 + $0x10] sm:$0xff]
      %v213 = vld [vmem:[%s198 + $0x18] sm:$0xff]
      %v214 = vld [vmem:[%s198 + $0x20] sm:$0xff]
      %v215 = vld [vmem:[%s198 + $0x28] sm:$0xff]
      %v216 = vld [vmem:[%s198 + $0x30] sm:$0xff]
      %v217 = vld [vmem:[%s198 + $0x38] sm:$0xff]
      %v218 = vld [vmem:[%s198 + $0x40] sm:$0xff]
      %v219 = vld [vmem:[%s198 + $0x48] sm:$0xff]
      %v220 = vld [vmem:[%s198 + $0x50] sm:$0xff]
      %v221 = vld [vmem:[%s198 + $0x58] sm:$0xff]
      %v222 = vld [vmem:[%s198 + $0x60] sm:$0xff]
      %v223 = vld [vmem:[%s198 + $0x68] sm:$0xff]
      %v224 = vld [vmem:[%s198 + $0x70] sm:$0xff]
      %v225 = vld [vmem:[%s198 + $0x78] sm:$0xff]
      %v226 = vld [vmem:[%s1] sm:$0x1]
      %v228 = vlaneseq
      %v229 = vshrl.u32 %v228, 7
      %v230 = vsub.s32 0, %v229
      %v231 = vrot.slane %v226, %v230
      %v233 = vmul.f32 %v210, %v231
      %v234 = vmul.f32 %v211, %v231
      %v235 = vmul.f32 %v212, %v231
      %v236 = vmul.f32 %v213, %v231
      %v237 = vmul.f32 %v214, %v231
      %v238 = vmul.f32 %v215, %v231
      %v239 = vmul.f32 %v216, %v231
      %v240 = vmul.f32 %v217, %v231
      %v241 = vmul.f32 %v218, %v231
      %v242 = vmul.f32 %v219, %v231
      %v243 = vmul.f32 %v220, %v231
      %v244 = vmul.f32 %v221, %v231
      %v245 = vmul.f32 %v222, %v231
      %v246 = vmul.f32 %v223, %v231
      %v247 = vmul.f32 %v224, %v231
      %v248 = vmul.f32 %v225, %v231
      %v249 = vld [vmem:[%s2] sm:$0x1]
      %v251 = vlaneseq
      %v252 = vshrl.u32 %v251, 7
      %v253 = vsub.s32 0, %v252
      %v254 = vrot.slane %v249, %v253
      %v256 = vadd.f32 %v233, %v254
      %v257 = vadd.f32 %v234, %v254
      %v258 = vadd.f32 %v235, %v254
      %v259 = vadd.f32 %v236, %v254
      %v260 = vadd.f32 %v237, %v254
      %v261 = vadd.f32 %v238, %v254
      %v262 = vadd.f32 %v239, %v254
      %v263 = vadd.f32 %v240, %v254
      %v264 = vadd.f32 %v241, %v254
      %v265 = vadd.f32 %v242, %v254
      %v266 = vadd.f32 %v243, %v254
      %v267 = vadd.f32 %v244, %v254
      %v268 = vadd.f32 %v245, %v254
      %v269 = vadd.f32 %v246, %v254
      %v270 = vadd.f32 %v247, %v254
      %v271 = vadd.f32 %v248, %v254
      %v272 = vmax.f32 %v256, 0.0
      %v273 = vmax.f32 %v257, 0.0
      %v274 = vmax.f32 %v258, 0.0
      %v275 = vmax.f32 %v259, 0.0
      %v276 = vmax.f32 %v260, 0.0
      %v277 = vmax.f32 %v261, 0.0
      %v278 = vmax.f32 %v262, 0.0
      %v279 = vmax.f32 %v263, 0.0
      %v280 = vmax.f32 %v264, 0.0
      %v281 = vmax.f32 %v265, 0.0
      %v282 = vmax.f32 %v266, 0.0
      %v283 = vmax.f32 %v267, 0.0
      %v284 = vmax.f32 %v268, 0.0
      %v285 = vmax.f32 %v269, 0.0
      %v286 = vmax.f32 %v270, 0.0
      %v287 = vmax.f32 %v271, 0.0
      %v288 = vpack.c.bf16 %v273, %v272
      %v289 = vpack.c.bf16 %v275, %v274
      %v290 = vpack.c.bf16 %v277, %v276
      %v291 = vpack.c.bf16 %v279, %v278
      %v292 = vpack.c.bf16 %v281, %v280
      %v293 = vpack.c.bf16 %v283, %v282
      %v294 = vpack.c.bf16 %v285, %v284
      %v295 = vpack.c.bf16 %v287, %v286
      %v304 = vunpack.c.l.b16 %v288
      %v305 = vunpack.c.h.b16 %v288
      %v306 = vunpack.c.l.b16 %v289
      %v307 = vunpack.c.h.b16 %v289
      %v308 = vunpack.c.l.b16 %v290
      %v309 = vunpack.c.h.b16 %v290
      %v310 = vunpack.c.l.b16 %v291
      %v311 = vunpack.c.h.b16 %v291
      %v312 = vunpack.c.l.b16 %v292
      %v313 = vunpack.c.h.b16 %v292
      %v314 = vunpack.c.l.b16 %v293
      %v315 = vunpack.c.h.b16 %v293
      %v316 = vunpack.c.l.b16 %v294
      %v317 = vunpack.c.h.b16 %v294
      %v318 = vunpack.c.l.b16 %v295
      %v319 = vunpack.c.h.b16 %v295
      %v320 = vpack.c.b16 %v304, %v304
      %v321 = vpack.c.b16 %v305, %v305
      %v322 = vpack.c.b16 %v306, %v306
      %v323 = vpack.c.b16 %v307, %v307
      %v324 = vpack.c.b16 %v308, %v308
      %v325 = vpack.c.b16 %v309, %v309
      %v326 = vpack.c.b16 %v310, %v310
      %v327 = vpack.c.b16 %v311, %v311
      %v328 = vpack.c.b16 %v312, %v312
      %v329 = vpack.c.b16 %v313, %v313
      %v330 = vpack.c.b16 %v314, %v314
      %v331 = vpack.c.b16 %v315, %v315
      %v332 = vpack.c.b16 %v316, %v316
      %v333 = vpack.c.b16 %v317, %v317
      %v334 = vpack.c.b16 %v318, %v318
      %v335 = vpack.c.b16 %v319, %v319
      %352 = vst [vmem:[%s208] sm:$0xf] %v320
      %353 = vst [vmem:[%s208 + $0x4] sm:$0xf] %v321
      %354 = vst [vmem:[%s208 + $0x8] sm:$0xf] %v322
      %355 = vst [vmem:[%s208 + $0xc] sm:$0xf] %v323
      %356 = vst [vmem:[%s208 + $0x10] sm:$0xf] %v324
      %357 = vst [vmem:[%s208 + $0x14] sm:$0xf] %v325
      %358 = vst [vmem:[%s208 + $0x18] sm:$0xf] %v326
      %359 = vst [vmem:[%s208 + $0x1c] sm:$0xf] %v327
      %360 = vst [vmem:[%s208 + $0x20] sm:$0xf] %v328
      %361 = vst [vmem:[%s208 + $0x24] sm:$0xf] %v329
      %362 = vst [vmem:[%s208 + $0x28] sm:$0xf] %v330
      %363 = vst [vmem:[%s208 + $0x2c] sm:$0xf] %v331
      %364 = vst [vmem:[%s208 + $0x30] sm:$0xf] %v332
      %365 = vst [vmem:[%s208 + $0x34] sm:$0xf] %v333
      %366 = vst [vmem:[%s208 + $0x38] sm:$0xf] %v334
      %367 = vst [vmem:[%s208 + $0x3c] sm:$0xf] %v335
      %s368 = smul.u32 16, %s19
      %p369 = scmp.lt.s32.totalorder %s18, 3
      %s370 = scalar_select %p369, %s18, 3
      %p371 = scmp.lt.s32.totalorder %s368, 15
      %s372 = scalar_select %p371, %s368, 15
      %s373 = smul.addr %s370, 16
      %s374 = sadd.s32 %s372, %s373
      %s375 = smul.addr %s374, 4
      %s376 = scalar_lea.vmem %s3, %s375
      // Predicated region
      $region33: #{_lambda_.14} parent=31 // pred_check
        %p377 = pneg %p116
      $region34: #{_lambda_.14} parent=31 // pred_check_branch
        %379 = sbr.rel (%p377) target = $region36
      $region35: #{_lambda_.14} parent=31 // pred_region
        %s380 = smul.u32 16, %s19
      $region36: #{_lambda_.14} parent=31 // pred_fallthru
        _
    $region32: #{_lambda_.14} parent=5 // pred_fallthru
      _
    %p381 = scmp.le.s32.totalorder 2, %s9
    // Predicated region
    $region37: #{_lambda_.14} parent=5 // pred_check
      %p382 = pneg %p381
    $region38: #{_lambda_.14} parent=5 // pred_check_branch
      %384 = sbr.rel (%p382) target = $region40
    $region39: #{_lambda_.14} parent=5 // pred_region
      %s385 = ssub.s32 %s9, 2
      // Predicated region
      $region41: #{_lambda_.14} parent=39 // pred_check
        %p386 = pneg %p122
      $region42: #{_lambda_.14} parent=39 // pred_check_branch
        %388 = sbr.rel (%p386) target = $region44
      $region43: #{_lambda_.14} parent=39 // pred_region
        %s389 = smul.u32 16, %s21
        %p390 = scmp.lt.s32.totalorder %s20, 3
        %s391 = scalar_select %p390, %s20, 3
        %p392 = scmp.lt.s32.totalorder %s389, 15
        %s393 = scalar_select %p392, %s389, 15
        %s394 = smul.addr %s391, 16
        %s395 = sadd.s32 %s393, %s394
        %s396 = smul.addr %s395, 4
        %s397 = scalar_lea.vmem %s3, %s396
      $region44: #{_lambda_.14} parent=39 // pred_fallthru
        _
    $region40: #{_lambda_.14} parent=5 // pred_fallthru
      _
  $region6: #{_lambda_.14} parent=0 // loop_footer
    %s13 = sadd.s32 1, %s9
  $region7: #{_lambda_.14} parent=0 // loop_footer_branch
    %8 = sbr.rel target = $region3
  $region8: #{_lambda_.14} parent=0 // loop_exit
    _

// kernel: _lambda_.15
$region0: #{_lambda_.15}
  #allocation0 [shape = 'u32[]', space=smem, size = 0x4, offset = 0x4, fixed_abs, tag = 'smem constant byte address 0x4 - core index']
  #allocation1 [shape = 'u32[144,128]{1,0:T(1,128)}', space=vmem, size = 0x12000, scoped, tag = 'internal scratch']
  %s0 = inlined_call_operand.vmem [shape: bf16[4,512,128], index: 0, kind: input, shape index: {}]
  %s1 = inlined_call_operand.vmem [shape: bf16[4,128,128], index: 1, kind: input, shape index: {}]
  %s2 = inlined_call_operand.vmem [shape: f32[4,512,128], index: 2, kind: output, shape index: {0}]
  %s3 = inlined_call_operand.vmem [shape: f32[4,1,1,128], index: 3, kind: output, shape index: {1}]
  %s4 = inlined_call_operand.vmem [shape: f32[4,1,1,128], index: 4, kind: output, shape index: {2}]
  %5 = xla_tuple %s2, %s3, %s4
  %s6 = sld [smem:[#allocation0]]
  $region57: #{_lambda_.15} parent=0
    _
  %s8 = ssub.s32 1, %s6
  %s9 = scalar_select 0, %s8, %s6
  loop: start=0, step=1, limit=6
  $region2: #{_lambda_.15} parent=0 // loop_pre_header
    _
  $region3: #{_lambda_.15} parent=0 // loop_header
    %s11 = sphi 0, %s15
    %p12 = scmp.ge.s32.totalorder %s11, 6
    %s18 = sphi 0, %s30
    %s19 = sphi 0, %s26
    %s20 = sphi 0, %s18
    %s21 = sphi 0, %s19
    %s22 = sphi 0, %s20
    %s23 = sphi 0, %s21
    %s35 = sphi 0, %s37
    %s38 = sphi 0, %s35
    %s39 = sphi 0, %s38
    %s55 = sphi 0, %s39
    %s61 = sphi 0, %s63
    %s64 = sphi 0, %s61
    %s65 = sphi 0, %s64
    %s81 = sphi 0, %s65
    %s89 = sphi 0, %s91
    %s92 = sphi 0, %s89
    %s93 = sphi 0, %s92
    %s109 = sphi 0, %s93
    %s117 = sphi 0, %s119
    %s120 = sphi 0, %s117
    %s121 = sphi 0, %s120
    %s137 = sphi 0, %s121
    %s145 = sphi 0, %s147
    %s148 = sphi 0, %s145
    %s149 = sphi 0, %s148
    %s165 = sphi 0, %s149
  $region4: #{_lambda_.15} parent=0 // loop_header_branch
    %14 = sbr.rel (%p12) target = $region8
  $region5: #{_lambda_.15} parent=0 // loop_body
    %s16 = ssub.s32 %s11, 1
    %s17 = ssub.s32 %s11, 2
    %s24 = sadd.s32 1, %s19
    %p25 = scmp.ge.s32.totalorder %s24, 1
    %s26 = scalar_select %p25, 0, %s24
    %s27 = sadd.s32 1, %s18
    %s28 = scalar_select %p25, %s27, %s18
    %p29 = scmp.ge.s32.totalorder %s28, 4
    %s30 = scalar_select %p29, 0, %s28
    %s31 = ssub.s32 %s18, %s30
    %s32 = ssub.s32 %s19, %s26
    %s33 = sor.u32 %s31, %s32
    %p34 = scmp.eq.s32.totalorder %s33, 0
    %s36 = sadd.s32 %s35, 1
    %s37 = scalar_select %p34, %s35, %s36
    %p40 = pneg %p34
    %p41 = scmp.eq.s32.totalorder %s11, 3
    %p42 = por %p40, %p41
    %p43 = scmp.ne.s32.totalorder %s35, %s38
    %p44 = scmp.eq.s32.totalorder %s11, 0
    %p45 = por %p43, %p44
    %p46 = scmp.ne.s32.totalorder %s35, %s38
    %p47 = scmp.eq.s32.totalorder %s16, 3
    %p48 = por %p46, %p47
    %p49 = scmp.ne.s32.totalorder %s38, %s39
    %p50 = scmp.eq.s32.totalorder %s16, 0
    %p51 = por %p49, %p50
    %p52 = scmp.ne.s32.totalorder %s38, %s39
    %p53 = scmp.eq.s32.totalorder %s17, 3
    %p54 = por %p52, %p53
    %p56 = scmp.ne.s32.totalorder %s39, %s55
    %p57 = scmp.eq.s32.totalorder %s17, 0
    %p58 = por %p56, %p57
    %s59 = ssub.s32 %s18, %s30
    %p60 = scmp.eq.s32.totalorder %s59, 0
    %s62 = sadd.s32 %s61, 1
    %s63 = scalar_select %p60, %s61, %s62
    %p66 = pneg %p60
    %p67 = scmp.eq.s32.totalorder %s11, 3
    %p68 = por %p66, %p67
    %p69 = scmp.ne.s32.totalorder %s61, %s64
    %p70 = scmp.eq.s32.totalorder %s11, 0
    %p71 = por %p69, %p70
    %p72 = scmp.ne.s32.totalorder %s61, %s64
    %p73 = scmp.eq.s32.totalorder %s16, 3
    %p74 = por %p72, %p73
    %p75 = scmp.ne.s32.totalorder %s64, %s65
    %p76 = scmp.eq.s32.totalorder %s16, 0
    %p77 = por %p75, %p76
    %p78 = scmp.ne.s32.totalorder %s64, %s65
    %p79 = scmp.eq.s32.totalorder %s17, 3
    %p80 = por %p78, %p79
    %p82 = scmp.ne.s32.totalorder %s65, %s81
    %p83 = scmp.eq.s32.totalorder %s17, 0
    %p84 = por %p82, %p83
    %s85 = ssub.s32 %s18, %s30
    %s86 = ssub.s32 %s19, %s26
    %s87 = sor.u32 %s85, %s86
    %p88 = scmp.eq.s32.totalorder %s87, 0
    %s90 = sadd.s32 %s89, 1
    %s91 = scalar_select %p88, %s89, %s90
    %p94 = pneg %p88
    %p95 = scmp.eq.s32.totalorder %s11, 3
    %p96 = por %p94, %p95
    %p97 = scmp.ne.s32.totalorder %s89, %s92
    %p98 = scmp.eq.s32.totalorder %s11, 0
    %p99 = por %p97, %p98
    %p100 = scmp.ne.s32.totalorder %s89, %s92
    %p101 = scmp.eq.s32.totalorder %s16, 3
    %p102 = por %p100, %p101
    %p103 = scmp.ne.s32.totalorder %s92, %s93
    %p104 = scmp.eq.s32.totalorder %s16, 0
    %p105 = por %p103, %p104
    %p106 = scmp.ne.s32.totalorder %s92, %s93
    %p107 = scmp.eq.s32.totalorder %s17, 3
    %p108 = por %p106, %p107
    %p110 = scmp.ne.s32.totalorder %s93, %s109
    %p111 = scmp.eq.s32.totalorder %s17, 0
    %p112 = por %p110, %p111
    %s113 = ssub.s32 %s18, %s30
    %s114 = ssub.s32 %s19, %s26
    %s115 = sor.u32 %s113, %s114
    %p116 = scmp.eq.s32.totalorder %s115, 0
    %s118 = sadd.s32 %s117, 1
    %s119 = scalar_select %p116, %s117, %s118
    %p122 = pneg %p116
    %p123 = scmp.eq.s32.totalorder %s11, 3
    %p124 = por %p122, %p123
    %p125 = scmp.ne.s32.totalorder %s117, %s120
    %p126 = scmp.eq.s32.totalorder %s11, 0
    %p127 = por %p125, %p126
    %p128 = scmp.ne.s32.totalorder %s117, %s120
    %p129 = scmp.eq.s32.totalorder %s16, 3
    %p130 = por %p128, %p129
    %p131 = scmp.ne.s32.totalorder %s120, %s121
    %p132 = scmp.eq.s32.totalorder %s16, 0
    %p133 = por %p131, %p132
    %p134 = scmp.ne.s32.totalorder %s120, %s121
    %p135 = scmp.eq.s32.totalorder %s17, 3
    %p136 = por %p134, %p135
    %p138 = scmp.ne.s32.totalorder %s121, %s137
    %p139 = scmp.eq.s32.totalorder %s17, 0
    %p140 = por %p138, %p139
    %s141 = ssub.s32 %s18, %s30
    %s142 = ssub.s32 %s19, %s26
    %s143 = sor.u32 %s141, %s142
    %p144 = scmp.eq.s32.totalorder %s143, 0
    %s146 = sadd.s32 %s145, 1
    %s147 = scalar_select %p144, %s145, %s146
    %p150 = pneg %p144
    %p151 = scmp.eq.s32.totalorder %s11, 3
    %p152 = por %p150, %p151
    %p153 = scmp.ne.s32.totalorder %s145, %s148
    %p154 = scmp.eq.s32.totalorder %s11, 0
    %p155 = por %p153, %p154
    %p156 = scmp.ne.s32.totalorder %s145, %s148
    %p157 = scmp.eq.s32.totalorder %s16, 3
    %p158 = por %p156, %p157
    %p159 = scmp.ne.s32.totalorder %s148, %s149
    %p160 = scmp.eq.s32.totalorder %s16, 0
    %p161 = por %p159, %p160
    %p162 = scmp.ne.s32.totalorder %s148, %s149
    %p163 = scmp.eq.s32.totalorder %s17, 3
    %p164 = por %p162, %p163
    %p166 = scmp.ne.s32.totalorder %s149, %s165
    %p167 = scmp.eq.s32.totalorder %s17, 0
    %p168 = por %p166, %p167
    %p169 = scmp.le.s32.totalorder 1, %s11
    %p170 = scmp.lt.s32.totalorder %s11, 5
    %p171 = pnand %p169, %p170
    %p172 = pneg %p171
    // Predicated region
    $region9: #{_lambda_.15} parent=5 // pred_check
      _
    $region10: #{_lambda_.15} parent=5 // pred_check_branch
      %174 = sbr.rel (%p171) target = $region12
    $region11: #{_lambda_.15} parent=5 // pred_region
      %s175 = ssub.s32 %s11, 1
    $region12: #{_lambda_.15} parent=5 // pred_fallthru
      _
    %p176 = scmp.lt.s32.totalorder %s11, 4
    // Predicated region
    $region13: #{_lambda_.15} parent=5 // pred_check
      %p177 = pneg %p176
    $region14: #{_lambda_.15} parent=5 // pred_check_branch
      %179 = sbr.rel (%p177) target = $region16
    $region15: #{_lambda_.15} parent=5 // pred_region
      // Predicated region
      $region17: #{_lambda_.15} parent=15 // pred_check
        %p180 = pneg %p45
      $region18: #{_lambda_.15} parent=15 // pred_check_branch
        %182 = sbr.rel (%p180) target = $region20
      $region19: #{_lambda_.15} parent=15 // pred_region
        %s183 = smul.u32 64, %s19
        %p184 = scmp.lt.s32.totalorder %s18, 3
        %s185 = scalar_select %p184, %s18, 3
        %p186 = scmp.lt.s32.totalorder %s183, 63
        %s187 = scalar_select %p186, %s183, 63
        %s188 = smul.addr %s185, 64
        %s189 = sadd.s32 %s187, %s188
        %s190 = smul.addr %s189, 4
        %s191 = scalar_lea.vmem %s0, %s190
        %s192 = smul.u32 64, %s19
      $region20: #{_lambda_.15} parent=15 // pred_fallthru
        _
      // Predicated region
      $region21: #{_lambda_.15} parent=15 // pred_check
        %p193 = pneg %p71
      $region22: #{_lambda_.15} parent=15 // pred_check_branch
        %195 = sbr.rel (%p193) target = $region24
      $region23: #{_lambda_.15} parent=15 // pred_region
        %p196 = scmp.lt.s32.totalorder %s18, 3
        %s197 = scalar_select %p196, %s18, 3
        %s198 = smul.addr %s197, 16
        %s199 = smul.addr %s198, 4
        %s200 = scalar_lea.vmem %s1, %s199
      $region24: #{_lambda_.15} parent=15 // pred_fallthru
        _
    $region16: #{_lambda_.15} parent=5 // pred_fallthru
      _
    %p201 = scmp.le.s32.totalorder 1, %s11
    %p202 = scmp.lt.s32.totalorder %s11, 5
    %p203 = pnand %p201, %p202
    %p204 = pneg %p203
    // Predicated region
    $region25: #{_lambda_.15} parent=5 // pred_check
      _
    $region26: #{_lambda_.15} parent=5 // pred_check_branch
      %206 = sbr.rel (%p203) target = $region28
    $region27: #{_lambda_.15} parent=5 // pred_region
      %s207 = ssub.s32 %s11, 1
      %s208 = smul.u32 64, %s21
      %p209 = scmp.lt.s32.totalorder %s20, 3
      %s210 = scalar_select %p209, %s20, 3
      %p211 = scmp.lt.s32.totalorder %s208, 63
      %s212 = scalar_select %p211, %s208, 63
      %s213 = smul.addr %s210, 64
      %s214 = sadd.s32 %s212, %s213
      %s215 = smul.addr %s214, 4
      %s216 = scalar_lea.vmem %s0, %s215
      %p217 = pneg %p51
      %p218 = pneg %p48
      %p219 = scmp.lt.s32.totalorder %s20, 3
      %s220 = scalar_select %p219, %s20, 3
      %s221 = smul.addr %s220, 16
      %s222 = smul.addr %s221, 4
      %s223 = scalar_lea.vmem %s1, %s222
      %p224 = pneg %p77
      %p225 = pneg %p74
      %p226 = pneg %p105
      %p227 = pneg %p102
      %s228 = smul.u32 64, %s21
      %p229 = scmp.lt.s32.totalorder %s20, 3
      %s230 = scalar_select %p229, %s20, 3
      %p231 = scmp.lt.s32.totalorder %s228, 63
      %s232 = scalar_select %p231, %s228, 63
      %s233 = smul.addr %s230, 64
      %s234 = sadd.s32 %s232, %s233
      %s235 = smul.addr %s234, 8
      %s236 = scalar_lea.vmem %s2, %s235
      %p237 = pneg %p133
      %p238 = pneg %p130
      %p239 = scmp.lt.s32.totalorder %s20, 3
      %s240 = scalar_select %p239, %s20, 3
      %p241 = scmp.lt.s32.totalorder %s21, 0
      %s242 = scalar_select %p241, %s21, 0
      %s243 = sadd.s32 %s242, %s240
      %s244 = scalar_lea.vmem %s3, %s243
      %p245 = pneg %p161
      %p246 = pneg %p158
      %p247 = scmp.lt.s32.totalorder %s20, 3
      %s248 = scalar_select %p247, %s20, 3
      %p249 = scmp.lt.s32.totalorder %s21, 0
      %s250 = scalar_select %p249, %s21, 0
      %s251 = sadd.s32 %s250, %s248
      %s252 = scalar_lea.vmem %s4, %s251
      %s253 = smul.u32 64, %s21
      %p254 = scmp.lt.s32.totalorder %s20, 3
      %s255 = scalar_select %p254, %s20, 3
      %p256 = scmp.lt.s32.totalorder %s253, 63
      %s257 = scalar_select %p256, %s253, 63
      %s258 = smul.addr %s255, 64
      %s259 = sadd.s32 %s257, %s258
      %s260 = smul.addr %s259, 4
      %s261 = scalar_lea.vmem %s0, %s260
      %s262 = smul.u32 64, %s21
      %p263 = scmp.lt.s32.totalorder %s20, 3
      %s264 = scalar_select %p263, %s20, 3
      %s265 = smul.addr %s264, 16
      %s266 = smul.addr %s265, 4
      %s267 = scalar_lea.vmem %s1, %s266
      %s268 = smul.u32 64, %s21
      %p269 = scmp.lt.s32.totalorder %s20, 3
      %s270 = scalar_select %p269, %s20, 3
      %p271 = scmp.lt.s32.totalorder %s268, 63
      %s272 = scalar_select %p271, %s268, 63
      %s273 = smul.addr %s270, 64
      %s274 = sadd.s32 %s272, %s273
      %s275 = smul.addr %s274, 8
      %s276 = scalar_lea.vmem %s2, %s275
      %s277 = smul.u32 64, %s21
      %p278 = scmp.lt.s32.totalorder %s20, 3
      %s279 = scalar_select %p278, %s20, 3
      %p280 = scmp.lt.s32.totalorder %s21, 0
      %s281 = scalar_select %p280, %s21, 0
      %s282 = sadd.s32 %s281, %s279
      %s283 = scalar_lea.vmem %s3, %s282
      %p284 = scmp.lt.s32.totalorder %s20, 3
      %s285 = scalar_select %p284, %s20, 3
      %p286 = scmp.lt.s32.totalorder %s21, 0
      %s287 = scalar_select %p286, %s21, 0
      %s288 = sadd.s32 %s287, %s285
      %s289 = scalar_lea.vmem %s4, %s288
      %v291 = vld [vmem:[%s261] sm:$0xf]
      %v292 = vld [vmem:[%s261 + $0x4] sm:$0xf]
      %v293 = vld [vmem:[%s261 + $0x8] sm:$0xf]
      %v294 = vld [vmem:[%s261 + $0xc] sm:$0xf]
      %v295 = vld [vmem:[%s261 + $0x10] sm:$0xf]
      %v296 = vld [vmem:[%s261 + $0x14] sm:$0xf]
      %v297 = vld [vmem:[%s261 + $0x18] sm:$0xf]
      %v298 = vld [vmem:[%s261 + $0x1c] sm:$0xf]
      %v299 = vld [vmem:[%s261 + $0x20] sm:$0xf]
      %v300 = vld [vmem:[%s261 + $0x24] sm:$0xf]
      %v301 = vld [vmem:[%s261 + $0x28] sm:$0xf]
      %v302 = vld [vmem:[%s261 + $0x2c] sm:$0xf]
      %v303 = vld [vmem:[%s261 + $0x30] sm:$0xf]
      %v304 = vld [vmem:[%s261 + $0x34] sm:$0xf]
      %v305 = vld [vmem:[%s261 + $0x38] sm:$0xf]
      %v306 = vld [vmem:[%s261 + $0x3c] sm:$0xf]
      %v307 = vld [vmem:[%s261 + $0x40] sm:$0xf]
      %v308 = vld [vmem:[%s261 + $0x44] sm:$0xf]
      %v309 = vld [vmem:[%s261 + $0x48] sm:$0xf]
      %v310 = vld [vmem:[%s261 + $0x4c] sm:$0xf]
      %v311 = vld [vmem:[%s261 + $0x50] sm:$0xf]
      %v312 = vld [vmem:[%s261 + $0x54] sm:$0xf]
      %v313 = vld [vmem:[%s261 + $0x58] sm:$0xf]
      %v314 = vld [vmem:[%s261 + $0x5c] sm:$0xf]
      %v315 = vld [vmem:[%s261 + $0x60] sm:$0xf]
      %v316 = vld [vmem:[%s261 + $0x64] sm:$0xf]
      %v317 = vld [vmem:[%s261 + $0x68] sm:$0xf]
      %v318 = vld [vmem:[%s261 + $0x6c] sm:$0xf]
      %v319 = vld [vmem:[%s261 + $0x70] sm:$0xf]
      %v320 = vld [vmem:[%s261 + $0x74] sm:$0xf]
      %v321 = vld [vmem:[%s261 + $0x78] sm:$0xf]
      %v322 = vld [vmem:[%s261 + $0x7c] sm:$0xf]
      %v323 = vld [vmem:[%s261 + $0x80] sm:$0xf]
      %v324 = vld [vmem:[%s261 + $0x84] sm:$0xf]
      %v325 = vld [vmem:[%s261 + $0x88] sm:$0xf]
      %v326 = vld [vmem:[%s261 + $0x8c] sm:$0xf]
      %v327 = vld [vmem:[%s261 + $0x90] sm:$0xf]
      %v328 = vld [vmem:[%s261 + $0x94] sm:$0xf]
      %v329 = vld [vmem:[%s261 + $0x98] sm:$0xf]
      %v330 = vld [vmem:[%s261 + $0x9c] sm:$0xf]
      %v331 = vld [vmem:[%s261 + $0xa0] sm:$0xf]
      %v332 = vld [vmem:[%s261 + $0xa4] sm:$0xf]
      %v333 = vld [vmem:[%s261 + $0xa8] sm:$0xf]
      %v334 = vld [vmem:[%s261 + $0xac] sm:$0xf]
      %v335 = vld [vmem:[%s261 + $0xb0] sm:$0xf]
      %v336 = vld [vmem:[%s261 + $0xb4] sm:$0xf]
      %v337 = vld [vmem:[%s261 + $0xb8] sm:$0xf]
      %v338 = vld [vmem:[%s261 + $0xbc] sm:$0xf]
      %v339 = vld [vmem:[%s261 + $0xc0] sm:$0xf]
      %v340 = vld [vmem:[%s261 + $0xc4] sm:$0xf]
      %v341 = vld [vmem:[%s261 + $0xc8] sm:$0xf]
      %v342 = vld [vmem:[%s261 + $0xcc] sm:$0xf]
      %v343 = vld [vmem:[%s261 + $0xd0] sm:$0xf]
      %v344 = vld [vmem:[%s261 + $0xd4] sm:$0xf]
      %v345 = vld [vmem:[%s261 + $0xd8] sm:$0xf]
      %v346 = vld [vmem:[%s261 + $0xdc] sm:$0xf]
      %v347 = vld [vmem:[%s261 + $0xe0] sm:$0xf]
      %v348 = vld [vmem:[%s261 + $0xe4] sm:$0xf]
      %v349 = vld [vmem:[%s261 + $0xe8] sm:$0xf]
      %v350 = vld [vmem:[%s261 + $0xec] sm:$0xf]
      %v351 = vld [vmem:[%s261 + $0xf0] sm:$0xf]
      %v352 = vld [vmem:[%s261 + $0xf4] sm:$0xf]
      %v353 = vld [vmem:[%s261 + $0xf8] sm:$0xf]
      %v354 = vld [vmem:[%s261 + $0xfc] sm:$0xf]
      %v355 = vld [vmem:[%s267] sm:$0xf]
      %v356 = vld [vmem:[%s267 + $0x4] sm:$0xf]
      %v357 = vld [vmem:[%s267 + $0x8] sm:$0xf]
      %v358 = vld [vmem:[%s267 + $0xc] sm:$0xf]
      %v359 = vld [vmem:[%s267 + $0x10] sm:$0xf]
      %v360 = vld [vmem:[%s267 + $0x14] sm:$0xf]
      %v361 = vld [vmem:[%s267 + $0x18] sm:$0xf]
      %v362 = vld [vmem:[%s267 + $0x1c] sm:$0xf]
      %v363 = vld [vmem:[%s267 + $0x20] sm:$0xf]
      %v364 = vld [vmem:[%s267 + $0x24] sm:$0xf]
      %v365 = vld [vmem:[%s267 + $0x28] sm:$0xf]
      %v366 = vld [vmem:[%s267 + $0x2c] sm:$0xf]
      %v367 = vld [vmem:[%s267 + $0x30] sm:$0xf]
      %v368 = vld [vmem:[%s267 + $0x34] sm:$0xf]
      %v369 = vld [vmem:[%s267 + $0x38] sm:$0xf]
      %v370 = vld [vmem:[%s267 + $0x3c] sm:$0xf]
      %v435 = vunpack.c.l.b16 %v291
      %v436 = vunpack.c.l.b16 %v292
      %v437 = vunpack.c.l.b16 %v293
      %v438 = vunpack.c.l.b16 %v294
      %v439 = vunpack.c.l.b16 %v295
      %v440 = vunpack.c.l.b16 %v296
      %v441 = vunpack.c.l.b16 %v297
      %v442 = vunpack.c.l.b16 %v298
      %v443 = vunpack.c.l.b16 %v299
      %v444 = vunpack.c.l.b16 %v300
      %v445 = vunpack.c.l.b16 %v301
      %v446 = vunpack.c.l.b16 %v302
      %v447 = vunpack.c.l.b16 %v303
      %v448 = vunpack.c.l.b16 %v304
      %v449 = vunpack.c.l.b16 %v305
      %v450 = vunpack.c.l.b16 %v306
      %v451 = vunpack.c.l.b16 %v307
      %v452 = vunpack.c.l.b16 %v308
      %v453 = vunpack.c.l.b16 %v309
      %v454 = vunpack.c.l.b16 %v310
      %v455 = vunpack.c.l.b16 %v311
      %v456 = vunpack.c.l.b16 %v312
      %v457 = vunpack.c.l.b16 %v313
      %v458 = vunpack.c.l.b16 %v314
      %v459 = vunpack.c.l.b16 %v315
      %v460 = vunpack.c.l.b16 %v316
      %v461 = vunpack.c.l.b16 %v317
      %v462 = vunpack.c.l.b16 %v318
      %v463 = vunpack.c.l.b16 %v319
      %v464 = vunpack.c.l.b16 %v320
      %v465 = vunpack.c.l.b16 %v321
      %v466 = vunpack.c.l.b16 %v322
      %v467 = vunpack.c.l.b16 %v323
      %v468 = vunpack.c.l.b16 %v324
      %v469 = vunpack.c.l.b16 %v325
      %v470 = vunpack.c.l.b16 %v326
      %v471 = vunpack.c.l.b16 %v327
      %v472 = vunpack.c.l.b16 %v328
      %v473 = vunpack.c.l.b16 %v329
      %v474 = vunpack.c.l.b16 %v330
      %v475 = vunpack.c.l.b16 %v331
      %v476 = vunpack.c.l.b16 %v332
      %v477 = vunpack.c.l.b16 %v333
      %v478 = vunpack.c.l.b16 %v334
      %v479 = vunpack.c.l.b16 %v335
      %v480 = vunpack.c.l.b16 %v336
      %v481 = vunpack.c.l.b16 %v337
      %v482 = vunpack.c.l.b16 %v338
      %v483 = vunpack.c.l.b16 %v339
      %v484 = vunpack.c.l.b16 %v340
      %v485 = vunpack.c.l.b16 %v341
      %v486 = vunpack.c.l.b16 %v342
      %v487 = vunpack.c.l.b16 %v343
      %v488 = vunpack.c.l.b16 %v344
      %v489 = vunpack.c.l.b16 %v345
      %v490 = vunpack.c.l.b16 %v346
      %v491 = vunpack.c.l.b16 %v347
      %v492 = vunpack.c.l.b16 %v348
      %v493 = vunpack.c.l.b16 %v349
      %v494 = vunpack.c.l.b16 %v350
      %v495 = vunpack.c.l.b16 %v351
      %v496 = vunpack.c.l.b16 %v352
      %v497 = vunpack.c.l.b16 %v353
      %v498 = vunpack.c.l.b16 %v354
      %v499 = vpack.c.b16 %v436, %v435
      %v500 = vpack.c.b16 %v438, %v437
      %v501 = vpack.c.b16 %v440, %v439
      %v502 = vpack.c.b16 %v442, %v441
      %v503 = vpack.c.b16 %v444, %v443
      %v504 = vpack.c.b16 %v446, %v445
      %v505 = vpack.c.b16 %v448, %v447
      %v506 = vpack.c.b16 %v450, %v449
      %v507 = vpack.c.b16 %v452, %v451
      %v508 = vpack.c.b16 %v454, %v453
      %v509 = vpack.c.b16 %v456, %v455
      %v510 = vpack.c.b16 %v458, %v457
      %v511 = vpack.c.b16 %v460, %v459
      %v512 = vpack.c.b16 %v462, %v461
      %v513 = vpack.c.b16 %v464, %v463
      %v514 = vpack.c.b16 %v466, %v465
      %v515 = vpack.c.b16 %v468, %v467
      %v516 = vpack.c.b16 %v470, %v469
      %v517 = vpack.c.b16 %v472, %v471
      %v518 = vpack.c.b16 %v474, %v473
      %v519 = vpack.c.b16 %v476, %v475
      %v520 = vpack.c.b16 %v478, %v477
      %v521 = vpack.c.b16 %v480, %v479
      %v522 = vpack.c.b16 %v482, %v481
      %v523 = vpack.c.b16 %v484, %v483
      %v524 = vpack.c.b16 %v486, %v485
      %v525 = vpack.c.b16 %v488, %v487
      %v526 = vpack.c.b16 %v490, %v489
      %v527 = vpack.c.b16 %v492, %v491
      %v528 = vpack.c.b16 %v494, %v493
      %v529 = vpack.c.b16 %v496, %v495
      %v530 = vpack.c.b16 %v498, %v497
      %v579 = vunpack.c.l.b16 %v355
      %v580 = vunpack.c.l.b16 %v356
      %v581 = vunpack.c.l.b16 %v357
      %v582 = vunpack.c.l.b16 %v358
      %v583 = vunpack.c.l.b16 %v359
      %v584 = vunpack.c.l.b16 %v360
      %v585 = vunpack.c.l.b16 %v361
      %v586 = vunpack.c.l.b16 %v362
      %v587 = vunpack.c.l.b16 %v363
      %v588 = vunpack.c.l.b16 %v364
      %v589 = vunpack.c.l.b16 %v365
      %v590 = vunpack.c.l.b16 %v366
      %v591 = vunpack.c.l.b16 %v367
      %v592 = vunpack.c.l.b16 %v368
      %v593 = vunpack.c.l.b16 %v369
      %v594 = vunpack.c.l.b16 %v370
      %v595 = vpack.c.b16 %v580, %v579
      %v596 = vpack.c.b16 %v582, %v581
      %v597 = vpack.c.b16 %v584, %v583
      %v598 = vpack.c.b16 %v586, %v585
      %v599 = vpack.c.b16 %v588, %v587
      %v600 = vpack.c.b16 %v590, %v589
      %v601 = vpack.c.b16 %v592, %v591
      %v602 = vpack.c.b16 %v594, %v593
      %611 = vmatprep.subr.bf16.mxu0 0
      %612 = vmatpush1.bf16.msra.mxu0 %v595
      %613 = vmatprep.subr.bf16.mxu0 0
      %614 = vmatpush1.bf16.msra.mxu0 %v596
      %615 = vmatprep.subr.bf16.mxu0 0
      %616 = vmatpush1.bf16.msra.mxu0 %v597
      %617 = vmatprep.subr.bf16.mxu0 0
      %618 = vmatpush1.bf16.msra.mxu0 %v598
      %619 = vmatprep.subr.bf16.mxu0 0
      %620 = vmatpush1.bf16.msra.mxu0 %v599
      %621 = vmatprep.subr.bf16.mxu0 0
      %622 = vmatpush1.bf16.msra.mxu0 %v600
      %623 = vmatprep.subr.bf16.mxu0 0
      %624 = vmatpush1.bf16.msra.mxu0 %v601
      %625 = vmatprep.subr.bf16.mxu0 0
      %626 = vmatpush1.bf16.msra.mxu0 %v602
      %627 = vmatprep.subr.bf16.mxu0 0
      %628 = vmatpush1.bf16.msra.mxu0 0
      %629 = vmatprep.subr.bf16.mxu0 0
      %630 = vmatpush1.bf16.msra.mxu0 0
      %631 = vmatprep.subr.bf16.mxu0 0
      %632 = vmatpush1.bf16.msra.mxu0 0
      %633 = vmatprep.subr.bf16.mxu0 0
      %634 = vmatpush1.bf16.msra.mxu0 0
      %635 = vmatprep.subr.bf16.mxu0 0
      %636 = vmatpush1.bf16.msra.mxu0 0
      %637 = vmatprep.subr.bf16.mxu0 0
      %638 = vmatpush1.bf16.msra.mxu0 0
      %639 = vmatprep.subr.bf16.mxu0 0
      %640 = vmatpush1.bf16.msra.mxu0 0
      %641 = vmatprep.subr.bf16.mxu0 0
      %642 = vmatpush1.bf16.msra.mxu0 0
      %643 = vmatprep.mubr.bf16.mxu0 0
      %644 = vmatmul.mubr.bf16.gmra.mrb[0].mxu0 %v499
      %v645 = vpop.f32.mrb[0].mxu0
      %v646 = vadd.f32 0.0, %v645
      %v647 = vpop.f32.mrb[0].mxu0
      %v648 = vpop.f32.mrb[0].mxu0
      %v649 = vadd.f32 0.0, %v648
      %v650 = vpop.f32.mrb[0].mxu0
      %651 = vmatprep.mubr.bf16.mxu0 0
      %652 = vmatmul.mubr.bf16.gmra.mrb[0].mxu0 %v500
      %v653 = vpop.f32.mrb[0].mxu0
      %v654 = vadd.f32 0.0, %v653
      %v655 = vpop.f32.mrb[0].mxu0
      %v656 = vpop.f32.mrb[0].mxu0
      %v657 = vadd.f32 0.0, %v656
      %v658 = vpop.f32.mrb[0].mxu0
      %659 = vmatprep.mubr.bf16.mxu0 0
      %660 = vmatmul.mubr.bf16.gmra.mrb[0].mxu0 %v501
      %v661 = vpop.f32.mrb[0].mxu0
      %v662 = vadd.f32 0.0, %v661
      %v663 = vpop.f32.mrb[0].mxu0
      %v664 = vpop.f32.mrb[0].mxu0
      %v665 = vadd.f32 0.0, %v664
      %v666 = vpop.f32.mrb[0].mxu0
      %667 = vmatprep.mubr.bf16.mxu0 0
      %668 = vmatmul.mubr.bf16.gmra.mrb[0].mxu0 %v502
      %v669 = vpop.f32.mrb[0].mxu0
      %v670 = vadd.f32 0.0, %v669
      %v671 = vpop.f32.mrb[0].mxu0
      %v672 = vpop.f32.mrb[0].mxu0
      %v673 = vadd.f32 0.0, %v672
      %v674 = vpop.f32.mrb[0].mxu0
      %675 = vmatprep.mubr.bf16.mxu0 0
      %676 = vmatmul.mubr.bf16.gmra.mrb[0].mxu0 %v503
      %v677 = vpop.f32.mrb[0].mxu0
      %v678 = vadd.f32 0.0, %v677
      %v679 = vpop.f32.mrb[0].mxu0
      %v680 = vpop.f32.mrb[0].mxu0
      %v681 = vadd.f32 0.0, %v680
      %v682 = vpop.f32.mrb[0].mxu0
      %683 = vmatprep.mubr.bf16.mxu0 0
      %684 = vmatmul.mubr.bf16.gmra.mrb[0].mxu0 %v504
      %v685 = vpop.f32.mrb[0].mxu0
      %v686 = vadd.f32 0.0, %v685
      %v687 = vpop.f32.mrb[0].mxu0
      %v688 = vpop.f32.mrb[0].mxu0
      %v689 = vadd.f32 0.0, %v688
      %v690 = vpop.f32.mrb[0].mxu0
      %691 = vmatprep.mubr.bf16.mxu0 0
      %692 = vmatmul.mubr.bf16.gmra.mrb[0].mxu0 %v505
      %v693 = vpop.f32.mrb[0].mxu0
      %v694 = vadd.f32 0.0, %v693
      %v695 = vpop.f32.mrb[0].mxu0
      %v696 = vpop.f32.mrb[0].mxu0
      %v697 = vadd.f32 0.0, %v696
      %v698 = vpop.f32.mrb[0].mxu0
      %699 = vmatprep.mubr.bf16.mxu0 0
      %700 = vmatmul.mubr.bf16.gmra.mrb[0].mxu0 %v506
      %v701 = vpop.f32.mrb[0].mxu0
      %v702 = vadd.f32 0.0, %v701
      %v703 = vpop.f32.mrb[0].mxu0
      %v704 = vpop.f32.mrb[0].mxu0
      %v705 = vadd.f32 0.0, %v704
      %v706 = vpop.f32.mrb[0].mxu0
      %707 = vmatprep.mubr.bf16.mxu0 0
      %708 = vmatmul.mubr.bf16.gmra.mrb[0].mxu0 %v507
      %v709 = vpop.f32.mrb[0].mxu0
      %v710 = vadd.f32 0.0, %v709
      %v711 = vpop.f32.mrb[0].mxu0
      %v712 = vpop.f32.mrb[0].mxu0
      %v713 = vadd.f32 0.0, %v712
      %v714 = vpop.f32.mrb[0].mxu0
      %715 = vmatprep.mubr.bf16.mxu0 0
      %716 = vmatmul.mubr.bf16.gmra.mrb[0].mxu0 %v508
      %v717 = vpop.f32.mrb[0].mxu0
      %v718 = vadd.f32 0.0, %v717
      %v719 = vpop.f32.mrb[0].mxu0
      %v720 = vpop.f32.mrb[0].mxu0
      %v721 = vadd.f32 0.0, %v720
      %v722 = vpop.f32.mrb[0].mxu0
      %723 = vmatprep.mubr.bf16.mxu0 0
      %724 = vmatmul.mubr.bf16.gmra.mrb[0].mxu0 %v509
      %v725 = vpop.f32.mrb[0].mxu0
      %v726 = vadd.f32 0.0, %v725
      %v727 = vpop.f32.mrb[0].mxu0
      %v728 = vpop.f32.mrb[0].mxu0
      %v729 = vadd.f32 0.0, %v728
      %v730 = vpop.f32.mrb[0].mxu0
      %731 = vmatprep.mubr.bf16.mxu0 0
      %732 = vmatmul.mubr.bf16.gmra.mrb[0].mxu0 %v510
      %v733 = vpop.f32.mrb[0].mxu0
      %v734 = vadd.f32 0.0, %v733
      %v735 = vpop.f32.mrb[0].mxu0
      %v736 = vpop.f32.mrb[0].mxu0
      %v737 = vadd.f32 0.0, %v736
      %v738 = vpop.f32.mrb[0].mxu0
      %739 = vmatprep.mubr.bf16.mxu0 0
      %740 = vmatmul.mubr.bf16.gmra.mrb[0].mxu0 %v511
      %v741 = vpop.f32.mrb[0].mxu0
      %v742 = vadd.f32 0.0, %v741
      %v743 = vpop.f32.mrb[0].mxu0
      %v744 = vpop.f32.mrb[0].mxu0
      %v745 = vadd.f32 0.0, %v744
      %v746 = vpop.f32.mrb[0].mxu0
      %747 = vmatprep.mubr.bf16.mxu0 0
      %748 = vmatmul.mubr.bf16.gmra.mrb[0].mxu0 %v512
      %v749 = vpop.f32.mrb[0].mxu0
      %v750 = vadd.f32 0.0, %v749
      %v751 = vpop.f32.mrb[0].mxu0
      %v752 = vpop.f32.mrb[0].mxu0
      %v753 = vadd.f32 0.0, %v752
      %v754 = vpop.f32.mrb[0].mxu0
      %755 = vmatprep.mubr.bf16.mxu0 0
      %756 = vmatmul.mubr.bf16.gmra.mrb[0].mxu0 %v513
      %v757 = vpop.f32.mrb[0].mxu0
      %v758 = vadd.f32 0.0, %v757
      %v759 = vpop.f32.mrb[0].mxu0
      %v760 = vpop.f32.mrb[0].mxu0
      %v761 = vadd.f32 0.0, %v760
      %v762 = vpop.f32.mrb[0].mxu0
      %763 = vmatprep.mubr.bf16.mxu0 0
      %764 = vmatmul.mubr.bf16.gmra.mrb[0].mxu0 %v514
      %v765 = vpop.f32.mrb[0].mxu0
      %v766 = vadd.f32 0.0, %v765
      %v767 = vpop.f32.mrb[0].mxu0
      %v768 = vpop.f32.mrb[0].mxu0
      %v769 = vadd.f32 0.0, %v768
      %v770 = vpop.f32.mrb[0].mxu0
      %771 = vmatprep.mubr.bf16.mxu0 0
      %772 = vmatmul.mubr.bf16.gmra.mrb[0].mxu0 %v515
      %v773 = vpop.f32.mrb[0].mxu0
      %v774 = vadd.f32 0.0, %v773
      %v775 = vpop.f32.mrb[0].mxu0
      %v776 = vpop.f32.mrb[0].mxu0
      %v777 = vadd.f32 0.0, %v776
      %v778 = vpop.f32.mrb[0].mxu0
      %779 = vmatprep.mubr.bf16.mxu0 0
      %780 = vmatmul.mubr.bf16.gmra.mrb[0].mxu0 %v516
      %v781 = vpop.f32.mrb[0].mxu0
      %v782 = vadd.f32 0.0, %v781
      %v783 = vpop.f32.mrb[0].mxu0
      %v784 = vpop.f32.mrb[0].mxu0
      %v785 = vadd.f32 0.0, %v784
      %v786 = vpop.f32.mrb[0].mxu0
      %787 = vmatprep.mubr.bf16.mxu0 0
      %788 = vmatmul.mubr.bf16.gmra.mrb[0].mxu0 %v517
      %v789 = vpop.f32.mrb[0].mxu0
      %v790 = vadd.f32 0.0, %v789
      %v791 = vpop.f32.mrb[0].mxu0
      %v792 = vpop.f32.mrb[0].mxu0
      %v793 = vadd.f32 0.0, %v792
      %v794 = vpop.f32.mrb[0].mxu0
      %795 = vmatprep.mubr.bf16.mxu0 0
      %796 = vmatmul.mubr.bf16.gmra.mrb[0].mxu0 %v518
      %v797 = vpop.f32.mrb[0].mxu0
      %v798 = vadd.f32 0.0, %v797
      %v799 = vpop.f32.mrb[0].mxu0
      %v800 = vpop.f32.mrb[0].mxu0
      %v801 = vadd.f32 0.0, %v800
      %v802 = vpop.f32.mrb[0].mxu0
      %803 = vmatprep.mubr.bf16.mxu0 0
      %804 = vmatmul.mubr.bf16.gmra.mrb[0].mxu0 %v519
      %v805 = vpop.f32.mrb[0].mxu0
      %v806 = vadd.f32 0.0, %v805
      %v807 = vpop.f32.mrb[0].mxu0
      %v808 = vpop.f32.mrb[0].mxu0
      %v809 = vadd.f32 0.0, %v808
      %v810 = vpop.f32.mrb[0].mxu0
      %811 = vmatprep.mubr.bf16.mxu0 0
      %812 = vmatmul.mubr.bf16.gmra.mrb[0].mxu0 %v520
      %v813 = vpop.f32.mrb[0].mxu0
      %v814 = vadd.f32 0.0, %v813
      %v815 = vpop.f32.mrb[0].mxu0
      %v816 = vpop.f32.mrb[0].mxu0
      %v817 = vadd.f32 0.0, %v816
      %v818 = vpop.f32.mrb[0].mxu0
      %819 = vmatprep.mubr.bf16.mxu0 0
      %820 = vmatmul.mubr.bf16.gmra.mrb[0].mxu0 %v521
      %v821 = vpop.f32.mrb[0].mxu0
      %v822 = vadd.f32 0.0, %v821
      %v823 = vpop.f32.mrb[0].mxu0
      %v824 = vpop.f32.mrb[0].mxu0
      %v825 = vadd.f32 0.0, %v824
      %v826 = vpop.f32.mrb[0].mxu0
      %827 = vmatprep.mubr.bf16.mxu0 0
      %828 = vmatmul.mubr.bf16.gmra.mrb[0].mxu0 %v522
      %v829 = vpop.f32.mrb[0].mxu0
      %v830 = vadd.f32 0.0, %v829
      %v831 = vpop.f32.mrb[0].mxu0
      %v832 = vpop.f32.mrb[0].mxu0
      %v833 = vadd.f32 0.0, %v832
      %v834 = vpop.f32.mrb[0].mxu0
      %835 = vmatprep.mubr.bf16.mxu0 0
      %836 = vmatmul.mubr.bf16.gmra.mrb[0].mxu0 %v523
      %v837 = vpop.f32.mrb[0].mxu0
      %v838 = vadd.f32 0.0, %v837
      %v839 = vpop.f32.mrb[0].mxu0
      %v840 = vpop.f32.mrb[0].mxu0
      %v841 = vadd.f32 0.0, %v840
      %v842 = vpop.f32.mrb[0].mxu0
      %843 = vmatprep.mubr.bf16.mxu0 0
      %844 = vmatmul.mubr.bf16.gmra.mrb[0].mxu0 %v524
      %v845 = vpop.f32.mrb[0].mxu0
      %v846 = vadd.f32 0.0, %v845
      %v847 = vpop.f32.mrb[0].mxu0
      %v848 = vpop.f32.mrb[0].mxu0
      %v849 = vadd.f32 0.0, %v848
      %v850 = vpop.f32.mrb[0].mxu0
      %851 = vmatprep.mubr.bf16.mxu0 0
      %852 = vmatmul.mubr.bf16.gmra.mrb[0].mxu0 %v525
      %v853 = vpop.f32.mrb[0].mxu0
      %v854 = vadd.f32 0.0, %v853
      %v855 = vpop.f32.mrb[0].mxu0
      %v856 = vpop.f32.mrb[0].mxu0
      %v857 = vadd.f32 0.0, %v856
      %v858 = vpop.f32.mrb[0].mxu0
      %859 = vmatprep.mubr.bf16.mxu0 0
      %860 = vmatmul.mubr.bf16.gmra.mrb[0].mxu0 %v526
      %v861 = vpop.f32.mrb[0].mxu0
      %v862 = vadd.f32 0.0, %v861
      %v863 = vpop.f32.mrb[0].mxu0
      %v864 = vpop.f32.mrb[0].mxu0
      %v865 = vadd.f32 0.0, %v864
      %v866 = vpop.f32.mrb[0].mxu0
      %867 = vmatprep.mubr.bf16.mxu0 0
      %868 = vmatmul.mubr.bf16.gmra.mrb[0].mxu0 %v527
      %v869 = vpop.f32.mrb[0].mxu0
      %v870 = vadd.f32 0.0, %v869
      %v871 = vpop.f32.mrb[0].mxu0
      %v872 = vpop.f32.mrb[0].mxu0
      %v873 = vadd.f32 0.0, %v872
      %v874 = vpop.f32.mrb[0].mxu0
      %875 = vmatprep.mubr.bf16.mxu0 0
      %876 = vmatmul.mubr.bf16.gmra.mrb[0].mxu0 %v528
      %v877 = vpop.f32.mrb[0].mxu0
      %v878 = vadd.f32 0.0, %v877
      %v879 = vpop.f32.mrb[0].mxu0
      %v880 = vpop.f32.mrb[0].mxu0
      %v881 = vadd.f32 0.0, %v880
      %v882 = vpop.f32.mrb[0].mxu0
      %883 = vmatprep.mubr.bf16.mxu0 0
      %884 = vmatmul.mubr.bf16.gmra.mrb[0].mxu0 %v529
      %v885 = vpop.f32.mrb[0].mxu0
      %v886 = vadd.f32 0.0, %v885
      %v887 = vpop.f32.mrb[0].mxu0
      %v888 = vpop.f32.mrb[0].mxu0
      %v889 = vadd.f32 0.0, %v888
      %v890 = vpop.f32.mrb[0].mxu0
      %891 = vmatprep.mubr.bf16.mxu0 0
      %892 = vmatmul.mubr.bf16.gmra.mrb[0].mxu0 %v530
      %v893 = vpop.f32.mrb[0].mxu0
      %v894 = vadd.f32 0.0, %v893
      %v895 = vpop.f32.mrb[0].mxu0
      %v896 = vpop.f32.mrb[0].mxu0
      %v897 = vadd.f32 0.0, %v896
      %v898 = vpop.f32.mrb[0].mxu0
      %899 = vdwg.mxu0
      %900 = vst [vmem:[%s276] sm:$0xff] %v646
      %901 = vst [vmem:[%s276 + $0x8] sm:$0xff] %v649
      %902 = vst [vmem:[%s276 + $0x10] sm:$0xff] %v654
      %903 = vst [vmem:[%s276 + $0x18] sm:$0xff] %v657
      %904 = vst [vmem:[%s276 + $0x20] sm:$0xff] %v662
      %905 = vst [vmem:[%s276 + $0x28] sm:$0xff] %v665
      %906 = vst [vmem:[%s276 + $0x30] sm:$0xff] %v670
      %907 = vst [vmem:[%s276 + $0x38] sm:$0xff] %v673
      %908 = vst [vmem:[%s276 + $0x40] sm:$0xff] %v678
      %909 = vst [vmem:[%s276 + $0x48] sm:$0xff] %v681
      %910 = vst [vmem:[%s276 + $0x50] sm:$0xff] %v686
      %911 = vst [vmem:[%s276 + $0x58] sm:$0xff] %v689
      %912 = vst [vmem:[%s276 + $0x60] sm:$0xff] %v694
      %913 = vst [vmem:[%s276 + $0x68] sm:$0xff] %v697
      %914 = vst [vmem:[%s276 + $0x70] sm:$0xff] %v702
      %915 = vst [vmem:[%s276 + $0x78] sm:$0xff] %v705
      %916 = vst [vmem:[%s276 + $0x80] sm:$0xff] %v710
      %917 = vst [vmem:[%s276 + $0x88] sm:$0xff] %v713
      %918 = vst [vmem:[%s276 + $0x90] sm:$0xff] %v718
      %919 = vst [vmem:[%s276 + $0x98] sm:$0xff] %v721
      %920 = vst [vmem:[%s276 + $0xa0] sm:$0xff] %v726
      %921 = vst [vmem:[%s276 + $0xa8] sm:$0xff] %v729
      %922 = vst [vmem:[%s276 + $0xb0] sm:$0xff] %v734
      %923 = vst [vmem:[%s276 + $0xb8] sm:$0xff] %v737
      %924 = vst [vmem:[%s276 + $0xc0] sm:$0xff] %v742
      %925 = vst [vmem:[%s276 + $0xc8] sm:$0xff] %v745
      %926 = vst [vmem:[%s276 + $0xd0] sm:$0xff] %v750
      %927 = vst [vmem:[%s276 + $0xd8] sm:$0xff] %v753
      %928 = vst [vmem:[%s276 + $0xe0] sm:$0xff] %v758
      %929 = vst [vmem:[%s276 + $0xe8] sm:$0xff] %v761
      %930 = vst [vmem:[%s276 + $0xf0] sm:$0xff] %v766
      %931 = vst [vmem:[%s276 + $0xf8] sm:$0xff] %v769
      %932 = vst [vmem:[%s276 + $0x100] sm:$0xff] %v774
      %933 = vst [vmem:[%s276 + $0x108] sm:$0xff] %v777
      %934 = vst [vmem:[%s276 + $0x110] sm:$0xff] %v782
      %935 = vst [vmem:[%s276 + $0x118] sm:$0xff] %v785
      %936 = vst [vmem:[%s276 + $0x120] sm:$0xff] %v790
      %937 = vst [vmem:[%s276 + $0x128] sm:$0xff] %v793
      %938 = vst [vmem:[%s276 + $0x130] sm:$0xff] %v798
      %939 = vst [vmem:[%s276 + $0x138] sm:$0xff] %v801
      %940 = vst [vmem:[%s276 + $0x140] sm:$0xff] %v806
      %941 = vst [vmem:[%s276 + $0x148] sm:$0xff] %v809
      %942 = vst [vmem:[%s276 + $0x150] sm:$0xff] %v814
      %943 = vst [vmem:[%s276 + $0x158] sm:$0xff] %v817
      %944 = vst [vmem:[%s276 + $0x160] sm:$0xff] %v822
      %945 = vst [vmem:[%s276 + $0x168] sm:$0xff] %v825
      %946 = vst [vmem:[%s276 + $0x170] sm:$0xff] %v830
      %947 = vst [vmem:[%s276 + $0x178] sm:$0xff] %v833
      %948 = vst [vmem:[%s276 + $0x180] sm:$0xff] %v838
      %949 = vst [vmem:[%s276 + $0x188] sm:$0xff] %v841
      %950 = vst [vmem:[%s276 + $0x190] sm:$0xff] %v846
      %951 = vst [vmem:[%s276 + $0x198] sm:$0xff] %v849
      %952 = vst [vmem:[%s276 + $0x1a0] sm:$0xff] %v854
      %953 = vst [vmem:[%s276 + $0x1a8] sm:$0xff] %v857
      %954 = vst [vmem:[%s276 + $0x1b0] sm:$0xff] %v862
      %955 = vst [vmem:[%s276 + $0x1b8] sm:$0xff] %v865
      %956 = vst [vmem:[%s276 + $0x1c0] sm:$0xff] %v870
      %957 = vst [vmem:[%s276 + $0x1c8] sm:$0xff] %v873
      %958 = vst [vmem:[%s276 + $0x1d0] sm:$0xff] %v878
      %959 = vst [vmem:[%s276 + $0x1d8] sm:$0xff] %v881
      %960 = vst [vmem:[%s276 + $0x1e0] sm:$0xff] %v886
      %961 = vst [vmem:[%s276 + $0x1e8] sm:$0xff] %v889
      %962 = vst [vmem:[%s276 + $0x1f0] sm:$0xff] %v894
      %963 = vst [vmem:[%s276 + $0x1f8] sm:$0xff] %v897
      %v964 = vadd.f32 %v646, %v649
      %v965 = vadd.f32 %v964, %v654
      %v966 = vadd.f32 %v965, %v657
      %v967 = vadd.f32 %v966, %v662
      %v968 = vadd.f32 %v967, %v665
      %v969 = vadd.f32 %v968, %v670
      %v970 = vadd.f32 %v969, %v673
      %v971 = vadd.f32 %v970, %v678
      %v972 = vadd.f32 %v971, %v681
      %v973 = vadd.f32 %v972, %v686
      %v974 = vadd.f32 %v973, %v689
      %v975 = vadd.f32 %v974, %v694
      %v976 = vadd.f32 %v975, %v697
      %v977 = vadd.f32 %v976, %v702
      %v978 = vadd.f32 %v977, %v705
      %v979 = vadd.f32 %v978, %v710
      %v980 = vadd.f32 %v979, %v713
      %v981 = vadd.f32 %v980, %v718
      %v982 = vadd.f32 %v981, %v721
      %v983 = vadd.f32 %v982, %v726
      %v984 = vadd.f32 %v983, %v729
      %v985 = vadd.f32 %v984, %v734
      %v986 = vadd.f32 %v985, %v737
      %v987 = vadd.f32 %v986, %v742
      %v988 = vadd.f32 %v987, %v745
      %v989 = vadd.f32 %v988, %v750
      %v990 = vadd.f32 %v989, %v753
      %v991 = vadd.f32 %v990, %v758
      %v992 = vadd.f32 %v991, %v761
      %v993 = vadd.f32 %v992, %v766
      %v994 = vadd.f32 %v993, %v769
      %v995 = vadd.f32 %v994, %v774
      %v996 = vadd.f32 %v995, %v777
      %v997 = vadd.f32 %v996, %v782
      %v998 = vadd.f32 %v997, %v785
      %v999 = vadd.f32 %v998, %v790
      %v1000 = vadd.f32 %v999, %v793
      %v1001 = vadd.f32 %v1000, %v798
      %v1002 = vadd.f32 %v1001, %v801
      %v1003 = vadd.f32 %v1002, %v806
      %v1004 = vadd.f32 %v1003, %v809
      %v1005 = vadd.f32 %v1004, %v814
      %v1006 = vadd.f32 %v1005, %v817
      %v1007 = vadd.f32 %v1006, %v822
      %v1008 = vadd.f32 %v1007, %v825
      %v1009 = vadd.f32 %v1008, %v830
      %v1010 = vadd.f32 %v1009, %v833
      %v1011 = vadd.f32 %v1010, %v838
      %v1012 = vadd.f32 %v1011, %v841
      %v1013 = vadd.f32 %v1012, %v846
      %v1014 = vadd.f32 %v1013, %v849
      %v1015 = vadd.f32 %v1014, %v854
      %v1016 = vadd.f32 %v1015, %v857
      %v1017 = vadd.f32 %v1016, %v862
      %v1018 = vadd.f32 %v1017, %v865
      %v1019 = vadd.f32 %v1018, %v870
      %v1020 = vadd.f32 %v1019, %v873
      %v1021 = vadd.f32 %v1020, %v878
      %v1022 = vadd.f32 %v1021, %v881
      %v1023 = vadd.f32 %v1022, %v886
      %v1024 = vadd.f32 %v1023, %v889
      %v1025 = vadd.f32 %v1024, %v894
      %v1026 = vadd.f32 %v1025, %v897
      %v1027 = vrot.slane %v1026, 4
      %v1028 = vadd.f32 %v1026, %v1027
      %v1029 = vrot.slane %v1028, 2
      %v1030 = vadd.f32 %v1028, %v1029
      %v1031 = vrot.slane %v1030, 1
      %v1032 = vadd.f32 %v1030, %v1031
      %1033 = vst [vmem:[%s283] sm:$0x1] %v1032
      %v1034 = vmul.f32 %v646, %v646
      %v1035 = vmul.f32 %v649, %v649
      %v1036 = vmul.f32 %v654, %v654
      %v1037 = vmul.f32 %v657, %v657
      %v1038 = vmul.f32 %v662, %v662
      %v1039 = vmul.f32 %v665, %v665
      %v1040 = vmul.f32 %v670, %v670
      %v1041 = vmul.f32 %v673, %v673
      %v1042 = vmul.f32 %v678, %v678
      %v1043 = vmul.f32 %v681, %v681
      %v1044 = vmul.f32 %v686, %v686
      %v1045 = vmul.f32 %v689, %v689
      %v1046 = vmul.f32 %v694, %v694
      %v1047 = vmul.f32 %v697, %v697
      %v1048 = vmul.f32 %v702, %v702
      %v1049 = vmul.f32 %v705, %v705
      %v1050 = vmul.f32 %v710, %v710
      %v1051 = vmul.f32 %v713, %v713
      %v1052 = vmul.f32 %v718, %v718
      %v1053 = vmul.f32 %v721, %v721
      %v1054 = vmul.f32 %v726, %v726
      %v1055 = vmul.f32 %v729, %v729
      %v1056 = vmul.f32 %v734, %v734
      %v1057 = vmul.f32 %v737, %v737
      %v1058 = vmul.f32 %v742, %v742
      %v1059 = vmul.f32 %v745, %v745
      %v1060 = vmul.f32 %v750, %v750
      %v1061 = vmul.f32 %v753, %v753
      %v1062 = vmul.f32 %v758, %v758
      %v1063 = vmul.f32 %v761, %v761
      %v1064 = vmul.f32 %v766, %v766
      %v1065 = vmul.f32 %v769, %v769
      %v1066 = vmul.f32 %v774, %v774
      %v1067 = vmul.f32 %v777, %v777
      %v1068 = vmul.f32 %v782, %v782
      %v1069 = vmul.f32 %v785, %v785
      %v1070 = vmul.f32 %v790, %v790
      %v1071 = vmul.f32 %v793, %v793
      %v1072 = vmul.f32 %v798, %v798
      %v1073 = vmul.f32 %v801, %v801
      %v1074 = vmul.f32 %v806, %v806
      %v1075 = vmul.f32 %v809, %v809
      %v1076 = vmul.f32 %v814, %v814
      %v1077 = vmul.f32 %v817, %v817
      %v1078 = vmul.f32 %v822, %v822
      %v1079 = vmul.f32 %v825, %v825
      %v1080 = vmul.f32 %v830, %v830
      %v1081 = vmul.f32 %v833, %v833
      %v1082 = vmul.f32 %v838, %v838
      %v1083 = vmul.f32 %v841, %v841
      %v1084 = vmul.f32 %v846, %v846
      %v1085 = vmul.f32 %v849, %v849
      %v1086 = vmul.f32 %v854, %v854
      %v1087 = vmul.f32 %v857, %v857
      %v1088 = vmul.f32 %v862, %v862
      %v1089 = vmul.f32 %v865, %v865
      %v1090 = vmul.f32 %v870, %v870
      %v1091 = vmul.f32 %v873, %v873
      %v1092 = vmul.f32 %v878, %v878
      %v1093 = vmul.f32 %v881, %v881
      %v1094 = vmul.f32 %v886, %v886
      %v1095 = vmul.f32 %v889, %v889
      %v1096 = vmul.f32 %v894, %v894
      %v1097 = vmul.f32 %v897, %v897
      %v1098 = vadd.f32 %v1034, %v1035
      %v1099 = vadd.f32 %v1098, %v1036
      %v1100 = vadd.f32 %v1099, %v1037
      %v1101 = vadd.f32 %v1100, %v1038
      %v1102 = vadd.f32 %v1101, %v1039
      %v1103 = vadd.f32 %v1102, %v1040
      %v1104 = vadd.f32 %v1103, %v1041
      %v1105 = vadd.f32 %v1104, %v1042
      %v1106 = vadd.f32 %v1105, %v1043
      %v1107 = vadd.f32 %v1106, %v1044
      %v1108 = vadd.f32 %v1107, %v1045
      %v1109 = vadd.f32 %v1108, %v1046
      %v1110 = vadd.f32 %v1109, %v1047
      %v1111 = vadd.f32 %v1110, %v1048
      %v1112 = vadd.f32 %v1111, %v1049
      %v1113 = vadd.f32 %v1112, %v1050
      %v1114 = vadd.f32 %v1113, %v1051
      %v1115 = vadd.f32 %v1114, %v1052
      %v1116 = vadd.f32 %v1115, %v1053
      %v1117 = vadd.f32 %v1116, %v1054
      %v1118 = vadd.f32 %v1117, %v1055
      %v1119 = vadd.f32 %v1118, %v1056
      %v1120 = vadd.f32 %v1119, %v1057
      %v1121 = vadd.f32 %v1120, %v1058
      %v1122 = vadd.f32 %v1121, %v1059
      %v1123 = vadd.f32 %v1122, %v1060
      %v1124 = vadd.f32 %v1123, %v1061
      %v1125 = vadd.f32 %v1124, %v1062
      %v1126 = vadd.f32 %v1125, %v1063
      %v1127 = vadd.f32 %v1126, %v1064
      %v1128 = vadd.f32 %v1127, %v1065
      %v1129 = vadd.f32 %v1128, %v1066
      %v1130 = vadd.f32 %v1129, %v1067
      %v1131 = vadd.f32 %v1130, %v1068
      %v1132 = vadd.f32 %v1131, %v1069
      %v1133 = vadd.f32 %v1132, %v1070
      %v1134 = vadd.f32 %v1133, %v1071
      %v1135 = vadd.f32 %v1134, %v1072
      %v1136 = vadd.f32 %v1135, %v1073
      %v1137 = vadd.f32 %v1136, %v1074
      %v1138 = vadd.f32 %v1137, %v1075
      %v1139 = vadd.f32 %v1138, %v1076
      %v1140 = vadd.f32 %v1139, %v1077
      %v1141 = vadd.f32 %v1140, %v1078
      %v1142 = vadd.f32 %v1141, %v1079
      %v1143 = vadd.f32 %v1142, %v1080
      %v1144 = vadd.f32 %v1143, %v1081
      %v1145 = vadd.f32 %v1144, %v1082
      %v1146 = vadd.f32 %v1145, %v1083
      %v1147 = vadd.f32 %v1146, %v1084
      %v1148 = vadd.f32 %v1147, %v1085
      %v1149 = vadd.f32 %v1148, %v1086
      %v1150 = vadd.f32 %v1149, %v1087
      %v1151 = vadd.f32 %v1150, %v1088
      %v1152 = vadd.f32 %v1151, %v1089
      %v1153 = vadd.f32 %v1152, %v1090
      %v1154 = vadd.f32 %v1153, %v1091
      %v1155 = vadd.f32 %v1154, %v1092
      %v1156 = vadd.f32 %v1155, %v1093
      %v1157 = vadd.f32 %v1156, %v1094
      %v1158 = vadd.f32 %v1157, %v1095
      %v1159 = vadd.f32 %v1158, %v1096
      %v1160 = vadd.f32 %v1159, %v1097
      %v1161 = vrot.slane %v1160, 4
      %v1162 = vadd.f32 %v1160, %v1161
      %v1163 = vrot.slane %v1162, 2
      %v1164 = vadd.f32 %v1162, %v1163
      %v1165 = vrot.slane %v1164, 1
      %v1166 = vadd.f32 %v1164, %v1165
      %1167 = vst [vmem:[%s289] sm:$0x1] %v1166
      %s1168 = smul.u32 64, %s21
      %p1169 = scmp.lt.s32.totalorder %s20, 3
      %s1170 = scalar_select %p1169, %s20, 3
      %p1171 = scmp.lt.s32.totalorder %s1168, 63
      %s1172 = scalar_select %p1171, %s1168, 63
      %s1173 = smul.addr %s1170, 64
      %s1174 = sadd.s32 %s1172, %s1173
      %s1175 = smul.addr %s1174, 8
      %s1176 = scalar_lea.vmem %s2, %s1175
      %p1177 = scmp.lt.s32.totalorder %s20, 3
      %s1178 = scalar_select %p1177, %s20, 3
      %p1179 = scmp.lt.s32.totalorder %s21, 0
      %s1180 = scalar_select %p1179, %s21, 0
      %s1181 = sadd.s32 %s1180, %s1178
      %s1182 = scalar_lea.vmem %s3, %s1181
      %p1183 = scmp.lt.s32.totalorder %s20, 3
      %s1184 = scalar_select %p1183, %s20, 3
      %p1185 = scmp.lt.s32.totalorder %s21, 0
      %s1186 = scalar_select %p1185, %s21, 0
      %s1187 = sadd.s32 %s1186, %s1184
      %s1188 = scalar_lea.vmem %s4, %s1187
      // Predicated region
      $region29: #{_lambda_.15} parent=27 // pred_check
        %p1189 = pneg %p102
      $region30: #{_lambda_.15} parent=27 // pred_check_branch
        %1191 = sbr.rel (%p1189) target = $region32
      $region31: #{_lambda_.15} parent=27 // pred_region
        %s1192 = smul.u32 64, %s21
      $region32: #{_lambda_.15} parent=27 // pred_fallthru
        _
      // Predicated region
      $region33: #{_lambda_.15} parent=27 // pred_check
        %p1193 = pneg %p130
      $region34: #{_lambda_.15} parent=27 // pred_check_branch
        %1195 = sbr.rel (%p1193) target = $region36
      $region35: #{_lambda_.15} parent=27 // pred_region
        _
      $region36: #{_lambda_.15} parent=27 // pred_fallthru
        _
      // Predicated region
      $region37: #{_lambda_.15} parent=27 // pred_check
        %p1196 = pneg %p158
      $region38: #{_lambda_.15} parent=27 // pred_check_branch
        %1198 = sbr.rel (%p1196) target = $region40
      $region39: #{_lambda_.15} parent=27 // pred_region
        _
      $region40: #{_lambda_.15} parent=27 // pred_fallthru
        _
    $region28: #{_lambda_.15} parent=5 // pred_fallthru
      _
    %p1199 = scmp.le.s32.totalorder 2, %s11
    // Predicated region
    $region41: #{_lambda_.15} parent=5 // pred_check
      %p1200 = pneg %p1199
    $region42: #{_lambda_.15} parent=5 // pred_check_branch
      %1202 = sbr.rel (%p1200) target = $region44
    $region43: #{_lambda_.15} parent=5 // pred_region
      %s1203 = ssub.s32 %s11, 2
      // Predicated region
      $region45: #{_lambda_.15} parent=43 // pred_check
        %p1204 = pneg %p108
      $region46: #{_lambda_.15} parent=43 // pred_check_branch
        %1206 = sbr.rel (%p1204) target = $region48
      $region47: #{_lambda_.15} parent=43 // pred_region
        %s1207 = smul.u32 64, %s23
        %p1208 = scmp.lt.s32.totalorder %s22, 3
        %s1209 = scalar_select %p1208, %s22, 3
        %p1210 = scmp.lt.s32.totalorder %s1207, 63
        %s1211 = scalar_select %p1210, %s1207, 63
        %s1212 = smul.addr %s1209, 64
        %s1213 = sadd.s32 %s1211, %s1212
        %s1214 = smul.addr %s1213, 8
        %s1215 = scalar_lea.vmem %s2, %s1214
      $region48: #{_lambda_.15} parent=43 // pred_fallthru
        _
      // Predicated region
      $region49: #{_lambda_.15} parent=43 // pred_check
        %p1216 = pneg %p136
      $region50: #{_lambda_.15} parent=43 // pred_check_branch
        %1218 = sbr.rel (%p1216) target = $region52
      $region51: #{_lambda_.15} parent=43 // pred_region
        %p1219 = scmp.lt.s32.totalorder %s22, 3
        %s1220 = scalar_select %p1219, %s22, 3
        %p1221 = scmp.lt.s32.totalorder %s23, 0
        %s1222 = scalar_select %p1221, %s23, 0
        %s1223 = sadd.s32 %s1222, %s1220
        %s1224 = scalar_lea.vmem %s3, %s1223
      $region52: #{_lambda_.15} parent=43 // pred_fallthru
        _
      // Predicated region
      $region53: #{_lambda_.15} parent=43 // pred_check
        %p1225 = pneg %p164
      $region54: #{_lambda_.15} parent=43 // pred_check_branch
        %1227 = sbr.rel (%p1225) target = $region56
      $region55: #{_lambda_.15} parent=43 // pred_region
        %p1228 = scmp.lt.s32.totalorder %s22, 3
        %s1229 = scalar_select %p1228, %s22, 3
        %p1230 = scmp.lt.s32.totalorder %s23, 0
        %s1231 = scalar_select %p1230, %s23, 0
        %s1232 = sadd.s32 %s1231, %s1229
        %s1233 = scalar_lea.vmem %s4, %s1232
      $region56: #{_lambda_.15} parent=43 // pred_fallthru
        _
    $region44: #{_lambda_.15} parent=5 // pred_fallthru
      _
  $region6: #{_lambda_.15} parent=0 // loop_footer
    %s15 = sadd.s32 1, %s11
  $region7: #{_lambda_.15} parent=0 // loop_footer_branch
    %10 = sbr.rel target = $region3
  $region8: #{_lambda_.15} parent=0 // loop_exit
    _

// kernel: _lambda_.16
$region0: #{_lambda_.16}
  #allocation0 [shape = 'u32[]', space=smem, size = 0x4, offset = 0x4, fixed_abs, tag = 'smem constant byte address 0x4 - core index']
  #allocation1 [shape = 'u32[144,128]{1,0:T(1,128)}', space=vmem, size = 0x12000, scoped, tag = 'internal scratch']
  %s0 = inlined_call_operand.vmem [shape: f32[4,512,128], index: 0, kind: input, shape index: {}]
  %s1 = inlined_call_operand.vmem [shape: f32[1,128], index: 1, kind: input, shape index: {}]
  %s2 = inlined_call_operand.vmem [shape: f32[1,128], index: 2, kind: input, shape index: {}]
  %s3 = inlined_call_operand.vmem [shape: bf16[4,512,128], index: 3, kind: output, shape index: {}]
  %s4 = sld [smem:[#allocation0]]
  $region45: #{_lambda_.16} parent=0
    _
  %s6 = ssub.s32 1, %s4
  %s7 = scalar_select 0, %s6, %s4
  loop: start=0, step=1, limit=6
  $region2: #{_lambda_.16} parent=0 // loop_pre_header
    _
  $region3: #{_lambda_.16} parent=0 // loop_header
    %s9 = sphi 0, %s13
    %p10 = scmp.ge.s32.totalorder %s9, 6
    %s16 = sphi 0, %s28
    %s17 = sphi 0, %s24
    %s18 = sphi 0, %s16
    %s19 = sphi 0, %s17
    %s20 = sphi 0, %s18
    %s21 = sphi 0, %s19
    %s33 = sphi 0, %s35
    %s36 = sphi 0, %s33
    %s37 = sphi 0, %s36
    %s53 = sphi 0, %s37
    %s57 = sphi 0, %s57
    %s59 = sphi 0, %s57
    %s60 = sphi 0, %s59
    %s74 = sphi 0, %s60
    %s78 = sphi 0, %s78
    %s80 = sphi 0, %s78
    %s81 = sphi 0, %s80
    %s95 = sphi 0, %s81
    %s103 = sphi 0, %s105
    %s106 = sphi 0, %s103
    %s107 = sphi 0, %s106
    %s123 = sphi 0, %s107
  $region4: #{_lambda_.16} parent=0 // loop_header_branch
    %12 = sbr.rel (%p10) target = $region8
  $region5: #{_lambda_.16} parent=0 // loop_body
    %s14 = ssub.s32 %s9, 1
    %s15 = ssub.s32 %s9, 2
    %s22 = sadd.s32 1, %s17
    %p23 = scmp.ge.s32.totalorder %s22, 1
    %s24 = scalar_select %p23, 0, %s22
    %s25 = sadd.s32 1, %s16
    %s26 = scalar_select %p23, %s25, %s16
    %p27 = scmp.ge.s32.totalorder %s26, 4
    %s28 = scalar_select %p27, 0, %s26
    %s29 = ssub.s32 %s16, %s28
    %s30 = ssub.s32 %s17, %s24
    %s31 = sor.u32 %s29, %s30
    %p32 = scmp.eq.s32.totalorder %s31, 0
    %s34 = sadd.s32 %s33, 1
    %s35 = scalar_select %p32, %s33, %s34
    %p38 = pneg %p32
    %p39 = scmp.eq.s32.totalorder %s9, 3
    %p40 = por %p38, %p39
    %p41 = scmp.ne.s32.totalorder %s33, %s36
    %p42 = scmp.eq.s32.totalorder %s9, 0
    %p43 = por %p41, %p42
    %p44 = scmp.ne.s32.totalorder %s33, %s36
    %p45 = scmp.eq.s32.totalorder %s14, 3
    %p46 = por %p44, %p45
    %p47 = scmp.ne.s32.totalorder %s36, %s37
    %p48 = scmp.eq.s32.totalorder %s14, 0
    %p49 = por %p47, %p48
    %p50 = scmp.ne.s32.totalorder %s36, %s37
    %p51 = scmp.eq.s32.totalorder %s15, 3
    %p52 = por %p50, %p51
    %p54 = scmp.ne.s32.totalorder %s37, %s53
    %p55 = scmp.eq.s32.totalorder %s15, 0
    %p56 = por %p54, %p55
    %s58 = sadd.s32 %s57, 1
    %p61 = scmp.eq.s32.totalorder %s9, 3
    %p62 = scmp.ne.s32.totalorder %s57, %s59
    %p63 = scmp.eq.s32.totalorder %s9, 0
    %p64 = por %p62, %p63
    %p65 = scmp.ne.s32.totalorder %s57, %s59
    %p66 = scmp.eq.s32.totalorder %s14, 3
    %p67 = por %p65, %p66
    %p68 = scmp.ne.s32.totalorder %s59, %s60
    %p69 = scmp.eq.s32.totalorder %s14, 0
    %p70 = por %p68, %p69
    %p71 = scmp.ne.s32.totalorder %s59, %s60
    %p72 = scmp.eq.s32.totalorder %s15, 3
    %p73 = por %p71, %p72
    %p75 = scmp.ne.s32.totalorder %s60, %s74
    %p76 = scmp.eq.s32.totalorder %s15, 0
    %p77 = por %p75, %p76
    %s79 = sadd.s32 %s78, 1
    %p82 = scmp.eq.s32.totalorder %s9, 3
    %p83 = scmp.ne.s32.totalorder %s78, %s80
    %p84 = scmp.eq.s32.totalorder %s9, 0
    %p85 = por %p83, %p84
    %p86 = scmp.ne.s32.totalorder %s78, %s80
    %p87 = scmp.eq.s32.totalorder %s14, 3
    %p88 = por %p86, %p87
    %p89 = scmp.ne.s32.totalorder %s80, %s81
    %p90 = scmp.eq.s32.totalorder %s14, 0
    %p91 = por %p89, %p90
    %p92 = scmp.ne.s32.totalorder %s80, %s81
    %p93 = scmp.eq.s32.totalorder %s15, 3
    %p94 = por %p92, %p93
    %p96 = scmp.ne.s32.totalorder %s81, %s95
    %p97 = scmp.eq.s32.totalorder %s15, 0
    %p98 = por %p96, %p97
    %s99 = ssub.s32 %s16, %s28
    %s100 = ssub.s32 %s17, %s24
    %s101 = sor.u32 %s99, %s100
    %p102 = scmp.eq.s32.totalorder %s101, 0
    %s104 = sadd.s32 %s103, 1
    %s105 = scalar_select %p102, %s103, %s104
    %p108 = pneg %p102
    %p109 = scmp.eq.s32.totalorder %s9, 3
    %p110 = por %p108, %p109
    %p111 = scmp.ne.s32.totalorder %s103, %s106
    %p112 = scmp.eq.s32.totalorder %s9, 0
    %p113 = por %p111, %p112
    %p114 = scmp.ne.s32.totalorder %s103, %s106
    %p115 = scmp.eq.s32.totalorder %s14, 3
    %p116 = por %p114, %p115
    %p117 = scmp.ne.s32.totalorder %s106, %s107
    %p118 = scmp.eq.s32.totalorder %s14, 0
    %p119 = por %p117, %p118
    %p120 = scmp.ne.s32.totalorder %s106, %s107
    %p121 = scmp.eq.s32.totalorder %s15, 3
    %p122 = por %p120, %p121
    %p124 = scmp.ne.s32.totalorder %s107, %s123
    %p125 = scmp.eq.s32.totalorder %s15, 0
    %p126 = por %p124, %p125
    %p127 = scmp.le.s32.totalorder 1, %s9
    %p128 = scmp.lt.s32.totalorder %s9, 5
    %p129 = pnand %p127, %p128
    %p130 = pneg %p129
    // Predicated region
    $region9: #{_lambda_.16} parent=5 // pred_check
      _
    $region10: #{_lambda_.16} parent=5 // pred_check_branch
      %132 = sbr.rel (%p129) target = $region12
    $region11: #{_lambda_.16} parent=5 // pred_region
      %s133 = ssub.s32 %s9, 1
      // Predicated region
      $region13: #{_lambda_.16} parent=11 // pred_check
        %p134 = pneg %p70
      $region14: #{_lambda_.16} parent=11 // pred_check_branch
        %136 = sbr.rel (%p134) target = $region16
      $region15: #{_lambda_.16} parent=11 // pred_region
        _
      $region16: #{_lambda_.16} parent=11 // pred_fallthru
        _
      // Predicated region
      $region17: #{_lambda_.16} parent=11 // pred_check
        %p137 = pneg %p91
      $region18: #{_lambda_.16} parent=11 // pred_check_branch
        %139 = sbr.rel (%p137) target = $region20
      $region19: #{_lambda_.16} parent=11 // pred_region
        _
      $region20: #{_lambda_.16} parent=11 // pred_fallthru
        _
    $region12: #{_lambda_.16} parent=5 // pred_fallthru
      _
    %p140 = scmp.lt.s32.totalorder %s9, 4
    // Predicated region
    $region21: #{_lambda_.16} parent=5 // pred_check
      %p141 = pneg %p140
    $region22: #{_lambda_.16} parent=5 // pred_check_branch
      %143 = sbr.rel (%p141) target = $region24
    $region23: #{_lambda_.16} parent=5 // pred_region
      // Predicated region
      $region25: #{_lambda_.16} parent=23 // pred_check
        %p144 = pneg %p43
      $region26: #{_lambda_.16} parent=23 // pred_check_branch
        %146 = sbr.rel (%p144) target = $region28
      $region27: #{_lambda_.16} parent=23 // pred_region
        %s147 = smul.u32 64, %s17
        %p148 = scmp.lt.s32.totalorder %s16, 3
        %s149 = scalar_select %p148, %s16, 3
        %p150 = scmp.lt.s32.totalorder %s147, 63
        %s151 = scalar_select %p150, %s147, 63
        %s152 = smul.addr %s149, 64
        %s153 = sadd.s32 %s151, %s152
        %s154 = smul.addr %s153, 8
        %s155 = scalar_lea.vmem %s0, %s154
        %s156 = smul.u32 64, %s17
      $region28: #{_lambda_.16} parent=23 // pred_fallthru
        _
    $region24: #{_lambda_.16} parent=5 // pred_fallthru
      _
    %p157 = scmp.le.s32.totalorder 1, %s9
    %p158 = scmp.lt.s32.totalorder %s9, 5
    %p159 = pnand %p157, %p158
    %p160 = pneg %p159
    // Predicated region
    $region29: #{_lambda_.16} parent=5 // pred_check
      _
    $region30: #{_lambda_.16} parent=5 // pred_check_branch
      %162 = sbr.rel (%p159) target = $region32
    $region31: #{_lambda_.16} parent=5 // pred_region
      %s163 = ssub.s32 %s9, 1
      %s164 = smul.u32 64, %s19
      %p165 = scmp.lt.s32.totalorder %s18, 3
      %s166 = scalar_select %p165, %s18, 3
      %p167 = scmp.lt.s32.totalorder %s164, 63
      %s168 = scalar_select %p167, %s164, 63
      %s169 = smul.addr %s166, 64
      %s170 = sadd.s32 %s168, %s169
      %s171 = smul.addr %s170, 8
      %s172 = scalar_lea.vmem %s0, %s171
      %p173 = pneg %p49
      %p174 = pneg %p46
      %p175 = pneg %p70
      %p176 = pneg %p67
      %p177 = pneg %p91
      %p178 = pneg %p88
      %p179 = pneg %p119
      %p180 = pneg %p116
      %s181 = smul.u32 64, %s19
      %p182 = scmp.lt.s32.totalorder %s18, 3
      %s183 = scalar_select %p182, %s18, 3
      %p184 = scmp.lt.s32.totalorder %s181, 63
      %s185 = scalar_select %p184, %s181, 63
      %s186 = smul.addr %s183, 64
      %s187 = sadd.s32 %s185, %s186
      %s188 = smul.addr %s187, 4
      %s189 = scalar_lea.vmem %s3, %s188
      %s190 = smul.u32 64, %s19
      %p191 = scmp.lt.s32.totalorder %s18, 3
      %s192 = scalar_select %p191, %s18, 3
      %p193 = scmp.lt.s32.totalorder %s190, 63
      %s194 = scalar_select %p193, %s190, 63
      %s195 = smul.addr %s192, 64
      %s196 = sadd.s32 %s194, %s195
      %s197 = smul.addr %s196, 8
      %s198 = scalar_lea.vmem %s0, %s197
      %s199 = smul.u32 64, %s19
      %s200 = smul.u32 64, %s19
      %p201 = scmp.lt.s32.totalorder %s18, 3
      %s202 = scalar_select %p201, %s18, 3
      %p203 = scmp.lt.s32.totalorder %s200, 63
      %s204 = scalar_select %p203, %s200, 63
      %s205 = smul.addr %s202, 64
      %s206 = sadd.s32 %s204, %s205
      %s207 = smul.addr %s206, 4
      %s208 = scalar_lea.vmem %s3, %s207
      %s209 = smul.u32 64, %s19
      %v210 = vld [vmem:[%s198] sm:$0xff]
      %v211 = vld [vmem:[%s198 + $0x8] sm:$0xff]
      %v212 = vld [vmem:[%s198 + $0x10] sm:$0xff]
      %v213 = vld [vmem:[%s198 + $0x18] sm:$0xff]
      %v214 = vld [vmem:[%s198 + $0x20] sm:$0xff]
      %v215 = vld [vmem:[%s198 + $0x28] sm:$0xff]
      %v216 = vld [vmem:[%s198 + $0x30] sm:$0xff]
      %v217 = vld [vmem:[%s198 + $0x38] sm:$0xff]
      %v218 = vld [vmem:[%s198 + $0x40] sm:$0xff]
      %v219 = vld [vmem:[%s198 + $0x48] sm:$0xff]
      %v220 = vld [vmem:[%s198 + $0x50] sm:$0xff]
      %v221 = vld [vmem:[%s198 + $0x58] sm:$0xff]
      %v222 = vld [vmem:[%s198 + $0x60] sm:$0xff]
      %v223 = vld [vmem:[%s198 + $0x68] sm:$0xff]
      %v224 = vld [vmem:[%s198 + $0x70] sm:$0xff]
      %v225 = vld [vmem:[%s198 + $0x78] sm:$0xff]
      %v226 = vld [vmem:[%s198 + $0x80] sm:$0xff]
      %v227 = vld [vmem:[%s198 + $0x88] sm:$0xff]
      %v228 = vld [vmem:[%s198 + $0x90] sm:$0xff]
      %v229 = vld [vmem:[%s198 + $0x98] sm:$0xff]
      %v230 = vld [vmem:[%s198 + $0xa0] sm:$0xff]
      %v231 = vld [vmem:[%s198 + $0xa8] sm:$0xff]
      %v232 = vld [vmem:[%s198 + $0xb0] sm:$0xff]
      %v233 = vld [vmem:[%s198 + $0xb8] sm:$0xff]
      %v234 = vld [vmem:[%s198 + $0xc0] sm:$0xff]
      %v235 = vld [vmem:[%s198 + $0xc8] sm:$0xff]
      %v236 = vld [vmem:[%s198 + $0xd0] sm:$0xff]
      %v237 = vld [vmem:[%s198 + $0xd8] sm:$0xff]
      %v238 = vld [vmem:[%s198 + $0xe0] sm:$0xff]
      %v239 = vld [vmem:[%s198 + $0xe8] sm:$0xff]
      %v240 = vld [vmem:[%s198 + $0xf0] sm:$0xff]
      %v241 = vld [vmem:[%s198 + $0xf8] sm:$0xff]
      %v242 = vld [vmem:[%s198 + $0x100] sm:$0xff]
      %v243 = vld [vmem:[%s198 + $0x108] sm:$0xff]
      %v244 = vld [vmem:[%s198 + $0x110] sm:$0xff]
      %v245 = vld [vmem:[%s198 + $0x118] sm:$0xff]
      %v246 = vld [vmem:[%s198 + $0x120] sm:$0xff]
      %v247 = vld [vmem:[%s198 + $0x128] sm:$0xff]
      %v248 = vld [vmem:[%s198 + $0x130] sm:$0xff]
      %v249 = vld [vmem:[%s198 + $0x138] sm:$0xff]
      %v250 = vld [vmem:[%s198 + $0x140] sm:$0xff]
      %v251 = vld [vmem:[%s198 + $0x148] sm:$0xff]
      %v252 = vld [vmem:[%s198 + $0x150] sm:$0xff]
      %v253 = vld [vmem:[%s198 + $0x158] sm:$0xff]
      %v254 = vld [vmem:[%s198 + $0x160] sm:$0xff]
      %v255 = vld [vmem:[%s198 + $0x168] sm:$0xff]
      %v256 = vld [vmem:[%s198 + $0x170] sm:$0xff]
      %v257 = vld [vmem:[%s198 + $0x178] sm:$0xff]
      %v258 = vld [vmem:[%s198 + $0x180] sm:$0xff]
      %v259 = vld [vmem:[%s198 + $0x188] sm:$0xff]
      %v260 = vld [vmem:[%s198 + $0x190] sm:$0xff]
      %v261 = vld [vmem:[%s198 + $0x198] sm:$0xff]
      %v262 = vld [vmem:[%s198 + $0x1a0] sm:$0xff]
      %v263 = vld [vmem:[%s198 + $0x1a8] sm:$0xff]
      %v264 = vld [vmem:[%s198 + $0x1b0] sm:$0xff]
      %v265 = vld [vmem:[%s198 + $0x1b8] sm:$0xff]
      %v266 = vld [vmem:[%s198 + $0x1c0] sm:$0xff]
      %v267 = vld [vmem:[%s198 + $0x1c8] sm:$0xff]
      %v268 = vld [vmem:[%s198 + $0x1d0] sm:$0xff]
      %v269 = vld [vmem:[%s198 + $0x1d8] sm:$0xff]
      %v270 = vld [vmem:[%s198 + $0x1e0] sm:$0xff]
      %v271 = vld [vmem:[%s198 + $0x1e8] sm:$0xff]
      %v272 = vld [vmem:[%s198 + $0x1f0] sm:$0xff]
      %v273 = vld [vmem:[%s198 + $0x1f8] sm:$0xff]
      %v274 = vld [vmem:[%s1] sm:$0x1]
      %v276 = vlaneseq
      %v277 = vshrl.u32 %v276, 7
      %v278 = vsub.s32 0, %v277
      %v279 = vrot.slane %v274, %v278
      %v281 = vmul.f32 %v210, %v279
      %v282 = vmul.f32 %v211, %v279
      %v283 = vmul.f32 %v212, %v279
      %v284 = vmul.f32 %v213, %v279
      %v285 = vmul.f32 %v214, %v279
      %v286 = vmul.f32 %v215, %v279
      %v287 = vmul.f32 %v216, %v279
      %v288 = vmul.f32 %v217, %v279
      %v289 = vmul.f32 %v218, %v279
      %v290 = vmul.f32 %v219, %v279
      %v291 = vmul.f32 %v220, %v279
      %v292 = vmul.f32 %v221, %v279
      %v293 = vmul.f32 %v222, %v279
      %v294 = vmul.f32 %v223, %v279
      %v295 = vmul.f32 %v224, %v279
      %v296 = vmul.f32 %v225, %v279
      %v297 = vmul.f32 %v226, %v279
      %v298 = vmul.f32 %v227, %v279
      %v299 = vmul.f32 %v228, %v279
      %v300 = vmul.f32 %v229, %v279
      %v301 = vmul.f32 %v230, %v279
      %v302 = vmul.f32 %v231, %v279
      %v303 = vmul.f32 %v232, %v279
      %v304 = vmul.f32 %v233, %v279
      %v305 = vmul.f32 %v234, %v279
      %v306 = vmul.f32 %v235, %v279
      %v307 = vmul.f32 %v236, %v279
      %v308 = vmul.f32 %v237, %v279
      %v309 = vmul.f32 %v238, %v279
      %v310 = vmul.f32 %v239, %v279
      %v311 = vmul.f32 %v240, %v279
      %v312 = vmul.f32 %v241, %v279
      %v313 = vmul.f32 %v242, %v279
      %v314 = vmul.f32 %v243, %v279
      %v315 = vmul.f32 %v244, %v279
      %v316 = vmul.f32 %v245, %v279
      %v317 = vmul.f32 %v246, %v279
      %v318 = vmul.f32 %v247, %v279
      %v319 = vmul.f32 %v248, %v279
      %v320 = vmul.f32 %v249, %v279
      %v321 = vmul.f32 %v250, %v279
      %v322 = vmul.f32 %v251, %v279
      %v323 = vmul.f32 %v252, %v279
      %v324 = vmul.f32 %v253, %v279
      %v325 = vmul.f32 %v254, %v279
      %v326 = vmul.f32 %v255, %v279
      %v327 = vmul.f32 %v256, %v279
      %v328 = vmul.f32 %v257, %v279
      %v329 = vmul.f32 %v258, %v279
      %v330 = vmul.f32 %v259, %v279
      %v331 = vmul.f32 %v260, %v279
      %v332 = vmul.f32 %v261, %v279
      %v333 = vmul.f32 %v262, %v279
      %v334 = vmul.f32 %v263, %v279
      %v335 = vmul.f32 %v264, %v279
      %v336 = vmul.f32 %v265, %v279
      %v337 = vmul.f32 %v266, %v279
      %v338 = vmul.f32 %v267, %v279
      %v339 = vmul.f32 %v268, %v279
      %v340 = vmul.f32 %v269, %v279
      %v341 = vmul.f32 %v270, %v279
      %v342 = vmul.f32 %v271, %v279
      %v343 = vmul.f32 %v272, %v279
      %v344 = vmul.f32 %v273, %v279
      %v345 = vld [vmem:[%s2] sm:$0x1]
      %v347 = vlaneseq
      %v348 = vshrl.u32 %v347, 7
      %v349 = vsub.s32 0, %v348
      %v350 = vrot.slane %v345, %v349
      %v352 = vadd.f32 %v281, %v350
      %v353 = vadd.f32 %v282, %v350
      %v354 = vadd.f32 %v283, %v350
      %v355 = vadd.f32 %v284, %v350
      %v356 = vadd.f32 %v285, %v350
      %v357 = vadd.f32 %v286, %v350
      %v358 = vadd.f32 %v287, %v350
      %v359 = vadd.f32 %v288, %v350
      %v360 = vadd.f32 %v289, %v350
      %v361 = vadd.f32 %v290, %v350
      %v362 = vadd.f32 %v291, %v350
      %v363 = vadd.f32 %v292, %v350
      %v364 = vadd.f32 %v293, %v350
      %v365 = vadd.f32 %v294, %v350
      %v366 = vadd.f32 %v295, %v350
      %v367 = vadd.f32 %v296, %v350
      %v368 = vadd.f32 %v297, %v350
      %v369 = vadd.f32 %v298, %v350
      %v370 = vadd.f32 %v299, %v350
      %v371 = vadd.f32 %v300, %v350
      %v372 = vadd.f32 %v301, %v350
      %v373 = vadd.f32 %v302, %v350
      %v374 = vadd.f32 %v303, %v350
      %v375 = vadd.f32 %v304, %v350
      %v376 = vadd.f32 %v305, %v350
      %v377 = vadd.f32 %v306, %v350
      %v378 = vadd.f32 %v307, %v350
      %v379 = vadd.f32 %v308, %v350
      %v380 = vadd.f32 %v309, %v350
      %v381 = vadd.f32 %v310, %v350
      %v382 = vadd.f32 %v311, %v350
      %v383 = vadd.f32 %v312, %v350
      %v384 = vadd.f32 %v313, %v350
      %v385 = vadd.f32 %v314, %v350
      %v386 = vadd.f32 %v315, %v350
      %v387 = vadd.f32 %v316, %v350
      %v388 = vadd.f32 %v317, %v350
      %v389 = vadd.f32 %v318, %v350
      %v390 = vadd.f32 %v319, %v350
      %v391 = vadd.f32 %v320, %v350
      %v392 = vadd.f32 %v321, %v350
      %v393 = vadd.f32 %v322, %v350
      %v394 = vadd.f32 %v323, %v350
      %v395 = vadd.f32 %v324, %v350
      %v396 = vadd.f32 %v325, %v350
      %v397 = vadd.f32 %v326, %v350
      %v398 = vadd.f32 %v327, %v350
      %v399 = vadd.f32 %v328, %v350
      %v400 = vadd.f32 %v329, %v350
      %v401 = vadd.f32 %v330, %v350
      %v402 = vadd.f32 %v331, %v350
      %v403 = vadd.f32 %v332, %v350
      %v404 = vadd.f32 %v333, %v350
      %v405 = vadd.f32 %v334, %v350
      %v406 = vadd.f32 %v335, %v350
      %v407 = vadd.f32 %v336, %v350
      %v408 = vadd.f32 %v337, %v350
      %v409 = vadd.f32 %v338, %v350
      %v410 = vadd.f32 %v339, %v350
      %v411 = vadd.f32 %v340, %v350
      %v412 = vadd.f32 %v341, %v350
      %v413 = vadd.f32 %v342, %v350
      %v414 = vadd.f32 %v343, %v350
      %v415 = vadd.f32 %v344, %v350
      %v416 = vmax.f32 %v352, 0.0
      %v417 = vmax.f32 %v353, 0.0
      %v418 = vmax.f32 %v354, 0.0
      %v419 = vmax.f32 %v355, 0.0
      %v420 = vmax.f32 %v356, 0.0
      %v421 = vmax.f32 %v357, 0.0
      %v422 = vmax.f32 %v358, 0.0
      %v423 = vmax.f32 %v359, 0.0
      %v424 = vmax.f32 %v360, 0.0
      %v425 = vmax.f32 %v361, 0.0
      %v426 = vmax.f32 %v362, 0.0
      %v427 = vmax.f32 %v363, 0.0
      %v428 = vmax.f32 %v364, 0.0
      %v429 = vmax.f32 %v365, 0.0
      %v430 = vmax.f32 %v366, 0.0
      %v431 = vmax.f32 %v367, 0.0
      %v432 = vmax.f32 %v368, 0.0
      %v433 = vmax.f32 %v369, 0.0
      %v434 = vmax.f32 %v370, 0.0
      %v435 = vmax.f32 %v371, 0.0
      %v436 = vmax.f32 %v372, 0.0
      %v437 = vmax.f32 %v373, 0.0
      %v438 = vmax.f32 %v374, 0.0
      %v439 = vmax.f32 %v375, 0.0
      %v440 = vmax.f32 %v376, 0.0
      %v441 = vmax.f32 %v377, 0.0
      %v442 = vmax.f32 %v378, 0.0
      %v443 = vmax.f32 %v379, 0.0
      %v444 = vmax.f32 %v380, 0.0
      %v445 = vmax.f32 %v381, 0.0
      %v446 = vmax.f32 %v382, 0.0
      %v447 = vmax.f32 %v383, 0.0
      %v448 = vmax.f32 %v384, 0.0
      %v449 = vmax.f32 %v385, 0.0
      %v450 = vmax.f32 %v386, 0.0
      %v451 = vmax.f32 %v387, 0.0
      %v452 = vmax.f32 %v388, 0.0
      %v453 = vmax.f32 %v389, 0.0
      %v454 = vmax.f32 %v390, 0.0
      %v455 = vmax.f32 %v391, 0.0
      %v456 = vmax.f32 %v392, 0.0
      %v457 = vmax.f32 %v393, 0.0
      %v458 = vmax.f32 %v394, 0.0
      %v459 = vmax.f32 %v395, 0.0
      %v460 = vmax.f32 %v396, 0.0
      %v461 = vmax.f32 %v397, 0.0
      %v462 = vmax.f32 %v398, 0.0
      %v463 = vmax.f32 %v399, 0.0
      %v464 = vmax.f32 %v400, 0.0
      %v465 = vmax.f32 %v401, 0.0
      %v466 = vmax.f32 %v402, 0.0
      %v467 = vmax.f32 %v403, 0.0
      %v468 = vmax.f32 %v404, 0.0
      %v469 = vmax.f32 %v405, 0.0
      %v470 = vmax.f32 %v406, 0.0
      %v471 = vmax.f32 %v407, 0.0
      %v472 = vmax.f32 %v408, 0.0
      %v473 = vmax.f32 %v409, 0.0
      %v474 = vmax.f32 %v410, 0.0
      %v475 = vmax.f32 %v411, 0.0
      %v476 = vmax.f32 %v412, 0.0
      %v477 = vmax.f32 %v413, 0.0
      %v478 = vmax.f32 %v414, 0.0
      %v479 = vmax.f32 %v415, 0.0
      %v480 = vpack.c.bf16 %v417, %v416
      %v481 = vpack.c.bf16 %v419, %v418
      %v482 = vpack.c.bf16 %v421, %v420
      %v483 = vpack.c.bf16 %v423, %v422
      %v484 = vpack.c.bf16 %v425, %v424
      %v485 = vpack.c.bf16 %v427, %v426
      %v486 = vpack.c.bf16 %v429, %v428
      %v487 = vpack.c.bf16 %v431, %v430
      %v488 = vpack.c.bf16 %v433, %v432
      %v489 = vpack.c.bf16 %v435, %v434
      %v490 = vpack.c.bf16 %v437, %v436
      %v491 = vpack.c.bf16 %v439, %v438
      %v492 = vpack.c.bf16 %v441, %v440
      %v493 = vpack.c.bf16 %v443, %v442
      %v494 = vpack.c.bf16 %v445, %v444
      %v495 = vpack.c.bf16 %v447, %v446
      %v496 = vpack.c.bf16 %v449, %v448
      %v497 = vpack.c.bf16 %v451, %v450
      %v498 = vpack.c.bf16 %v453, %v452
      %v499 = vpack.c.bf16 %v455, %v454
      %v500 = vpack.c.bf16 %v457, %v456
      %v501 = vpack.c.bf16 %v459, %v458
      %v502 = vpack.c.bf16 %v461, %v460
      %v503 = vpack.c.bf16 %v463, %v462
      %v504 = vpack.c.bf16 %v465, %v464
      %v505 = vpack.c.bf16 %v467, %v466
      %v506 = vpack.c.bf16 %v469, %v468
      %v507 = vpack.c.bf16 %v471, %v470
      %v508 = vpack.c.bf16 %v473, %v472
      %v509 = vpack.c.bf16 %v475, %v474
      %v510 = vpack.c.bf16 %v477, %v476
      %v511 = vpack.c.bf16 %v479, %v478
      %v544 = vunpack.c.l.b16 %v480
      %v545 = vunpack.c.h.b16 %v480
      %v546 = vunpack.c.l.b16 %v481
      %v547 = vunpack.c.h.b16 %v481
      %v548 = vunpack.c.l.b16 %v482
      %v549 = vunpack.c.h.b16 %v482
      %v550 = vunpack.c.l.b16 %v483
      %v551 = vunpack.c.h.b16 %v483
      %v552 = vunpack.c.l.b16 %v484
      %v553 = vunpack.c.h.b16 %v484
      %v554 = vunpack.c.l.b16 %v485
      %v555 = vunpack.c.h.b16 %v485
      %v556 = vunpack.c.l.b16 %v486
      %v557 = vunpack.c.h.b16 %v486
      %v558 = vunpack.c.l.b16 %v487
      %v559 = vunpack.c.h.b16 %v487
      %v560 = vunpack.c.l.b16 %v488
      %v561 = vunpack.c.h.b16 %v488
      %v562 = vunpack.c.l.b16 %v489
      %v563 = vunpack.c.h.b16 %v489
      %v564 = vunpack.c.l.b16 %v490
      %v565 = vunpack.c.h.b16 %v490
      %v566 = vunpack.c.l.b16 %v491
      %v567 = vunpack.c.h.b16 %v491
      %v568 = vunpack.c.l.b16 %v492
      %v569 = vunpack.c.h.b16 %v492
      %v570 = vunpack.c.l.b16 %v493
      %v571 = vunpack.c.h.b16 %v493
      %v572 = vunpack.c.l.b16 %v494
      %v573 = vunpack.c.h.b16 %v494
      %v574 = vunpack.c.l.b16 %v495
      %v575 = vunpack.c.h.b16 %v495
      %v576 = vunpack.c.l.b16 %v496
      %v577 = vunpack.c.h.b16 %v496
      %v578 = vunpack.c.l.b16 %v497
      %v579 = vunpack.c.h.b16 %v497
      %v580 = vunpack.c.l.b16 %v498
      %v581 = vunpack.c.h.b16 %v498
      %v582 = vunpack.c.l.b16 %v499
      %v583 = vunpack.c.h.b16 %v499
      %v584 = vunpack.c.l.b16 %v500
      %v585 = vunpack.c.h.b16 %v500
      %v586 = vunpack.c.l.b16 %v501
      %v587 = vunpack.c.h.b16 %v501
      %v588 = vunpack.c.l.b16 %v502
      %v589 = vunpack.c.h.b16 %v502
      %v590 = vunpack.c.l.b16 %v503
      %v591 = vunpack.c.h.b16 %v503
      %v592 = vunpack.c.l.b16 %v504
      %v593 = vunpack.c.h.b16 %v504
      %v594 = vunpack.c.l.b16 %v505
      %v595 = vunpack.c.h.b16 %v505
      %v596 = vunpack.c.l.b16 %v506
      %v597 = vunpack.c.h.b16 %v506
      %v598 = vunpack.c.l.b16 %v507
      %v599 = vunpack.c.h.b16 %v507
      %v600 = vunpack.c.l.b16 %v508
      %v601 = vunpack.c.h.b16 %v508
      %v602 = vunpack.c.l.b16 %v509
      %v603 = vunpack.c.h.b16 %v509
      %v604 = vunpack.c.l.b16 %v510
      %v605 = vunpack.c.h.b16 %v510
      %v606 = vunpack.c.l.b16 %v511
      %v607 = vunpack.c.h.b16 %v511
      %v608 = vpack.c.b16 %v544, %v544
      %v609 = vpack.c.b16 %v545, %v545
      %v610 = vpack.c.b16 %v546, %v546
      %v611 = vpack.c.b16 %v547, %v547
      %v612 = vpack.c.b16 %v548, %v548
      %v613 = vpack.c.b16 %v549, %v549
      %v614 = vpack.c.b16 %v550, %v550
      %v615 = vpack.c.b16 %v551, %v551
      %v616 = vpack.c.b16 %v552, %v552
      %v617 = vpack.c.b16 %v553, %v553
      %v618 = vpack.c.b16 %v554, %v554
      %v619 = vpack.c.b16 %v555, %v555
      %v620 = vpack.c.b16 %v556, %v556
      %v621 = vpack.c.b16 %v557, %v557
      %v622 = vpack.c.b16 %v558, %v558
      %v623 = vpack.c.b16 %v559, %v559
      %v624 = vpack.c.b16 %v560, %v560
      %v625 = vpack.c.b16 %v561, %v561
      %v626 = vpack.c.b16 %v562, %v562
      %v627 = vpack.c.b16 %v563, %v563
      %v628 = vpack.c.b16 %v564, %v564
      %v629 = vpack.c.b16 %v565, %v565
      %v630 = vpack.c.b16 %v566, %v566
      %v631 = vpack.c.b16 %v567, %v567
      %v632 = vpack.c.b16 %v568, %v568
      %v633 = vpack.c.b16 %v569, %v569
      %v634 = vpack.c.b16 %v570, %v570
      %v635 = vpack.c.b16 %v571, %v571
      %v636 = vpack.c.b16 %v572, %v572
      %v637 = vpack.c.b16 %v573, %v573
      %v638 = vpack.c.b16 %v574, %v574
      %v639 = vpack.c.b16 %v575, %v575
      %v640 = vpack.c.b16 %v576, %v576
      %v641 = vpack.c.b16 %v577, %v577
      %v642 = vpack.c.b16 %v578, %v578
      %v643 = vpack.c.b16 %v579, %v579
      %v644 = vpack.c.b16 %v580, %v580
      %v645 = vpack.c.b16 %v581, %v581
      %v646 = vpack.c.b16 %v582, %v582
      %v647 = vpack.c.b16 %v583, %v583
      %v648 = vpack.c.b16 %v584, %v584
      %v649 = vpack.c.b16 %v585, %v585
      %v650 = vpack.c.b16 %v586, %v586
      %v651 = vpack.c.b16 %v587, %v587
      %v652 = vpack.c.b16 %v588, %v588
      %v653 = vpack.c.b16 %v589, %v589
      %v654 = vpack.c.b16 %v590, %v590
      %v655 = vpack.c.b16 %v591, %v591
      %v656 = vpack.c.b16 %v592, %v592
      %v657 = vpack.c.b16 %v593, %v593
      %v658 = vpack.c.b16 %v594, %v594
      %v659 = vpack.c.b16 %v595, %v595
      %v660 = vpack.c.b16 %v596, %v596
      %v661 = vpack.c.b16 %v597, %v597
      %v662 = vpack.c.b16 %v598, %v598
      %v663 = vpack.c.b16 %v599, %v599
      %v664 = vpack.c.b16 %v600, %v600
      %v665 = vpack.c.b16 %v601, %v601
      %v666 = vpack.c.b16 %v602, %v602
      %v667 = vpack.c.b16 %v603, %v603
      %v668 = vpack.c.b16 %v604, %v604
      %v669 = vpack.c.b16 %v605, %v605
      %v670 = vpack.c.b16 %v606, %v606
      %v671 = vpack.c.b16 %v607, %v607
      %736 = vst [vmem:[%s208] sm:$0xf] %v608
      %737 = vst [vmem:[%s208 + $0x4] sm:$0xf] %v609
      %738 = vst [vmem:[%s208 + $0x8] sm:$0xf] %v610
      %739 = vst [vmem:[%s208 + $0xc] sm:$0xf] %v611
      %740 = vst [vmem:[%s208 + $0x10] sm:$0xf] %v612
      %741 = vst [vmem:[%s208 + $0x14] sm:$0xf] %v613
      %742 = vst [vmem:[%s208 + $0x18] sm:$0xf] %v614
      %743 = vst [vmem:[%s208 + $0x1c] sm:$0xf] %v615
      %744 = vst [vmem:[%s208 + $0x20] sm:$0xf] %v616
      %745 = vst [vmem:[%s208 + $0x24] sm:$0xf] %v617
      %746 = vst [vmem:[%s208 + $0x28] sm:$0xf] %v618
      %747 = vst [vmem:[%s208 + $0x2c] sm:$0xf] %v619
      %748 = vst [vmem:[%s208 + $0x30] sm:$0xf] %v620
      %749 = vst [vmem:[%s208 + $0x34] sm:$0xf] %v621
      %750 = vst [vmem:[%s208 + $0x38] sm:$0xf] %v622
      %751 = vst [vmem:[%s208 + $0x3c] sm:$0xf] %v623
      %752 = vst [vmem:[%s208 + $0x40] sm:$0xf] %v624
      %753 = vst [vmem:[%s208 + $0x44] sm:$0xf] %v625
      %754 = vst [vmem:[%s208 + $0x48] sm:$0xf] %v626
      %755 = vst [vmem:[%s208 + $0x4c] sm:$0xf] %v627
      %756 = vst [vmem:[%s208 + $0x50] sm:$0xf] %v628
      %757 = vst [vmem:[%s208 + $0x54] sm:$0xf] %v629
      %758 = vst [vmem:[%s208 + $0x58] sm:$0xf] %v630
      %759 = vst [vmem:[%s208 + $0x5c] sm:$0xf] %v631
      %760 = vst [vmem:[%s208 + $0x60] sm:$0xf] %v632
      %761 = vst [vmem:[%s208 + $0x64] sm:$0xf] %v633
      %762 = vst [vmem:[%s208 + $0x68] sm:$0xf] %v634
      %763 = vst [vmem:[%s208 + $0x6c] sm:$0xf] %v635
      %764 = vst [vmem:[%s208 + $0x70] sm:$0xf] %v636
      %765 = vst [vmem:[%s208 + $0x74] sm:$0xf] %v637
      %766 = vst [vmem:[%s208 + $0x78] sm:$0xf] %v638
      %767 = vst [vmem:[%s208 + $0x7c] sm:$0xf] %v639
      %768 = vst [vmem:[%s208 + $0x80] sm:$0xf] %v640
      %769 = vst [vmem:[%s208 + $0x84] sm:$0xf] %v641
      %770 = vst [vmem:[%s208 + $0x88] sm:$0xf] %v642
      %771 = vst [vmem:[%s208 + $0x8c] sm:$0xf] %v643
      %772 = vst [vmem:[%s208 + $0x90] sm:$0xf] %v644
      %773 = vst [vmem:[%s208 + $0x94] sm:$0xf] %v645
      %774 = vst [vmem:[%s208 + $0x98] sm:$0xf] %v646
      %775 = vst [vmem:[%s208 + $0x9c] sm:$0xf] %v647
      %776 = vst [vmem:[%s208 + $0xa0] sm:$0xf] %v648
      %777 = vst [vmem:[%s208 + $0xa4] sm:$0xf] %v649
      %778 = vst [vmem:[%s208 + $0xa8] sm:$0xf] %v650
      %779 = vst [vmem:[%s208 + $0xac] sm:$0xf] %v651
      %780 = vst [vmem:[%s208 + $0xb0] sm:$0xf] %v652
      %781 = vst [vmem:[%s208 + $0xb4] sm:$0xf] %v653
      %782 = vst [vmem:[%s208 + $0xb8] sm:$0xf] %v654
      %783 = vst [vmem:[%s208 + $0xbc] sm:$0xf] %v655
      %784 = vst [vmem:[%s208 + $0xc0] sm:$0xf] %v656
      %785 = vst [vmem:[%s208 + $0xc4] sm:$0xf] %v657
      %786 = vst [vmem:[%s208 + $0xc8] sm:$0xf] %v658
      %787 = vst [vmem:[%s208 + $0xcc] sm:$0xf] %v659
      %788 = vst [vmem:[%s208 + $0xd0] sm:$0xf] %v660
      %789 = vst [vmem:[%s208 + $0xd4] sm:$0xf] %v661
      %790 = vst [vmem:[%s208 + $0xd8] sm:$0xf] %v662
      %791 = vst [vmem:[%s208 + $0xdc] sm:$0xf] %v663
      %792 = vst [vmem:[%s208 + $0xe0] sm:$0xf] %v664
      %793 = vst [vmem:[%s208 + $0xe4] sm:$0xf] %v665
      %794 = vst [vmem:[%s208 + $0xe8] sm:$0xf] %v666
      %795 = vst [vmem:[%s208 + $0xec] sm:$0xf] %v667
      %796 = vst [vmem:[%s208 + $0xf0] sm:$0xf] %v668
      %797 = vst [vmem:[%s208 + $0xf4] sm:$0xf] %v669
      %798 = vst [vmem:[%s208 + $0xf8] sm:$0xf] %v670
      %799 = vst [vmem:[%s208 + $0xfc] sm:$0xf] %v671
      %s800 = smul.u32 64, %s19
      %p801 = scmp.lt.s32.totalorder %s18, 3
      %s802 = scalar_select %p801, %s18, 3
      %p803 = scmp.lt.s32.totalorder %s800, 63
      %s804 = scalar_select %p803, %s800, 63
      %s805 = smul.addr %s802, 64
      %s806 = sadd.s32 %s804, %s805
      %s807 = smul.addr %s806, 4
      %s808 = scalar_lea.vmem %s3, %s807
      // Predicated region
      $region33: #{_lambda_.16} parent=31 // pred_check
        %p809 = pneg %p116
      $region34: #{_lambda_.16} parent=31 // pred_check_branch
        %811 = sbr.rel (%p809) target = $region36
      $region35: #{_lambda_.16} parent=31 // pred_region
        %s812 = smul.u32 64, %s19
      $region36: #{_lambda_.16} parent=31 // pred_fallthru
        _
    $region32: #{_lambda_.16} parent=5 // pred_fallthru
      _
    %p813 = scmp.le.s32.totalorder 2, %s9
    // Predicated region
    $region37: #{_lambda_.16} parent=5 // pred_check
      %p814 = pneg %p813
    $region38: #{_lambda_.16} parent=5 // pred_check_branch
      %816 = sbr.rel (%p814) target = $region40
    $region39: #{_lambda_.16} parent=5 // pred_region
      %s817 = ssub.s32 %s9, 2
      // Predicated region
      $region41: #{_lambda_.16} parent=39 // pred_check
        %p818 = pneg %p122
      $region42: #{_lambda_.16} parent=39 // pred_check_branch
        %820 = sbr.rel (%p818) target = $region44
      $region43: #{_lambda_.16} parent=39 // pred_region
        %s821 = smul.u32 64, %s21
        %p822 = scmp.lt.s32.totalorder %s20, 3
        %s823 = scalar_select %p822, %s20, 3
        %p824 = scmp.lt.s32.totalorder %s821, 63
        %s825 = scalar_select %p824, %s821, 63
        %s826 = smul.addr %s823, 64
        %s827 = sadd.s32 %s825, %s826
        %s828 = smul.addr %s827, 4
        %s829 = scalar_lea.vmem %s3, %s828
      $region44: #{_lambda_.16} parent=39 // pred_fallthru
        _
    $region40: #{_lambda_.16} parent=5 // pred_fallthru
      _
  $region6: #{_lambda_.16} parent=0 // loop_footer
    %s13 = sadd.s32 1, %s9
  $region7: #{_lambda_.16} parent=0 // loop_footer_branch
    %8 = sbr.rel target = $region3
  $region8: #{_lambda_.16} parent=0 // loop_exit
    _

// kernel: _lambda_.17
$region0: #{_lambda_.17}
  #allocation0 [shape = 'u32[]', space=smem, size = 0x4, offset = 0x4, fixed_abs, tag = 'smem constant byte address 0x4 - core index']
  #allocation1 [shape = 'u32[144,128]{1,0:T(1,128)}', space=vmem, size = 0x12000, scoped, tag = 'internal scratch']
  %s0 = inlined_call_operand.vmem [shape: bf16[4,2048,128], index: 0, kind: input, shape index: {}]
  %s1 = inlined_call_operand.vmem [shape: bf16[4,128,128], index: 1, kind: input, shape index: {}]
  %s2 = inlined_call_operand.vmem [shape: f32[4,2048,128], index: 2, kind: output, shape index: {}]
  %s3 = sld [smem:[#allocation0]]
  $region41: #{_lambda_.17} parent=0
    _
  %s5 = ssub.s32 1, %s3
  %s6 = scalar_select 0, %s5, %s3
  loop: start=0, step=1, limit=18
  $region2: #{_lambda_.17} parent=0 // loop_pre_header
    _
  $region3: #{_lambda_.17} parent=0 // loop_header
    %s8 = sphi 0, %s12
    %p9 = scmp.ge.s32.totalorder %s8, 18
    %s15 = sphi 0, %s27
    %s16 = sphi 0, %s23
    %s17 = sphi 0, %s15
    %s18 = sphi 0, %s16
    %s19 = sphi 0, %s17
    %s20 = sphi 0, %s18
    %s32 = sphi 0, %s34
    %s35 = sphi 0, %s32
    %s36 = sphi 0, %s35
    %s52 = sphi 0, %s36
    %s58 = sphi 0, %s60
    %s61 = sphi 0, %s58
    %s62 = sphi 0, %s61
    %s78 = sphi 0, %s62
    %s86 = sphi 0, %s88
    %s89 = sphi 0, %s86
    %s90 = sphi 0, %s89
    %s106 = sphi 0, %s90
  $region4: #{_lambda_.17} parent=0 // loop_header_branch
    %11 = sbr.rel (%p9) target = $region8
  $region5: #{_lambda_.17} parent=0 // loop_body
    %s13 = ssub.s32 %s8, 1
    %s14 = ssub.s32 %s8, 2
    %s21 = sadd.s32 1, %s16
    %p22 = scmp.ge.s32.totalorder %s21, 4
    %s23 = scalar_select %p22, 0, %s21
    %s24 = sadd.s32 1, %s15
    %s25 = scalar_select %p22, %s24, %s15
    %p26 = scmp.ge.s32.totalorder %s25, 4
    %s27 = scalar_select %p26, 0, %s25
    %s28 = ssub.s32 %s15, %s27
    %s29 = ssub.s32 %s16, %s23
    %s30 = sor.u32 %s28, %s29
    %p31 = scmp.eq.s32.totalorder %s30, 0
    %s33 = sadd.s32 %s32, 1
    %s34 = scalar_select %p31, %s32, %s33
    %p37 = pneg %p31
    %p38 = scmp.eq.s32.totalorder %s8, 15
    %p39 = por %p37, %p38
    %p40 = scmp.ne.s32.totalorder %s32, %s35
    %p41 = scmp.eq.s32.totalorder %s8, 0
    %p42 = por %p40, %p41
    %p43 = scmp.ne.s32.totalorder %s32, %s35
    %p44 = scmp.eq.s32.totalorder %s13, 15
    %p45 = por %p43, %p44
    %p46 = scmp.ne.s32.totalorder %s35, %s36
    %p47 = scmp.eq.s32.totalorder %s13, 0
    %p48 = por %p46, %p47
    %p49 = scmp.ne.s32.totalorder %s35, %s36
    %p50 = scmp.eq.s32.totalorder %s14, 15
    %p51 = por %p49, %p50
    %p53 = scmp.ne.s32.totalorder %s36, %s52
    %p54 = scmp.eq.s32.totalorder %s14, 0
    %p55 = por %p53, %p54
    %s56 = ssub.s32 %s15, %s27
    %p57 = scmp.eq.s32.totalorder %s56, 0
    %s59 = sadd.s32 %s58, 1
    %s60 = scalar_select %p57, %s58, %s59
    %p63 = pneg %p57
    %p64 = scmp.eq.s32.totalorder %s8, 15
    %p65 = por %p63, %p64
    %p66 = scmp.ne.s32.totalorder %s58, %s61
    %p67 = scmp.eq.s32.totalorder %s8, 0
    %p68 = por %p66, %p67
    %p69 = scmp.ne.s32.totalorder %s58, %s61
    %p70 = scmp.eq.s32.totalorder %s13, 15
    %p71 = por %p69, %p70
    %p72 = scmp.ne.s32.totalorder %s61, %s62
    %p73 = scmp.eq.s32.totalorder %s13, 0
    %p74 = por %p72, %p73
    %p75 = scmp.ne.s32.totalorder %s61, %s62
    %p76 = scmp.eq.s32.totalorder %s14, 15
    %p77 = por %p75, %p76
    %p79 = scmp.ne.s32.totalorder %s62, %s78
    %p80 = scmp.eq.s32.totalorder %s14, 0
    %p81 = por %p79, %p80
    %s82 = ssub.s32 %s15, %s27
    %s83 = ssub.s32 %s16, %s23
    %s84 = sor.u32 %s82, %s83
    %p85 = scmp.eq.s32.totalorder %s84, 0
    %s87 = sadd.s32 %s86, 1
    %s88 = scalar_select %p85, %s86, %s87
    %p91 = pneg %p85
    %p92 = scmp.eq.s32.totalorder %s8, 15
    %p93 = por %p91, %p92
    %p94 = scmp.ne.s32.totalorder %s86, %s89
    %p95 = scmp.eq.s32.totalorder %s8, 0
    %p96 = por %p94, %p95
    %p97 = scmp.ne.s32.totalorder %s86, %s89
    %p98 = scmp.eq.s32.totalorder %s13, 15
    %p99 = por %p97, %p98
    %p100 = scmp.ne.s32.totalorder %s89, %s90
    %p101 = scmp.eq.s32.totalorder %s13, 0
    %p102 = por %p100, %p101
    %p103 = scmp.ne.s32.totalorder %s89, %s90
    %p104 = scmp.eq.s32.totalorder %s14, 15
    %p105 = por %p103, %p104
    %p107 = scmp.ne.s32.totalorder %s90, %s106
    %p108 = scmp.eq.s32.totalorder %s14, 0
    %p109 = por %p107, %p108
    %p110 = scmp.le.s32.totalorder 1, %s8
    %p111 = scmp.lt.s32.totalorder %s8, 17
    %p112 = pnand %p110, %p111
    %p113 = pneg %p112
    // Predicated region
    $region9: #{_lambda_.17} parent=5 // pred_check
      _
    $region10: #{_lambda_.17} parent=5 // pred_check_branch
      %115 = sbr.rel (%p112) target = $region12
    $region11: #{_lambda_.17} parent=5 // pred_region
      %s116 = ssub.s32 %s8, 1
    $region12: #{_lambda_.17} parent=5 // pred_fallthru
      _
    %p117 = scmp.lt.s32.totalorder %s8, 16
    // Predicated region
    $region13: #{_lambda_.17} parent=5 // pred_check
      %p118 = pneg %p117
    $region14: #{_lambda_.17} parent=5 // pred_check_branch
      %120 = sbr.rel (%p118) target = $region16
    $region15: #{_lambda_.17} parent=5 // pred_region
      // Predicated region
      $region17: #{_lambda_.17} parent=15 // pred_check
        %p121 = pneg %p42
      $region18: #{_lambda_.17} parent=15 // pred_check_branch
        %123 = sbr.rel (%p121) target = $region20
      $region19: #{_lambda_.17} parent=15 // pred_region
        %s124 = smul.u32 64, %s16
        %p125 = scmp.lt.s32.totalorder %s15, 3
        %s126 = scalar_select %p125, %s15, 3
        %p127 = scmp.lt.s32.totalorder %s124, 255
        %s128 = scalar_select %p127, %s124, 255
        %s129 = smul.addr %s126, 256
        %s130 = sadd.s32 %s128, %s129
        %s131 = smul.addr %s130, 4
        %s132 = scalar_lea.vmem %s0, %s131
        %s133 = smul.u32 64, %s16
      $region20: #{_lambda_.17} parent=15 // pred_fallthru
        _
      // Predicated region
      $region21: #{_lambda_.17} parent=15 // pred_check
        %p134 = pneg %p68
      $region22: #{_lambda_.17} parent=15 // pred_check_branch
        %136 = sbr.rel (%p134) target = $region24
      $region23: #{_lambda_.17} parent=15 // pred_region
        %p137 = scmp.lt.s32.totalorder %s15, 3
        %s138 = scalar_select %p137, %s15, 3
        %s139 = smul.addr %s138, 16
        %s140 = smul.addr %s139, 4
        %s141 = scalar_lea.vmem %s1, %s140
      $region24: #{_lambda_.17} parent=15 // pred_fallthru
        _
    $region16: #{_lambda_.17} parent=5 // pred_fallthru
      _
    %p142 = scmp.le.s32.totalorder 1, %s8
    %p143 = scmp.lt.s32.totalorder %s8, 17
    %p144 = pnand %p142, %p143
    %p145 = pneg %p144
    // Predicated region
    $region25: #{_lambda_.17} parent=5 // pred_check
      _
    $region26: #{_lambda_.17} parent=5 // pred_check_branch
      %147 = sbr.rel (%p144) target = $region28
    $region27: #{_lambda_.17} parent=5 // pred_region
      %s148 = ssub.s32 %s8, 1
      %s149 = smul.u32 64, %s18
      %p150 = scmp.lt.s32.totalorder %s17, 3
      %s151 = scalar_select %p150, %s17, 3
      %p152 = scmp.lt.s32.totalorder %s149, 255
      %s153 = scalar_select %p152, %s149, 255
      %s154 = smul.addr %s151, 256
      %s155 = sadd.s32 %s153, %s154
      %s156 = smul.addr %s155, 4
      %s157 = scalar_lea.vmem %s0, %s156
      %p158 = pneg %p48
      %p159 = pneg %p45
      %p160 = scmp.lt.s32.totalorder %s17, 3
      %s161 = scalar_select %p160, %s17, 3
      %s162 = smul.addr %s161, 16
      %s163 = smul.addr %s162, 4
      %s164 = scalar_lea.vmem %s1, %s163
      %p165 = pneg %p74
      %p166 = pneg %p71
      %p167 = pneg %p102
      %p168 = pneg %p99
      %s169 = smul.u32 64, %s18
      %p170 = scmp.lt.s32.totalorder %s17, 3
      %s171 = scalar_select %p170, %s17, 3
      %p172 = scmp.lt.s32.totalorder %s169, 255
      %s173 = scalar_select %p172, %s169, 255
      %s174 = smul.addr %s171, 256
      %s175 = sadd.s32 %s173, %s174
      %s176 = smul.addr %s175, 8
      %s177 = scalar_lea.vmem %s2, %s176
      %s178 = smul.u32 64, %s18
      %p179 = scmp.lt.s32.totalorder %s17, 3
      %s180 = scalar_select %p179, %s17, 3
      %p181 = scmp.lt.s32.totalorder %s178, 255
      %s182 = scalar_select %p181, %s178, 255
      %s183 = smul.addr %s180, 256
      %s184 = sadd.s32 %s182, %s183
      %s185 = smul.addr %s184, 4
      %s186 = scalar_lea.vmem %s0, %s185
      %s187 = smul.u32 64, %s18
      %p188 = scmp.lt.s32.totalorder %s17, 3
      %s189 = scalar_select %p188, %s17, 3
      %s190 = smul.addr %s189, 16
      %s191 = smul.addr %s190, 4
      %s192 = scalar_lea.vmem %s1, %s191
      %s193 = smul.u32 64, %s18
      %p194 = scmp.lt.s32.totalorder %s17, 3
      %s195 = scalar_select %p194, %s17, 3
      %p196 = scmp.lt.s32.totalorder %s193, 255
      %s197 = scalar_select %p196, %s193, 255
      %s198 = smul.addr %s195, 256
      %s199 = sadd.s32 %s197, %s198
      %s200 = smul.addr %s199, 8
      %s201 = scalar_lea.vmem %s2, %s200
      %s202 = smul.u32 64, %s18
      %v204 = vld [vmem:[%s186] sm:$0xf]
      %v205 = vld [vmem:[%s186 + $0x4] sm:$0xf]
      %v206 = vld [vmem:[%s186 + $0x8] sm:$0xf]
      %v207 = vld [vmem:[%s186 + $0xc] sm:$0xf]
      %v208 = vld [vmem:[%s186 + $0x10] sm:$0xf]
      %v209 = vld [vmem:[%s186 + $0x14] sm:$0xf]
      %v210 = vld [vmem:[%s186 + $0x18] sm:$0xf]
      %v211 = vld [vmem:[%s186 + $0x1c] sm:$0xf]
      %v212 = vld [vmem:[%s186 + $0x20] sm:$0xf]
      %v213 = vld [vmem:[%s186 + $0x24] sm:$0xf]
      %v214 = vld [vmem:[%s186 + $0x28] sm:$0xf]
      %v215 = vld [vmem:[%s186 + $0x2c] sm:$0xf]
      %v216 = vld [vmem:[%s186 + $0x30] sm:$0xf]
      %v217 = vld [vmem:[%s186 + $0x34] sm:$0xf]
      %v218 = vld [vmem:[%s186 + $0x38] sm:$0xf]
      %v219 = vld [vmem:[%s186 + $0x3c] sm:$0xf]
      %v220 = vld [vmem:[%s186 + $0x40] sm:$0xf]
      %v221 = vld [vmem:[%s186 + $0x44] sm:$0xf]
      %v222 = vld [vmem:[%s186 + $0x48] sm:$0xf]
      %v223 = vld [vmem:[%s186 + $0x4c] sm:$0xf]
      %v224 = vld [vmem:[%s186 + $0x50] sm:$0xf]
      %v225 = vld [vmem:[%s186 + $0x54] sm:$0xf]
      %v226 = vld [vmem:[%s186 + $0x58] sm:$0xf]
      %v227 = vld [vmem:[%s186 + $0x5c] sm:$0xf]
      %v228 = vld [vmem:[%s186 + $0x60] sm:$0xf]
      %v229 = vld [vmem:[%s186 + $0x64] sm:$0xf]
      %v230 = vld [vmem:[%s186 + $0x68] sm:$0xf]
      %v231 = vld [vmem:[%s186 + $0x6c] sm:$0xf]
      %v232 = vld [vmem:[%s186 + $0x70] sm:$0xf]
      %v233 = vld [vmem:[%s186 + $0x74] sm:$0xf]
      %v234 = vld [vmem:[%s186 + $0x78] sm:$0xf]
      %v235 = vld [vmem:[%s186 + $0x7c] sm:$0xf]
      %v236 = vld [vmem:[%s186 + $0x80] sm:$0xf]
      %v237 = vld [vmem:[%s186 + $0x84] sm:$0xf]
      %v238 = vld [vmem:[%s186 + $0x88] sm:$0xf]
      %v239 = vld [vmem:[%s186 + $0x8c] sm:$0xf]
      %v240 = vld [vmem:[%s186 + $0x90] sm:$0xf]
      %v241 = vld [vmem:[%s186 + $0x94] sm:$0xf]
      %v242 = vld [vmem:[%s186 + $0x98] sm:$0xf]
      %v243 = vld [vmem:[%s186 + $0x9c] sm:$0xf]
      %v244 = vld [vmem:[%s186 + $0xa0] sm:$0xf]
      %v245 = vld [vmem:[%s186 + $0xa4] sm:$0xf]
      %v246 = vld [vmem:[%s186 + $0xa8] sm:$0xf]
      %v247 = vld [vmem:[%s186 + $0xac] sm:$0xf]
      %v248 = vld [vmem:[%s186 + $0xb0] sm:$0xf]
      %v249 = vld [vmem:[%s186 + $0xb4] sm:$0xf]
      %v250 = vld [vmem:[%s186 + $0xb8] sm:$0xf]
      %v251 = vld [vmem:[%s186 + $0xbc] sm:$0xf]
      %v252 = vld [vmem:[%s186 + $0xc0] sm:$0xf]
      %v253 = vld [vmem:[%s186 + $0xc4] sm:$0xf]
      %v254 = vld [vmem:[%s186 + $0xc8] sm:$0xf]
      %v255 = vld [vmem:[%s186 + $0xcc] sm:$0xf]
      %v256 = vld [vmem:[%s186 + $0xd0] sm:$0xf]
      %v257 = vld [vmem:[%s186 + $0xd4] sm:$0xf]
      %v258 = vld [vmem:[%s186 + $0xd8] sm:$0xf]
      %v259 = vld [vmem:[%s186 + $0xdc] sm:$0xf]
      %v260 = vld [vmem:[%s186 + $0xe0] sm:$0xf]
      %v261 = vld [vmem:[%s186 + $0xe4] sm:$0xf]
      %v262 = vld [vmem:[%s186 + $0xe8] sm:$0xf]
      %v263 = vld [vmem:[%s186 + $0xec] sm:$0xf]
      %v264 = vld [vmem:[%s186 + $0xf0] sm:$0xf]
      %v265 = vld [vmem:[%s186 + $0xf4] sm:$0xf]
      %v266 = vld [vmem:[%s186 + $0xf8] sm:$0xf]
      %v267 = vld [vmem:[%s186 + $0xfc] sm:$0xf]
      %v268 = vld [vmem:[%s192] sm:$0xf]
      %v269 = vld [vmem:[%s192 + $0x4] sm:$0xf]
      %v270 = vld [vmem:[%s192 + $0x8] sm:$0xf]
      %v271 = vld [vmem:[%s192 + $0xc] sm:$0xf]
      %v272 = vld [vmem:[%s192 + $0x10] sm:$0xf]
      %v273 = vld [vmem:[%s192 + $0x14] sm:$0xf]
      %v274 = vld [vmem:[%s192 + $0x18] sm:$0xf]
      %v275 = vld [vmem:[%s192 + $0x1c] sm:$0xf]
      %v276 = vld [vmem:[%s192 + $0x20] sm:$0xf]
      %v277 = vld [vmem:[%s192 + $0x24] sm:$0xf]
      %v278 = vld [vmem:[%s192 + $0x28] sm:$0xf]
      %v279 = vld [vmem:[%s192 + $0x2c] sm:$0xf]
      %v280 = vld [vmem:[%s192 + $0x30] sm:$0xf]
      %v281 = vld [vmem:[%s192 + $0x34] sm:$0xf]
      %v282 = vld [vmem:[%s192 + $0x38] sm:$0xf]
      %v283 = vld [vmem:[%s192 + $0x3c] sm:$0xf]
      %v348 = vunpack.c.l.b16 %v204
      %v349 = vunpack.c.l.b16 %v205
      %v350 = vunpack.c.l.b16 %v206
      %v351 = vunpack.c.l.b16 %v207
      %v352 = vunpack.c.l.b16 %v208
      %v353 = vunpack.c.l.b16 %v209
      %v354 = vunpack.c.l.b16 %v210
      %v355 = vunpack.c.l.b16 %v211
      %v356 = vunpack.c.l.b16 %v212
      %v357 = vunpack.c.l.b16 %v213
      %v358 = vunpack.c.l.b16 %v214
      %v359 = vunpack.c.l.b16 %v215
      %v360 = vunpack.c.l.b16 %v216
      %v361 = vunpack.c.l.b16 %v217
      %v362 = vunpack.c.l.b16 %v218
      %v363 = vunpack.c.l.b16 %v219
      %v364 = vunpack.c.l.b16 %v220
      %v365 = vunpack.c.l.b16 %v221
      %v366 = vunpack.c.l.b16 %v222
      %v367 = vunpack.c.l.b16 %v223
      %v368 = vunpack.c.l.b16 %v224
      %v369 = vunpack.c.l.b16 %v225
      %v370 = vunpack.c.l.b16 %v226
      %v371 = vunpack.c.l.b16 %v227
      %v372 = vunpack.c.l.b16 %v228
      %v373 = vunpack.c.l.b16 %v229
      %v374 = vunpack.c.l.b16 %v230
      %v375 = vunpack.c.l.b16 %v231
      %v376 = vunpack.c.l.b16 %v232
      %v377 = vunpack.c.l.b16 %v233
      %v378 = vunpack.c.l.b16 %v234
      %v379 = vunpack.c.l.b16 %v235
      %v380 = vunpack.c.l.b16 %v236
      %v381 = vunpack.c.l.b16 %v237
      %v382 = vunpack.c.l.b16 %v238
      %v383 = vunpack.c.l.b16 %v239
      %v384 = vunpack.c.l.b16 %v240
      %v385 = vunpack.c.l.b16 %v241
      %v386 = vunpack.c.l.b16 %v242
      %v387 = vunpack.c.l.b16 %v243
      %v388 = vunpack.c.l.b16 %v244
      %v389 = vunpack.c.l.b16 %v245
      %v390 = vunpack.c.l.b16 %v246
      %v391 = vunpack.c.l.b16 %v247
      %v392 = vunpack.c.l.b16 %v248
      %v393 = vunpack.c.l.b16 %v249
      %v394 = vunpack.c.l.b16 %v250
      %v395 = vunpack.c.l.b16 %v251
      %v396 = vunpack.c.l.b16 %v252
      %v397 = vunpack.c.l.b16 %v253
      %v398 = vunpack.c.l.b16 %v254
      %v399 = vunpack.c.l.b16 %v255
      %v400 = vunpack.c.l.b16 %v256
      %v401 = vunpack.c.l.b16 %v257
      %v402 = vunpack.c.l.b16 %v258
      %v403 = vunpack.c.l.b16 %v259
      %v404 = vunpack.c.l.b16 %v260
      %v405 = vunpack.c.l.b16 %v261
      %v406 = vunpack.c.l.b16 %v262
      %v407 = vunpack.c.l.b16 %v263
      %v408 = vunpack.c.l.b16 %v264
      %v409 = vunpack.c.l.b16 %v265
      %v410 = vunpack.c.l.b16 %v266
      %v411 = vunpack.c.l.b16 %v267
      %v412 = vpack.c.b16 %v349, %v348
      %v413 = vpack.c.b16 %v351, %v350
      %v414 = vpack.c.b16 %v353, %v352
      %v415 = vpack.c.b16 %v355, %v354
      %v416 = vpack.c.b16 %v357, %v356
      %v417 = vpack.c.b16 %v359, %v358
      %v418 = vpack.c.b16 %v361, %v360
      %v419 = vpack.c.b16 %v363, %v362
      %v420 = vpack.c.b16 %v365, %v364
      %v421 = vpack.c.b16 %v367, %v366
      %v422 = vpack.c.b16 %v369, %v368
      %v423 = vpack.c.b16 %v371, %v370
      %v424 = vpack.c.b16 %v373, %v372
      %v425 = vpack.c.b16 %v375, %v374
      %v426 = vpack.c.b16 %v377, %v376
      %v427 = vpack.c.b16 %v379, %v378
      %v428 = vpack.c.b16 %v381, %v380
      %v429 = vpack.c.b16 %v383, %v382
      %v430 = vpack.c.b16 %v385, %v384
      %v431 = vpack.c.b16 %v387, %v386
      %v432 = vpack.c.b16 %v389, %v388
      %v433 = vpack.c.b16 %v391, %v390
      %v434 = vpack.c.b16 %v393, %v392
      %v435 = vpack.c.b16 %v395, %v394
      %v436 = vpack.c.b16 %v397, %v396
      %v437 = vpack.c.b16 %v399, %v398
      %v438 = vpack.c.b16 %v401, %v400
      %v439 = vpack.c.b16 %v403, %v402
      %v440 = vpack.c.b16 %v405, %v404
      %v441 = vpack.c.b16 %v407, %v406
      %v442 = vpack.c.b16 %v409, %v408
      %v443 = vpack.c.b16 %v411, %v410
      %v492 = vunpack.c.l.b16 %v268
      %v493 = vunpack.c.l.b16 %v269
      %v494 = vunpack.c.l.b16 %v270
      %v495 = vunpack.c.l.b16 %v271
      %v496 = vunpack.c.l.b16 %v272
      %v497 = vunpack.c.l.b16 %v273
      %v498 = vunpack.c.l.b16 %v274
      %v499 = vunpack.c.l.b16 %v275
      %v500 = vunpack.c.l.b16 %v276
      %v501 = vunpack.c.l.b16 %v277
      %v502 = vunpack.c.l.b16 %v278
      %v503 = vunpack.c.l.b16 %v279
      %v504 = vunpack.c.l.b16 %v280
      %v505 = vunpack.c.l.b16 %v281
      %v506 = vunpack.c.l.b16 %v282
      %v507 = vunpack.c.l.b16 %v283
      %v508 = vpack.c.b16 %v493, %v492
      %v509 = vpack.c.b16 %v495, %v494
      %v510 = vpack.c.b16 %v497, %v496
      %v511 = vpack.c.b16 %v499, %v498
      %v512 = vpack.c.b16 %v501, %v500
      %v513 = vpack.c.b16 %v503, %v502
      %v514 = vpack.c.b16 %v505, %v504
      %v515 = vpack.c.b16 %v507, %v506
      %524 = vmatprep.subr.bf16.mxu0 0
      %525 = vmatpush1.bf16.msra.mxu0 %v508
      %526 = vmatprep.subr.bf16.mxu0 0
      %527 = vmatpush1.bf16.msra.mxu0 %v509
      %528 = vmatprep.subr.bf16.mxu0 0
      %529 = vmatpush1.bf16.msra.mxu0 %v510
      %530 = vmatprep.subr.bf16.mxu0 0
      %531 = vmatpush1.bf16.msra.mxu0 %v511
      %532 = vmatprep.subr.bf16.mxu0 0
      %533 = vmatpush1.bf16.msra.mxu0 %v512
      %534 = vmatprep.subr.bf16.mxu0 0
      %535 = vmatpush1.bf16.msra.mxu0 %v513
      %536 = vmatprep.subr.bf16.mxu0 0
      %537 = vmatpush1.bf16.msra.mxu0 %v514
      %538 = vmatprep.subr.bf16.mxu0 0
      %539 = vmatpush1.bf16.msra.mxu0 %v515
      %540 = vmatprep.subr.bf16.mxu0 0
      %541 = vmatpush1.bf16.msra.mxu0 0
      %542 = vmatprep.subr.bf16.mxu0 0
      %543 = vmatpush1.bf16.msra.mxu0 0
      %544 = vmatprep.subr.bf16.mxu0 0
      %545 = vmatpush1.bf16.msra.mxu0 0
      %546 = vmatprep.subr.bf16.mxu0 0
      %547 = vmatpush1.bf16.msra.mxu0 0
      %548 = vmatprep.subr.bf16.mxu0 0
      %549 = vmatpush1.bf16.msra.mxu0 0
      %550 = vmatprep.subr.bf16.mxu0 0
      %551 = vmatpush1.bf16.msra.mxu0 0
      %552 = vmatprep.subr.bf16.mxu0 0
      %553 = vmatpush1.bf16.msra.mxu0 0
      %554 = vmatprep.subr.bf16.mxu0 0
      %555 = vmatpush1.bf16.msra.mxu0 0
      %556 = vmatprep.mubr.bf16.mxu0 0
      %557 = vmatmul.mubr.bf16.gmra.mrb[0].mxu0 %v412
      %v558 = vpop.f32.mrb[0].mxu0
      %v559 = vadd.f32 0.0, %v558
      %v560 = vpop.f32.mrb[0].mxu0
      %v561 = vpop.f32.mrb[0].mxu0
      %v562 = vadd.f32 0.0, %v561
      %v563 = vpop.f32.mrb[0].mxu0
      %564 = vmatprep.mubr.bf16.mxu0 0
      %565 = vmatmul.mubr.bf16.gmra.mrb[0].mxu0 %v413
      %v566 = vpop.f32.mrb[0].mxu0
      %v567 = vadd.f32 0.0, %v566
      %v568 = vpop.f32.mrb[0].mxu0
      %v569 = vpop.f32.mrb[0].mxu0
      %v570 = vadd.f32 0.0, %v569
      %v571 = vpop.f32.mrb[0].mxu0
      %572 = vmatprep.mubr.bf16.mxu0 0
      %573 = vmatmul.mubr.bf16.gmra.mrb[0].mxu0 %v414
      %v574 = vpop.f32.mrb[0].mxu0
      %v575 = vadd.f32 0.0, %v574
      %v576 = vpop.f32.mrb[0].mxu0
      %v577 = vpop.f32.mrb[0].mxu0
      %v578 = vadd.f32 0.0, %v577
      %v579 = vpop.f32.mrb[0].mxu0
      %580 = vmatprep.mubr.bf16.mxu0 0
      %581 = vmatmul.mubr.bf16.gmra.mrb[0].mxu0 %v415
      %v582 = vpop.f32.mrb[0].mxu0
      %v583 = vadd.f32 0.0, %v582
      %v584 = vpop.f32.mrb[0].mxu0
      %v585 = vpop.f32.mrb[0].mxu0
      %v586 = vadd.f32 0.0, %v585
      %v587 = vpop.f32.mrb[0].mxu0
      %588 = vmatprep.mubr.bf16.mxu0 0
      %589 = vmatmul.mubr.bf16.gmra.mrb[0].mxu0 %v416
      %v590 = vpop.f32.mrb[0].mxu0
      %v591 = vadd.f32 0.0, %v590
      %v592 = vpop.f32.mrb[0].mxu0
      %v593 = vpop.f32.mrb[0].mxu0
      %v594 = vadd.f32 0.0, %v593
      %v595 = vpop.f32.mrb[0].mxu0
      %596 = vmatprep.mubr.bf16.mxu0 0
      %597 = vmatmul.mubr.bf16.gmra.mrb[0].mxu0 %v417
      %v598 = vpop.f32.mrb[0].mxu0
      %v599 = vadd.f32 0.0, %v598
      %v600 = vpop.f32.mrb[0].mxu0
      %v601 = vpop.f32.mrb[0].mxu0
      %v602 = vadd.f32 0.0, %v601
      %v603 = vpop.f32.mrb[0].mxu0
      %604 = vmatprep.mubr.bf16.mxu0 0
      %605 = vmatmul.mubr.bf16.gmra.mrb[0].mxu0 %v418
      %v606 = vpop.f32.mrb[0].mxu0
      %v607 = vadd.f32 0.0, %v606
      %v608 = vpop.f32.mrb[0].mxu0
      %v609 = vpop.f32.mrb[0].mxu0
      %v610 = vadd.f32 0.0, %v609
      %v611 = vpop.f32.mrb[0].mxu0
      %612 = vmatprep.mubr.bf16.mxu0 0
      %613 = vmatmul.mubr.bf16.gmra.mrb[0].mxu0 %v419
      %v614 = vpop.f32.mrb[0].mxu0
      %v615 = vadd.f32 0.0, %v614
      %v616 = vpop.f32.mrb[0].mxu0
      %v617 = vpop.f32.mrb[0].mxu0
      %v618 = vadd.f32 0.0, %v617
      %v619 = vpop.f32.mrb[0].mxu0
      %620 = vmatprep.mubr.bf16.mxu0 0
      %621 = vmatmul.mubr.bf16.gmra.mrb[0].mxu0 %v420
      %v622 = vpop.f32.mrb[0].mxu0
      %v623 = vadd.f32 0.0, %v622
      %v624 = vpop.f32.mrb[0].mxu0
      %v625 = vpop.f32.mrb[0].mxu0
      %v626 = vadd.f32 0.0, %v625
      %v627 = vpop.f32.mrb[0].mxu0
      %628 = vmatprep.mubr.bf16.mxu0 0
      %629 = vmatmul.mubr.bf16.gmra.mrb[0].mxu0 %v421
      %v630 = vpop.f32.mrb[0].mxu0
      %v631 = vadd.f32 0.0, %v630
      %v632 = vpop.f32.mrb[0].mxu0
      %v633 = vpop.f32.mrb[0].mxu0
      %v634 = vadd.f32 0.0, %v633
      %v635 = vpop.f32.mrb[0].mxu0
      %636 = vmatprep.mubr.bf16.mxu0 0
      %637 = vmatmul.mubr.bf16.gmra.mrb[0].mxu0 %v422
      %v638 = vpop.f32.mrb[0].mxu0
      %v639 = vadd.f32 0.0, %v638
      %v640 = vpop.f32.mrb[0].mxu0
      %v641 = vpop.f32.mrb[0].mxu0
      %v642 = vadd.f32 0.0, %v641
      %v643 = vpop.f32.mrb[0].mxu0
      %644 = vmatprep.mubr.bf16.mxu0 0
      %645 = vmatmul.mubr.bf16.gmra.mrb[0].mxu0 %v423
      %v646 = vpop.f32.mrb[0].mxu0
      %v647 = vadd.f32 0.0, %v646
      %v648 = vpop.f32.mrb[0].mxu0
      %v649 = vpop.f32.mrb[0].mxu0
      %v650 = vadd.f32 0.0, %v649
      %v651 = vpop.f32.mrb[0].mxu0
      %652 = vmatprep.mubr.bf16.mxu0 0
      %653 = vmatmul.mubr.bf16.gmra.mrb[0].mxu0 %v424
      %v654 = vpop.f32.mrb[0].mxu0
      %v655 = vadd.f32 0.0, %v654
      %v656 = vpop.f32.mrb[0].mxu0
      %v657 = vpop.f32.mrb[0].mxu0
      %v658 = vadd.f32 0.0, %v657
      %v659 = vpop.f32.mrb[0].mxu0
      %660 = vmatprep.mubr.bf16.mxu0 0
      %661 = vmatmul.mubr.bf16.gmra.mrb[0].mxu0 %v425
      %v662 = vpop.f32.mrb[0].mxu0
      %v663 = vadd.f32 0.0, %v662
      %v664 = vpop.f32.mrb[0].mxu0
      %v665 = vpop.f32.mrb[0].mxu0
      %v666 = vadd.f32 0.0, %v665
      %v667 = vpop.f32.mrb[0].mxu0
      %668 = vmatprep.mubr.bf16.mxu0 0
      %669 = vmatmul.mubr.bf16.gmra.mrb[0].mxu0 %v426
      %v670 = vpop.f32.mrb[0].mxu0
      %v671 = vadd.f32 0.0, %v670
      %v672 = vpop.f32.mrb[0].mxu0
      %v673 = vpop.f32.mrb[0].mxu0
      %v674 = vadd.f32 0.0, %v673
      %v675 = vpop.f32.mrb[0].mxu0
      %676 = vmatprep.mubr.bf16.mxu0 0
      %677 = vmatmul.mubr.bf16.gmra.mrb[0].mxu0 %v427
      %v678 = vpop.f32.mrb[0].mxu0
      %v679 = vadd.f32 0.0, %v678
      %v680 = vpop.f32.mrb[0].mxu0
      %v681 = vpop.f32.mrb[0].mxu0
      %v682 = vadd.f32 0.0, %v681
      %v683 = vpop.f32.mrb[0].mxu0
      %684 = vmatprep.mubr.bf16.mxu0 0
      %685 = vmatmul.mubr.bf16.gmra.mrb[0].mxu0 %v428
      %v686 = vpop.f32.mrb[0].mxu0
      %v687 = vadd.f32 0.0, %v686
      %v688 = vpop.f32.mrb[0].mxu0
      %v689 = vpop.f32.mrb[0].mxu0
      %v690 = vadd.f32 0.0, %v689
      %v691 = vpop.f32.mrb[0].mxu0
      %692 = vmatprep.mubr.bf16.mxu0 0
      %693 = vmatmul.mubr.bf16.gmra.mrb[0].mxu0 %v429
      %v694 = vpop.f32.mrb[0].mxu0
      %v695 = vadd.f32 0.0, %v694
      %v696 = vpop.f32.mrb[0].mxu0
      %v697 = vpop.f32.mrb[0].mxu0
      %v698 = vadd.f32 0.0, %v697
      %v699 = vpop.f32.mrb[0].mxu0
      %700 = vmatprep.mubr.bf16.mxu0 0
      %701 = vmatmul.mubr.bf16.gmra.mrb[0].mxu0 %v430
      %v702 = vpop.f32.mrb[0].mxu0
      %v703 = vadd.f32 0.0, %v702
      %v704 = vpop.f32.mrb[0].mxu0
      %v705 = vpop.f32.mrb[0].mxu0
      %v706 = vadd.f32 0.0, %v705
      %v707 = vpop.f32.mrb[0].mxu0
      %708 = vmatprep.mubr.bf16.mxu0 0
      %709 = vmatmul.mubr.bf16.gmra.mrb[0].mxu0 %v431
      %v710 = vpop.f32.mrb[0].mxu0
      %v711 = vadd.f32 0.0, %v710
      %v712 = vpop.f32.mrb[0].mxu0
      %v713 = vpop.f32.mrb[0].mxu0
      %v714 = vadd.f32 0.0, %v713
      %v715 = vpop.f32.mrb[0].mxu0
      %716 = vmatprep.mubr.bf16.mxu0 0
      %717 = vmatmul.mubr.bf16.gmra.mrb[0].mxu0 %v432
      %v718 = vpop.f32.mrb[0].mxu0
      %v719 = vadd.f32 0.0, %v718
      %v720 = vpop.f32.mrb[0].mxu0
      %v721 = vpop.f32.mrb[0].mxu0
      %v722 = vadd.f32 0.0, %v721
      %v723 = vpop.f32.mrb[0].mxu0
      %724 = vmatprep.mubr.bf16.mxu0 0
      %725 = vmatmul.mubr.bf16.gmra.mrb[0].mxu0 %v433
      %v726 = vpop.f32.mrb[0].mxu0
      %v727 = vadd.f32 0.0, %v726
      %v728 = vpop.f32.mrb[0].mxu0
      %v729 = vpop.f32.mrb[0].mxu0
      %v730 = vadd.f32 0.0, %v729
      %v731 = vpop.f32.mrb[0].mxu0
      %732 = vmatprep.mubr.bf16.mxu0 0
      %733 = vmatmul.mubr.bf16.gmra.mrb[0].mxu0 %v434
      %v734 = vpop.f32.mrb[0].mxu0
      %v735 = vadd.f32 0.0, %v734
      %v736 = vpop.f32.mrb[0].mxu0
      %v737 = vpop.f32.mrb[0].mxu0
      %v738 = vadd.f32 0.0, %v737
      %v739 = vpop.f32.mrb[0].mxu0
      %740 = vmatprep.mubr.bf16.mxu0 0
      %741 = vmatmul.mubr.bf16.gmra.mrb[0].mxu0 %v435
      %v742 = vpop.f32.mrb[0].mxu0
      %v743 = vadd.f32 0.0, %v742
      %v744 = vpop.f32.mrb[0].mxu0
      %v745 = vpop.f32.mrb[0].mxu0
      %v746 = vadd.f32 0.0, %v745
      %v747 = vpop.f32.mrb[0].mxu0
      %748 = vmatprep.mubr.bf16.mxu0 0
      %749 = vmatmul.mubr.bf16.gmra.mrb[0].mxu0 %v436
      %v750 = vpop.f32.mrb[0].mxu0
      %v751 = vadd.f32 0.0, %v750
      %v752 = vpop.f32.mrb[0].mxu0
      %v753 = vpop.f32.mrb[0].mxu0
      %v754 = vadd.f32 0.0, %v753
      %v755 = vpop.f32.mrb[0].mxu0
      %756 = vmatprep.mubr.bf16.mxu0 0
      %757 = vmatmul.mubr.bf16.gmra.mrb[0].mxu0 %v437
      %v758 = vpop.f32.mrb[0].mxu0
      %v759 = vadd.f32 0.0, %v758
      %v760 = vpop.f32.mrb[0].mxu0
      %v761 = vpop.f32.mrb[0].mxu0
      %v762 = vadd.f32 0.0, %v761
      %v763 = vpop.f32.mrb[0].mxu0
      %764 = vmatprep.mubr.bf16.mxu0 0
      %765 = vmatmul.mubr.bf16.gmra.mrb[0].mxu0 %v438
      %v766 = vpop.f32.mrb[0].mxu0
      %v767 = vadd.f32 0.0, %v766
      %v768 = vpop.f32.mrb[0].mxu0
      %v769 = vpop.f32.mrb[0].mxu0
      %v770 = vadd.f32 0.0, %v769
      %v771 = vpop.f32.mrb[0].mxu0
      %772 = vmatprep.mubr.bf16.mxu0 0
      %773 = vmatmul.mubr.bf16.gmra.mrb[0].mxu0 %v439
      %v774 = vpop.f32.mrb[0].mxu0
      %v775 = vadd.f32 0.0, %v774
      %v776 = vpop.f32.mrb[0].mxu0
      %v777 = vpop.f32.mrb[0].mxu0
      %v778 = vadd.f32 0.0, %v777
      %v779 = vpop.f32.mrb[0].mxu0
      %780 = vmatprep.mubr.bf16.mxu0 0
      %781 = vmatmul.mubr.bf16.gmra.mrb[0].mxu0 %v440
      %v782 = vpop.f32.mrb[0].mxu0
      %v783 = vadd.f32 0.0, %v782
      %v784 = vpop.f32.mrb[0].mxu0
      %v785 = vpop.f32.mrb[0].mxu0
      %v786 = vadd.f32 0.0, %v785
      %v787 = vpop.f32.mrb[0].mxu0
      %788 = vmatprep.mubr.bf16.mxu0 0
      %789 = vmatmul.mubr.bf16.gmra.mrb[0].mxu0 %v441
      %v790 = vpop.f32.mrb[0].mxu0
      %v791 = vadd.f32 0.0, %v790
      %v792 = vpop.f32.mrb[0].mxu0
      %v793 = vpop.f32.mrb[0].mxu0
      %v794 = vadd.f32 0.0, %v793
      %v795 = vpop.f32.mrb[0].mxu0
      %796 = vmatprep.mubr.bf16.mxu0 0
      %797 = vmatmul.mubr.bf16.gmra.mrb[0].mxu0 %v442
      %v798 = vpop.f32.mrb[0].mxu0
      %v799 = vadd.f32 0.0, %v798
      %v800 = vpop.f32.mrb[0].mxu0
      %v801 = vpop.f32.mrb[0].mxu0
      %v802 = vadd.f32 0.0, %v801
      %v803 = vpop.f32.mrb[0].mxu0
      %804 = vmatprep.mubr.bf16.mxu0 0
      %805 = vmatmul.mubr.bf16.gmra.mrb[0].mxu0 %v443
      %v806 = vpop.f32.mrb[0].mxu0
      %v807 = vadd.f32 0.0, %v806
      %v808 = vpop.f32.mrb[0].mxu0
      %v809 = vpop.f32.mrb[0].mxu0
      %v810 = vadd.f32 0.0, %v809
      %v811 = vpop.f32.mrb[0].mxu0
      %812 = vdwg.mxu0
      %v813 = vtanh.pop %v559
      %v814 = vtanh.pop %v562
      %v815 = vtanh.pop %v567
      %v816 = vtanh.pop %v570
      %v817 = vtanh.pop %v575
      %v818 = vtanh.pop %v578
      %v819 = vtanh.pop %v583
      %v820 = vtanh.pop %v586
      %v821 = vtanh.pop %v591
      %v822 = vtanh.pop %v594
      %v823 = vtanh.pop %v599
      %v824 = vtanh.pop %v602
      %v825 = vtanh.pop %v607
      %v826 = vtanh.pop %v610
      %v827 = vtanh.pop %v615
      %v828 = vtanh.pop %v618
      %v829 = vtanh.pop %v623
      %v830 = vtanh.pop %v626
      %v831 = vtanh.pop %v631
      %v832 = vtanh.pop %v634
      %v833 = vtanh.pop %v639
      %v834 = vtanh.pop %v642
      %v835 = vtanh.pop %v647
      %v836 = vtanh.pop %v650
      %v837 = vtanh.pop %v655
      %v838 = vtanh.pop %v658
      %v839 = vtanh.pop %v663
      %v840 = vtanh.pop %v666
      %v841 = vtanh.pop %v671
      %v842 = vtanh.pop %v674
      %v843 = vtanh.pop %v679
      %v844 = vtanh.pop %v682
      %v845 = vtanh.pop %v687
      %v846 = vtanh.pop %v690
      %v847 = vtanh.pop %v695
      %v848 = vtanh.pop %v698
      %v849 = vtanh.pop %v703
      %v850 = vtanh.pop %v706
      %v851 = vtanh.pop %v711
      %v852 = vtanh.pop %v714
      %v853 = vtanh.pop %v719
      %v854 = vtanh.pop %v722
      %v855 = vtanh.pop %v727
      %v856 = vtanh.pop %v730
      %v857 = vtanh.pop %v735
      %v858 = vtanh.pop %v738
      %v859 = vtanh.pop %v743
      %v860 = vtanh.pop %v746
      %v861 = vtanh.pop %v751
      %v862 = vtanh.pop %v754
      %v863 = vtanh.pop %v759
      %v864 = vtanh.pop %v762
      %v865 = vtanh.pop %v767
      %v866 = vtanh.pop %v770
      %v867 = vtanh.pop %v775
      %v868 = vtanh.pop %v778
      %v869 = vtanh.pop %v783
      %v870 = vtanh.pop %v786
      %v871 = vtanh.pop %v791
      %v872 = vtanh.pop %v794
      %v873 = vtanh.pop %v799
      %v874 = vtanh.pop %v802
      %v875 = vtanh.pop %v807
      %v876 = vtanh.pop %v810
      %877 = vst [vmem:[%s201] sm:$0xff] %v813
      %878 = vst [vmem:[%s201 + $0x8] sm:$0xff] %v814
      %879 = vst [vmem:[%s201 + $0x10] sm:$0xff] %v815
      %880 = vst [vmem:[%s201 + $0x18] sm:$0xff] %v816
      %881 = vst [vmem:[%s201 + $0x20] sm:$0xff] %v817
      %882 = vst [vmem:[%s201 + $0x28] sm:$0xff] %v818
      %883 = vst [vmem:[%s201 + $0x30] sm:$0xff] %v819
      %884 = vst [vmem:[%s201 + $0x38] sm:$0xff] %v820
      %885 = vst [vmem:[%s201 + $0x40] sm:$0xff] %v821
      %886 = vst [vmem:[%s201 + $0x48] sm:$0xff] %v822
      %887 = vst [vmem:[%s201 + $0x50] sm:$0xff] %v823
      %888 = vst [vmem:[%s201 + $0x58] sm:$0xff] %v824
      %889 = vst [vmem:[%s201 + $0x60] sm:$0xff] %v825
      %890 = vst [vmem:[%s201 + $0x68] sm:$0xff] %v826
      %891 = vst [vmem:[%s201 + $0x70] sm:$0xff] %v827
      %892 = vst [vmem:[%s201 + $0x78] sm:$0xff] %v828
      %893 = vst [vmem:[%s201 + $0x80] sm:$0xff] %v829
      %894 = vst [vmem:[%s201 + $0x88] sm:$0xff] %v830
      %895 = vst [vmem:[%s201 + $0x90] sm:$0xff] %v831
      %896 = vst [vmem:[%s201 + $0x98] sm:$0xff] %v832
      %897 = vst [vmem:[%s201 + $0xa0] sm:$0xff] %v833
      %898 = vst [vmem:[%s201 + $0xa8] sm:$0xff] %v834
      %899 = vst [vmem:[%s201 + $0xb0] sm:$0xff] %v835
      %900 = vst [vmem:[%s201 + $0xb8] sm:$0xff] %v836
      %901 = vst [vmem:[%s201 + $0xc0] sm:$0xff] %v837
      %902 = vst [vmem:[%s201 + $0xc8] sm:$0xff] %v838
      %903 = vst [vmem:[%s201 + $0xd0] sm:$0xff] %v839
      %904 = vst [vmem:[%s201 + $0xd8] sm:$0xff] %v840
      %905 = vst [vmem:[%s201 + $0xe0] sm:$0xff] %v841
      %906 = vst [vmem:[%s201 + $0xe8] sm:$0xff] %v842
      %907 = vst [vmem:[%s201 + $0xf0] sm:$0xff] %v843
      %908 = vst [vmem:[%s201 + $0xf8] sm:$0xff] %v844
      %909 = vst [vmem:[%s201 + $0x100] sm:$0xff] %v845
      %910 = vst [vmem:[%s201 + $0x108] sm:$0xff] %v846
      %911 = vst [vmem:[%s201 + $0x110] sm:$0xff] %v847
      %912 = vst [vmem:[%s201 + $0x118] sm:$0xff] %v848
      %913 = vst [vmem:[%s201 + $0x120] sm:$0xff] %v849
      %914 = vst [vmem:[%s201 + $0x128] sm:$0xff] %v850
      %915 = vst [vmem:[%s201 + $0x130] sm:$0xff] %v851
      %916 = vst [vmem:[%s201 + $0x138] sm:$0xff] %v852
      %917 = vst [vmem:[%s201 + $0x140] sm:$0xff] %v853
      %918 = vst [vmem:[%s201 + $0x148] sm:$0xff] %v854
      %919 = vst [vmem:[%s201 + $0x150] sm:$0xff] %v855
      %920 = vst [vmem:[%s201 + $0x158] sm:$0xff] %v856
      %921 = vst [vmem:[%s201 + $0x160] sm:$0xff] %v857
      %922 = vst [vmem:[%s201 + $0x168] sm:$0xff] %v858
      %923 = vst [vmem:[%s201 + $0x170] sm:$0xff] %v859
      %924 = vst [vmem:[%s201 + $0x178] sm:$0xff] %v860
      %925 = vst [vmem:[%s201 + $0x180] sm:$0xff] %v861
      %926 = vst [vmem:[%s201 + $0x188] sm:$0xff] %v862
      %927 = vst [vmem:[%s201 + $0x190] sm:$0xff] %v863
      %928 = vst [vmem:[%s201 + $0x198] sm:$0xff] %v864
      %929 = vst [vmem:[%s201 + $0x1a0] sm:$0xff] %v865
      %930 = vst [vmem:[%s201 + $0x1a8] sm:$0xff] %v866
      %931 = vst [vmem:[%s201 + $0x1b0] sm:$0xff] %v867
      %932 = vst [vmem:[%s201 + $0x1b8] sm:$0xff] %v868
      %933 = vst [vmem:[%s201 + $0x1c0] sm:$0xff] %v869
      %934 = vst [vmem:[%s201 + $0x1c8] sm:$0xff] %v870
      %935 = vst [vmem:[%s201 + $0x1d0] sm:$0xff] %v871
      %936 = vst [vmem:[%s201 + $0x1d8] sm:$0xff] %v872
      %937 = vst [vmem:[%s201 + $0x1e0] sm:$0xff] %v873
      %938 = vst [vmem:[%s201 + $0x1e8] sm:$0xff] %v874
      %939 = vst [vmem:[%s201 + $0x1f0] sm:$0xff] %v875
      %940 = vst [vmem:[%s201 + $0x1f8] sm:$0xff] %v876
      %s941 = smul.u32 64, %s18
      %p942 = scmp.lt.s32.totalorder %s17, 3
      %s943 = scalar_select %p942, %s17, 3
      %p944 = scmp.lt.s32.totalorder %s941, 255
      %s945 = scalar_select %p944, %s941, 255
      %s946 = smul.addr %s943, 256
      %s947 = sadd.s32 %s945, %s946
      %s948 = smul.addr %s947, 8
      %s949 = scalar_lea.vmem %s2, %s948
      // Predicated region
      $region29: #{_lambda_.17} parent=27 // pred_check
        %p950 = pneg %p99
      $region30: #{_lambda_.17} parent=27 // pred_check_branch
        %952 = sbr.rel (%p950) target = $region32
      $region31: #{_lambda_.17} parent=27 // pred_region
        %s953 = smul.u32 64, %s18
      $region32: #{_lambda_.17} parent=27 // pred_fallthru
        _
    $region28: #{_lambda_.17} parent=5 // pred_fallthru
      _
    %p954 = scmp.le.s32.totalorder 2, %s8
    // Predicated region
    $region33: #{_lambda_.17} parent=5 // pred_check
      %p955 = pneg %p954
    $region34: #{_lambda_.17} parent=5 // pred_check_branch
      %957 = sbr.rel (%p955) target = $region36
    $region35: #{_lambda_.17} parent=5 // pred_region
      %s958 = ssub.s32 %s8, 2
      // Predicated region
      $region37: #{_lambda_.17} parent=35 // pred_check
        %p959 = pneg %p105
      $region38: #{_lambda_.17} parent=35 // pred_check_branch
        %961 = sbr.rel (%p959) target = $region40
      $region39: #{_lambda_.17} parent=35 // pred_region
        %s962 = smul.u32 64, %s20
        %p963 = scmp.lt.s32.totalorder %s19, 3
        %s964 = scalar_select %p963, %s19, 3
        %p965 = scmp.lt.s32.totalorder %s962, 255
        %s966 = scalar_select %p965, %s962, 255
        %s967 = smul.addr %s964, 256
        %s968 = sadd.s32 %s966, %s967
        %s969 = smul.addr %s968, 8
        %s970 = scalar_lea.vmem %s2, %s969
      $region40: #{_lambda_.17} parent=35 // pred_fallthru
        _
    $region36: #{_lambda_.17} parent=5 // pred_fallthru
      _
  $region6: #{_lambda_.17} parent=0 // loop_footer
    %s12 = sadd.s32 1, %s8
  $region7: #{_lambda_.17} parent=0 // loop_footer_branch
    %7 = sbr.rel target = $region3
  $region8: #{_lambda_.17} parent=0 // loop_exit
    _

</llo_original>
